<compile_context>
chip_gen: v7x
topology: tpu7x:2x2x1
jax: 0.10.0
libtpu: 0.0.40
codegen_flags: <defaults>
</compile_context>

<pallas_src>
from functools import partial

import numpy as np
import jax
import jax.numpy as jnp
from jax import lax
from jax.experimental import pallas as pl
from jax.experimental.pallas import tpu as pltpu


_IN_HW = 32                      # input spatial size (fixed by fc4's 32*4*4 flatten)
_Z_P, _Z_S = 3, 5
_N_STATS = 2 * _Z_P + 2 * _Z_S   # 16


# ------------------------------ fused kernel --------------------------------

def _encoder_kernel(x_ref,
                    w1_ref, w2_ref, w3_ref, w4_ref, w6_ref,
                    s1_ref, s2_ref, s3_ref,
                    b1_ref, b2_ref, b3_ref, b4_ref, b6_ref,
                    stats_ref):
    """Whole EncoderA forward for one batch chunk, entirely on values in VMEM."""
    f32, bf16 = jnp.float32, jnp.bfloat16
    bc = stats_ref.shape[0]                      # images in this grid step

    def conv(prev, w_ref, s_ref, b_ref):
        # prev: (bc*H_in, W_in) f32, rows (b, h), lanes (w, c).
        # For each kernel row ki:
        #   contrib_ki = prev @ band_ki      (per-input-row partial sums, f32 acc)
        #   out       += S_ki @ contrib_ki   (row deinterleave + shift + zero padding
        #                                     + image boundaries, exact in f32)
        prev_bf = prev.astype(bf16)
        acc = None
        for ki in range(4):
            term = jnp.dot(prev_bf, w_ref[ki], preferred_element_type=f32)
            term = jnp.dot(s_ref[ki], term, preferred_element_type=f32)
            acc = term if acc is None else acc + term
        return jnp.maximum(acc + b_ref[...], 0.0)            # f32 bias + ReLU

    x = x_ref[...]                                # (bc*32, 32) f32 image rows
    r1 = conv(x,  w1_ref, s1_ref, b1_ref)         # (bc*16, 16*32)
    r2 = conv(r1, w2_ref, s2_ref, b2_ref)         # (bc*8,   8*32)
    r3 = conv(r2, w3_ref, s3_ref, b3_ref)         # (4*bc,   4*32)  rows ordered (h, b)

    # fc4 as a sum of 4 block matmuls over conv3's h-major rows (no flatten relayout).
    h4 = None
    for h in range(4):
        blk = r3[h * bc:(h + 1) * bc, :].astype(bf16)         # (bc, 128)
        t = jnp.dot(blk, w4_ref[h], preferred_element_type=f32)
        h4 = t if h4 is None else h4 + t
    h4 = jnp.maximum(h4 + b4_ref[...], 0.0)                   # (bc, 256)

    stats = jnp.dot(h4.astype(bf16), w6_ref[...], preferred_element_type=f32)
    stats_ref[...] = stats + b6_ref[...]                      # (bc, 16)


# --------------------------- parameter preparation --------------------------

def init_params(key, zP=_Z_P, zS=_Z_S):
    """normal_init: weights ~ N(0, 0.02), biases = 0 (PyTorch parameter layout)."""
    k1, k2, k3, k4, k6 = jax.random.split(key, 5)
    std = 0.02
    return {
        "w1": std * jax.random.normal(k1, (32, 1, 4, 4), jnp.float32),
        "b1": jnp.zeros((32,), jnp.float32),
        "w2": std * jax.random.normal(k2, (32, 32, 4, 4), jnp.float32),
        "b2": jnp.zeros((32,), jnp.float32),
        "w3": std * jax.random.normal(k3, (32, 32, 4, 4), jnp.float32),
        "b3": jnp.zeros((32,), jnp.float32),
        "w4": std * jax.random.normal(k4, (256, 32 * 4 * 4), jnp.float32),
        "b4": jnp.zeros((256,), jnp.float32),
        "w6": std * jax.random.normal(k6, (2 * zP + 2 * zS, 256), jnp.float32),
        "b6": jnp.zeros((2 * zP + 2 * zS,), jnp.float32),
    }


def _band_weights(w, w_in):
    """Per-kernel-row banded weights for a k=4, s=2, p=1 conv.

    band[ki][wp*C + c, ow*OC + oc] = w[oc, c, ki, wp - 2*ow + 1]  (0 if tap invalid),
    so `input_row @ band[ki]` gives that row's contribution at kernel row ki; the
    left/right padding is folded in by dropping out-of-range taps.
    """
    w = np.asarray(w, np.float32)
    oc_n, c_n = w.shape[0], w.shape[1]
    w_out = w_in // 2
    bands = np.zeros((4, w_in * c_n, w_out * oc_n), np.float32)
    for ki in range(4):
        for ow in range(w_out):
            for kw in range(4):
                wp = 2 * ow + kw - 1                      # input width position
                if 0 <= wp < w_in:
                    bands[ki, wp * c_n:(wp + 1) * c_n,
                          ow * oc_n:(ow + 1) * oc_n] = w[:, :, ki, kw].T
    return bands


def _select_mats(bc, h_in, h_major_out=False):
    """0/1 row-scatter matrices: out[.., oh] += S_ki @ contrib_ki.

    S[ki, r_out, b*h_in + h] = 1  iff  h == 2*oh + ki - 1 and 0 <= h < h_in
    (top/bottom padding + per-image boundaries are rows that simply never match).
    """
    oh_n = h_in // 2
    s = np.zeros((4, bc * oh_n, bc * h_in), np.float32)
    for ki in range(4):
        for b in range(bc):
            for oh in range(oh_n):
                h = 2 * oh + ki - 1
                if 0 <= h < h_in:
                    r = oh * bc + b if h_major_out else b * oh_n + oh
                    s[ki, r, b * h_in + h] = 1.0
    return s


def pack_params(params):
    """Hoist all layout work (conv banding, fc4 per-row blocks, fc6 transpose, bias
    tiling, bf16 cast) out of the forward pass."""
    def bf16(a):
        return jnp.asarray(a, jnp.bfloat16)

    w4 = np.asarray(params["w4"], np.float32)             # (256, 512) torch layout
    w6 = np.asarray(params["w6"], np.float32)             # (16, 256)
    # torch's .view flattens conv3 output as (c, h, w); split per output row h:
    # w4blk[h][w*32 + c, j] = w4[j, c*16 + h*4 + w]
    w4blk = w4.reshape(256, 32, 4, 4).transpose(2, 3, 1, 0).reshape(4, 128, 256)

    return {
        "w1": bf16(_band_weights(params["w1"], 32)),      # (4,  32, 512)
        "w2": bf16(_band_weights(params["w2"], 16)),      # (4, 512, 256)
        "w3": bf16(_band_weights(params["w3"], 8)),       # (4, 256, 128)
        "w4": bf16(w4blk),                                # (4, 128, 256)
        "w6": bf16(w6.T),                                 # (256, 16)
        "b1": jnp.asarray(np.tile(np.asarray(params["b1"], np.float32), 16)[None, :]),
        "b2": jnp.asarray(np.tile(np.asarray(params["b2"], np.float32), 8)[None, :]),
        "b3": jnp.asarray(np.tile(np.asarray(params["b3"], np.float32), 4)[None, :]),
        "b4": jnp.asarray(np.asarray(params["b4"], np.float32)[None, :]),
        "b6": jnp.asarray(np.asarray(params["b6"], np.float32)[None, :]),
    }


# ------------------------------ forward wrapper ------------------------------

def _chunk_size(batch):
    """Images per grid step: whole batch if small, else a big 8-aligned chunk so the
    stacked conv matmuls keep M large and chunks shard across v7x's two cores."""
    if batch <= 16:
        return batch
    for c in (16, 8):
        if batch % c == 0:
            return c
    return batch


def _const_spec(arr):
    zeros = (0,) * arr.ndim
    return pl.BlockSpec(arr.shape, lambda i, _z=zeros: _z)


@partial(jax.jit, static_argnames=("zP", "zS"))
def encoder_a_forward(packed, x, zP=_Z_P, zS=_Z_S):
    """EncoderA forward.  x: (B, 1, 32, 32) float32, packed = pack_params(params)."""
    assert x.shape[1:] == (1, _IN_HW, _IN_HW)
    batch = x.shape[0]
    bc = _chunk_size(batch)
    n_chunks = batch // bc

    # Raw image rows; padding is folded into the banded weights / selection matrices.
    x_rows = x.reshape(batch * _IN_HW, _IN_HW).astype(jnp.float32)

    # Row-scatter matrices depend only on the (static) chunk size -> trace-time consts.
    s1 = jnp.asarray(_select_mats(bc, 32))
    s2 = jnp.asarray(_select_mats(bc, 16))
    s3 = jnp.asarray(_select_mats(bc, 8, h_major_out=True))

    operands = (x_rows,
                packed["w1"], packed["w2"], packed["w3"], packed["w4"], packed["w6"],
                s1, s2, s3,
                packed["b1"], packed["b2"], packed["b3"], packed["b4"], packed["b6"])

    in_specs = [pl.BlockSpec((bc * _IN_HW, _IN_HW), lambda i: (i, 0))]
    in_specs += [_const_spec(op) for op in operands[1:]]

    flops_chunk = 2 * 4 * (bc * 32 * 32 * 512 + bc * 16 * bc * 32 * 512
                           + bc * 16 * 512 * 256 + bc * 8 * bc * 16 * 256
                           + bc * 8 * 256 * 128 + 4 * bc * bc * 8 * 128
                           + bc * 128 * 256) + 2 * bc * 256 * 16
    bytes_accessed = (sum(int(np.prod(o.shape)) * o.dtype.itemsize for o in operands)
                      + batch * _N_STATS * 4)

    stats = pl.pallas_call(
        _encoder_kernel,
        out_shape=jax.ShapeDtypeStruct((batch, _N_STATS), jnp.float32),
        grid=(n_chunks,),
        in_specs=in_specs,
        out_specs=pl.BlockSpec((bc, _N_STATS), lambda i: (i, 0)),
        compiler_params=pltpu.CompilerParams(
            dimension_semantics=("parallel",)),
        cost_estimate=pl.CostEstimate(flops=n_chunks * flops_chunk,
                                      transcendentals=0,
                                      bytes_accessed=bytes_accessed),
    )(*operands)

    muPrivate = stats[:, :zP]
    logvarPrivate = stats[:, zP:2 * zP]
    muShared = stats[:, 2 * zP:2 * zP + zS]
    logvarShared = stats[:, 2 * zP + zS:]
    stdPrivate = jnp.exp(0.5 * logvarPrivate)     # == sqrt(exp(logvar))
    stdShared = jnp.exp(0.5 * logvarShared)
    return (muPrivate, stdPrivate, logvarPrivate,
            muShared, stdShared, logvarShared)


# --------------------------- pure-JAX reference ------------------------------

def reference_forward(params, x, zP=_Z_P, zS=_Z_S):
    """XLA reference of the PyTorch module (weights bf16-rounded like the kernel)."""
    def q(name):
        return params[name].astype(jnp.bfloat16).astype(jnp.float32)

    h = x
    for i in (1, 2, 3):
        h = lax.conv_general_dilated(
            h, q(f"w{i}"), window_strides=(2, 2), padding=((1, 1), (1, 1)),
            dimension_numbers=("NCHW", "OIHW", "NCHW"))
        h = jax.nn.relu(h + params[f"b{i}"][None, :, None, None])
    B = x.shape[0]
    flat = h.reshape(B, -1)
    h4 = jax.nn.relu(flat @ q("w4").T + params["b4"])
    stats = h4 @ q("w6").T + params["b6"]
    muP, lvP = stats[:, :zP], stats[:, zP:2 * zP]
    muS, lvS = stats[:, 2 * zP:2 * zP + zS], stats[:, 2 * zP + zS:]
    return muP, jnp.sqrt(jnp.exp(lvP)), lvP, muS, jnp.sqrt(jnp.exp(lvS)), lvS


# ----------------------------------- main ------------------------------------

if __name__ == "__main__":
    key = jax.random.PRNGKey(0)
    kparam, kx = jax.random.split(key)

    params = init_params(kparam)
    # Small non-zero biases so the bias-handling paths are actually exercised
    # (normal_init zeroes them; a trained model would not).
    kb = jax.random.split(kx, 6)
    for i, name in enumerate(("b1", "b2", "b3", "b4", "b6")):
        params[name] = 0.01 * jax.random.normal(kb[i], params[name].shape, jnp.float32)
    packed = pack_params(params)

    # Input spatial size is fixed at 32x32 by fc4's 32*4*4 flatten; small batch.
    x = jax.random.normal(kb[5], (2, 1, 32, 32), jnp.float32)

    outs = jax.block_until_ready(encoder_a_forward(packed, x))
    muP, stdP, logvarP, muS, stdS, logvarS = outs

    # shape / internal-consistency checks
    assert muP.shape == (2, 3) and stdP.shape == (2, 3) and logvarP.shape == (2, 3)
    assert muS.shape == (2, 5) and stdS.shape == (2, 5) and logvarS.shape == (2, 5)
    assert bool(jnp.allclose(stdP, jnp.sqrt(jnp.exp(logvarP)), rtol=1e-5, atol=1e-6))
    assert bool(jnp.allclose(stdS, jnp.sqrt(jnp.exp(logvarS)), rtol=1e-5, atol=1e-6))

    # cross-check against a pure-JAX/XLA reference of the same module
    refs = jax.block_until_ready(reference_forward(params, x))
    got = jnp.concatenate([muP, logvarP, muS, logvarS], axis=1)
    want = jnp.concatenate([refs[0], refs[2], refs[3], refs[5]], axis=1)
    scale = float(jnp.max(jnp.abs(want)))
    err = float(jnp.max(jnp.abs(got - want)))
    assert err <= 0.1 * scale + 1e-5, f"mismatch vs reference: {err} (scale {scale})"

    print("KERNEL_OK")
</pallas_src>

<mosaic_0001>
module attributes {stable_mosaic.version = 11 : i64} {
  func.func @_encoder_kernel(%arg0: i32, %arg1: memref<64x32xf32, #tpu.memory_space<vmem>>, %arg2: memref<4x32x512xbf16, #tpu.memory_space<vmem>>, %arg3: memref<4x512x256xbf16, #tpu.memory_space<vmem>>, %arg4: memref<4x256x128xbf16, #tpu.memory_space<vmem>>, %arg5: memref<4x128x256xbf16, #tpu.memory_space<vmem>>, %arg6: memref<256x16xbf16, #tpu.memory_space<vmem>>, %arg7: memref<4x32x64xf32, #tpu.memory_space<vmem>>, %arg8: memref<4x16x32xf32, #tpu.memory_space<vmem>>, %arg9: memref<4x8x16xf32, #tpu.memory_space<vmem>>, %arg10: memref<1x512xf32, #tpu.memory_space<vmem>>, %arg11: memref<1x256xf32, #tpu.memory_space<vmem>>, %arg12: memref<1x128xf32, #tpu.memory_space<vmem>>, %arg13: memref<1x256xf32, #tpu.memory_space<vmem>>, %arg14: memref<1x16xf32, #tpu.memory_space<vmem>>, %arg15: memref<2x16xf32, #tpu.memory_space<vmem>>) attributes {dimension_semantics = [#tpu.dimension_semantics<parallel>], iteration_bounds = array<i64: 1>, scalar_prefetch = 0 : i64, scratch_operands = 0 : i64, tpu.core_type = #tpu.core_type<tc>, window_params = [{transform_indices = @transform_0, window_bounds = array<i64: 64, 32>}, {pipeline_mode = #tpu.pipeline_mode<synchronous>, transform_indices = @transform_1, window_bounds = array<i64: 4, 32, 512>}, {pipeline_mode = #tpu.pipeline_mode<synchronous>, transform_indices = @transform_2, window_bounds = array<i64: 4, 512, 256>}, {pipeline_mode = #tpu.pipeline_mode<synchronous>, transform_indices = @transform_3, window_bounds = array<i64: 4, 256, 128>}, {pipeline_mode = #tpu.pipeline_mode<synchronous>, transform_indices = @transform_4, window_bounds = array<i64: 4, 128, 256>}, {pipeline_mode = #tpu.pipeline_mode<synchronous>, transform_indices = @transform_5, window_bounds = array<i64: 256, 16>}, {pipeline_mode = #tpu.pipeline_mode<synchronous>, transform_indices = @transform_6, window_bounds = array<i64: 4, 32, 64>}, {pipeline_mode = #tpu.pipeline_mode<synchronous>, transform_indices = @transform_7, window_bounds = array<i64: 4, 16, 32>}, {pipeline_mode = #tpu.pipeline_mode<synchronous>, transform_indices = @transform_8, window_bounds = array<i64: 4, 8, 16>}, {pipeline_mode = #tpu.pipeline_mode<synchronous>, transform_indices = @transform_9, window_bounds = array<i64: 1, 512>}, {pipeline_mode = #tpu.pipeline_mode<synchronous>, transform_indices = @transform_10, window_bounds = array<i64: 1, 256>}, {pipeline_mode = #tpu.pipeline_mode<synchronous>, transform_indices = @transform_11, window_bounds = array<i64: 1, 128>}, {pipeline_mode = #tpu.pipeline_mode<synchronous>, transform_indices = @transform_12, window_bounds = array<i64: 1, 256>}, {pipeline_mode = #tpu.pipeline_mode<synchronous>, transform_indices = @transform_13, window_bounds = array<i64: 1, 16>}, {transform_indices = @transform_14, window_bounds = array<i64: 2, 16>}]} {
    %c0 = arith.constant 0 : index
    %c0_0 = arith.constant 0 : index
    %0 = vector.load %arg1[%c0, %c0_0] : memref<64x32xf32, #tpu.memory_space<vmem>>, vector<64x32xf32>
    %1 = arith.truncf %0 : vector<64x32xf32> to vector<64x32xbf16>
    %c0_1 = arith.constant 0 : index
    %c0_2 = arith.constant 0 : index
    %c0_3 = arith.constant 0 : index
    %2 = vector.load %arg2[%c0_1, %c0_2, %c0_3] : memref<4x32x512xbf16, #tpu.memory_space<vmem>>, vector<1x32x512xbf16>
    %3 = vector.shape_cast %2 : vector<1x32x512xbf16> to vector<32x512xbf16>
    %cst = arith.constant dense<0.000000e+00> : vector<64x512xf32>
    %4 = tpu.matmul %1, %3, %cst {dimension_numbers = #tpu.dot_dimension_numbers<[1], [0], [0], [1], [0, 0, 1, 1], [], []>} : vector<64x32xbf16>, vector<32x512xbf16>, vector<64x512xf32> -> vector<64x512xf32>
    %c0_4 = arith.constant 0 : index
    %c0_5 = arith.constant 0 : index
    %c0_6 = arith.constant 0 : index
    %5 = vector.load %arg7[%c0_4, %c0_5, %c0_6] : memref<4x32x64xf32, #tpu.memory_space<vmem>>, vector<1x32x64xf32>
    %6 = vector.shape_cast %5 : vector<1x32x64xf32> to vector<32x64xf32>
    %cst_7 = arith.constant dense<0.000000e+00> : vector<32x512xf32>
    %7 = tpu.matmul %6, %4, %cst_7 {dimension_numbers = #tpu.dot_dimension_numbers<[1], [0], [0], [1], [0, 0, 1, 1], [], []>} : vector<32x64xf32>, vector<64x512xf32>, vector<32x512xf32> -> vector<32x512xf32>
    %c1 = arith.constant 1 : index
    %c0_8 = arith.constant 0 : index
    %c0_9 = arith.constant 0 : index
    %8 = vector.load %arg2[%c1, %c0_8, %c0_9] : memref<4x32x512xbf16, #tpu.memory_space<vmem>>, vector<1x32x512xbf16>
    %9 = vector.shape_cast %8 : vector<1x32x512xbf16> to vector<32x512xbf16>
    %cst_10 = arith.constant dense<0.000000e+00> : vector<64x512xf32>
    %10 = tpu.matmul %1, %9, %cst_10 {dimension_numbers = #tpu.dot_dimension_numbers<[1], [0], [0], [1], [0, 0, 1, 1], [], []>} : vector<64x32xbf16>, vector<32x512xbf16>, vector<64x512xf32> -> vector<64x512xf32>
    %c1_11 = arith.constant 1 : index
    %c0_12 = arith.constant 0 : index
    %c0_13 = arith.constant 0 : index
    %11 = vector.load %arg7[%c1_11, %c0_12, %c0_13] : memref<4x32x64xf32, #tpu.memory_space<vmem>>, vector<1x32x64xf32>
    %12 = vector.shape_cast %11 : vector<1x32x64xf32> to vector<32x64xf32>
    %cst_14 = arith.constant dense<0.000000e+00> : vector<32x512xf32>
    %13 = tpu.matmul %12, %10, %cst_14 {dimension_numbers = #tpu.dot_dimension_numbers<[1], [0], [0], [1], [0, 0, 1, 1], [], []>} : vector<32x64xf32>, vector<64x512xf32>, vector<32x512xf32> -> vector<32x512xf32>
    %14 = arith.addf %7, %13 : vector<32x512xf32>
    %c2 = arith.constant 2 : index
    %c0_15 = arith.constant 0 : index
    %c0_16 = arith.constant 0 : index
    %15 = vector.load %arg2[%c2, %c0_15, %c0_16] : memref<4x32x512xbf16, #tpu.memory_space<vmem>>, vector<1x32x512xbf16>
    %16 = vector.shape_cast %15 : vector<1x32x512xbf16> to vector<32x512xbf16>
    %cst_17 = arith.constant dense<0.000000e+00> : vector<64x512xf32>
    %17 = tpu.matmul %1, %16, %cst_17 {dimension_numbers = #tpu.dot_dimension_numbers<[1], [0], [0], [1], [0, 0, 1, 1], [], []>} : vector<64x32xbf16>, vector<32x512xbf16>, vector<64x512xf32> -> vector<64x512xf32>
    %c2_18 = arith.constant 2 : index
    %c0_19 = arith.constant 0 : index
    %c0_20 = arith.constant 0 : index
    %18 = vector.load %arg7[%c2_18, %c0_19, %c0_20] : memref<4x32x64xf32, #tpu.memory_space<vmem>>, vector<1x32x64xf32>
    %19 = vector.shape_cast %18 : vector<1x32x64xf32> to vector<32x64xf32>
    %cst_21 = arith.constant dense<0.000000e+00> : vector<32x512xf32>
    %20 = tpu.matmul %19, %17, %cst_21 {dimension_numbers = #tpu.dot_dimension_numbers<[1], [0], [0], [1], [0, 0, 1, 1], [], []>} : vector<32x64xf32>, vector<64x512xf32>, vector<32x512xf32> -> vector<32x512xf32>
    %21 = arith.addf %14, %20 : vector<32x512xf32>
    %c3 = arith.constant 3 : index
    %c0_22 = arith.constant 0 : index
    %c0_23 = arith.constant 0 : index
    %22 = vector.load %arg2[%c3, %c0_22, %c0_23] : memref<4x32x512xbf16, #tpu.memory_space<vmem>>, vector<1x32x512xbf16>
    %23 = vector.shape_cast %22 : vector<1x32x512xbf16> to vector<32x512xbf16>
    %cst_24 = arith.constant dense<0.000000e+00> : vector<64x512xf32>
    %24 = tpu.matmul %1, %23, %cst_24 {dimension_numbers = #tpu.dot_dimension_numbers<[1], [0], [0], [1], [0, 0, 1, 1], [], []>} : vector<64x32xbf16>, vector<32x512xbf16>, vector<64x512xf32> -> vector<64x512xf32>
    %c3_25 = arith.constant 3 : index
    %c0_26 = arith.constant 0 : index
    %c0_27 = arith.constant 0 : index
    %25 = vector.load %arg7[%c3_25, %c0_26, %c0_27] : memref<4x32x64xf32, #tpu.memory_space<vmem>>, vector<1x32x64xf32>
    %26 = vector.shape_cast %25 : vector<1x32x64xf32> to vector<32x64xf32>
    %cst_28 = arith.constant dense<0.000000e+00> : vector<32x512xf32>
    %27 = tpu.matmul %26, %24, %cst_28 {dimension_numbers = #tpu.dot_dimension_numbers<[1], [0], [0], [1], [0, 0, 1, 1], [], []>} : vector<32x64xf32>, vector<64x512xf32>, vector<32x512xf32> -> vector<32x512xf32>
    %28 = arith.addf %21, %27 : vector<32x512xf32>
    %c0_29 = arith.constant 0 : index
    %c0_30 = arith.constant 0 : index
    %29 = vector.load %arg10[%c0_29, %c0_30] : memref<1x512xf32, #tpu.memory_space<vmem>>, vector<1x512xf32>
    %30 = vector.broadcast %29 : vector<1x512xf32> to vector<32x512xf32>
    %31 = arith.addf %28, %30 : vector<32x512xf32>
    %cst_31 = arith.constant 0.000000e+00 : f32
    %32 = vector.broadcast %cst_31 : f32 to vector<32x512xf32>
    %33 = arith.maximumf %31, %32 : vector<32x512xf32>
    %34 = arith.truncf %33 : vector<32x512xf32> to vector<32x512xbf16>
    %c0_32 = arith.constant 0 : index
    %c0_33 = arith.constant 0 : index
    %c0_34 = arith.constant 0 : index
    %35 = vector.load %arg3[%c0_32, %c0_33, %c0_34] : memref<4x512x256xbf16, #tpu.memory_space<vmem>>, vector<1x512x256xbf16>
    %36 = vector.shape_cast %35 : vector<1x512x256xbf16> to vector<512x256xbf16>
    %cst_35 = arith.constant dense<0.000000e+00> : vector<32x256xf32>
    %37 = tpu.matmul %34, %36, %cst_35 {dimension_numbers = #tpu.dot_dimension_numbers<[1], [0], [0], [1], [0, 0, 1, 1], [], []>} : vector<32x512xbf16>, vector<512x256xbf16>, vector<32x256xf32> -> vector<32x256xf32>
    %c0_36 = arith.constant 0 : index
    %c0_37 = arith.constant 0 : index
    %c0_38 = arith.constant 0 : index
    %38 = vector.load %arg8[%c0_36, %c0_37, %c0_38] : memref<4x16x32xf32, #tpu.memory_space<vmem>>, vector<1x16x32xf32>
    %39 = vector.shape_cast %38 : vector<1x16x32xf32> to vector<16x32xf32>
    %cst_39 = arith.constant dense<0.000000e+00> : vector<16x256xf32>
    %40 = tpu.matmul %39, %37, %cst_39 {dimension_numbers = #tpu.dot_dimension_numbers<[1], [0], [0], [1], [0, 0, 1, 1], [], []>} : vector<16x32xf32>, vector<32x256xf32>, vector<16x256xf32> -> vector<16x256xf32>
    %c1_40 = arith.constant 1 : index
    %c0_41 = arith.constant 0 : index
    %c0_42 = arith.constant 0 : index
    %41 = vector.load %arg3[%c1_40, %c0_41, %c0_42] : memref<4x512x256xbf16, #tpu.memory_space<vmem>>, vector<1x512x256xbf16>
    %42 = vector.shape_cast %41 : vector<1x512x256xbf16> to vector<512x256xbf16>
    %cst_43 = arith.constant dense<0.000000e+00> : vector<32x256xf32>
    %43 = tpu.matmul %34, %42, %cst_43 {dimension_numbers = #tpu.dot_dimension_numbers<[1], [0], [0], [1], [0, 0, 1, 1], [], []>} : vector<32x512xbf16>, vector<512x256xbf16>, vector<32x256xf32> -> vector<32x256xf32>
    %c1_44 = arith.constant 1 : index
    %c0_45 = arith.constant 0 : index
    %c0_46 = arith.constant 0 : index
    %44 = vector.load %arg8[%c1_44, %c0_45, %c0_46] : memref<4x16x32xf32, #tpu.memory_space<vmem>>, vector<1x16x32xf32>
    %45 = vector.shape_cast %44 : vector<1x16x32xf32> to vector<16x32xf32>
    %cst_47 = arith.constant dense<0.000000e+00> : vector<16x256xf32>
    %46 = tpu.matmul %45, %43, %cst_47 {dimension_numbers = #tpu.dot_dimension_numbers<[1], [0], [0], [1], [0, 0, 1, 1], [], []>} : vector<16x32xf32>, vector<32x256xf32>, vector<16x256xf32> -> vector<16x256xf32>
    %47 = arith.addf %40, %46 : vector<16x256xf32>
    %c2_48 = arith.constant 2 : index
    %c0_49 = arith.constant 0 : index
    %c0_50 = arith.constant 0 : index
    %48 = vector.load %arg3[%c2_48, %c0_49, %c0_50] : memref<4x512x256xbf16, #tpu.memory_space<vmem>>, vector<1x512x256xbf16>
    %49 = vector.shape_cast %48 : vector<1x512x256xbf16> to vector<512x256xbf16>
    %cst_51 = arith.constant dense<0.000000e+00> : vector<32x256xf32>
    %50 = tpu.matmul %34, %49, %cst_51 {dimension_numbers = #tpu.dot_dimension_numbers<[1], [0], [0], [1], [0, 0, 1, 1], [], []>} : vector<32x512xbf16>, vector<512x256xbf16>, vector<32x256xf32> -> vector<32x256xf32>
    %c2_52 = arith.constant 2 : index
    %c0_53 = arith.constant 0 : index
    %c0_54 = arith.constant 0 : index
    %51 = vector.load %arg8[%c2_52, %c0_53, %c0_54] : memref<4x16x32xf32, #tpu.memory_space<vmem>>, vector<1x16x32xf32>
    %52 = vector.shape_cast %51 : vector<1x16x32xf32> to vector<16x32xf32>
    %cst_55 = arith.constant dense<0.000000e+00> : vector<16x256xf32>
    %53 = tpu.matmul %52, %50, %cst_55 {dimension_numbers = #tpu.dot_dimension_numbers<[1], [0], [0], [1], [0, 0, 1, 1], [], []>} : vector<16x32xf32>, vector<32x256xf32>, vector<16x256xf32> -> vector<16x256xf32>
    %54 = arith.addf %47, %53 : vector<16x256xf32>
    %c3_56 = arith.constant 3 : index
    %c0_57 = arith.constant 0 : index
    %c0_58 = arith.constant 0 : index
    %55 = vector.load %arg3[%c3_56, %c0_57, %c0_58] : memref<4x512x256xbf16, #tpu.memory_space<vmem>>, vector<1x512x256xbf16>
    %56 = vector.shape_cast %55 : vector<1x512x256xbf16> to vector<512x256xbf16>
    %cst_59 = arith.constant dense<0.000000e+00> : vector<32x256xf32>
    %57 = tpu.matmul %34, %56, %cst_59 {dimension_numbers = #tpu.dot_dimension_numbers<[1], [0], [0], [1], [0, 0, 1, 1], [], []>} : vector<32x512xbf16>, vector<512x256xbf16>, vector<32x256xf32> -> vector<32x256xf32>
    %c3_60 = arith.constant 3 : index
    %c0_61 = arith.constant 0 : index
    %c0_62 = arith.constant 0 : index
    %58 = vector.load %arg8[%c3_60, %c0_61, %c0_62] : memref<4x16x32xf32, #tpu.memory_space<vmem>>, vector<1x16x32xf32>
    %59 = vector.shape_cast %58 : vector<1x16x32xf32> to vector<16x32xf32>
    %cst_63 = arith.constant dense<0.000000e+00> : vector<16x256xf32>
    %60 = tpu.matmul %59, %57, %cst_63 {dimension_numbers = #tpu.dot_dimension_numbers<[1], [0], [0], [1], [0, 0, 1, 1], [], []>} : vector<16x32xf32>, vector<32x256xf32>, vector<16x256xf32> -> vector<16x256xf32>
    %61 = arith.addf %54, %60 : vector<16x256xf32>
    %c0_64 = arith.constant 0 : index
    %c0_65 = arith.constant 0 : index
    %62 = vector.load %arg11[%c0_64, %c0_65] : memref<1x256xf32, #tpu.memory_space<vmem>>, vector<1x256xf32>
    %63 = vector.broadcast %62 : vector<1x256xf32> to vector<16x256xf32>
    %64 = arith.addf %61, %63 : vector<16x256xf32>
    %cst_66 = arith.constant 0.000000e+00 : f32
    %65 = vector.broadcast %cst_66 : f32 to vector<16x256xf32>
    %66 = arith.maximumf %64, %65 : vector<16x256xf32>
    %67 = arith.truncf %66 : vector<16x256xf32> to vector<16x256xbf16>
    %c0_67 = arith.constant 0 : index
    %c0_68 = arith.constant 0 : index
    %c0_69 = arith.constant 0 : index
    %68 = vector.load %arg4[%c0_67, %c0_68, %c0_69] : memref<4x256x128xbf16, #tpu.memory_space<vmem>>, vector<1x256x128xbf16>
    %69 = vector.shape_cast %68 : vector<1x256x128xbf16> to vector<256x128xbf16>
    %cst_70 = arith.constant dense<0.000000e+00> : vector<16x128xf32>
    %70 = tpu.matmul %67, %69, %cst_70 {dimension_numbers = #tpu.dot_dimension_numbers<[1], [0], [0], [1], [0, 0, 1, 1], [], []>} : vector<16x256xbf16>, vector<256x128xbf16>, vector<16x128xf32> -> vector<16x128xf32>
    %c0_71 = arith.constant 0 : index
    %c0_72 = arith.constant 0 : index
    %c0_73 = arith.constant 0 : index
    %71 = vector.load %arg9[%c0_71, %c0_72, %c0_73] : memref<4x8x16xf32, #tpu.memory_space<vmem>>, vector<1x8x16xf32>
    %72 = vector.shape_cast %71 : vector<1x8x16xf32> to vector<8x16xf32>
    %cst_74 = arith.constant dense<0.000000e+00> : vector<8x128xf32>
    %73 = tpu.matmul %72, %70, %cst_74 {dimension_numbers = #tpu.dot_dimension_numbers<[1], [0], [0], [1], [0, 0, 1, 1], [], []>} : vector<8x16xf32>, vector<16x128xf32>, vector<8x128xf32> -> vector<8x128xf32>
    %c1_75 = arith.constant 1 : index
    %c0_76 = arith.constant 0 : index
    %c0_77 = arith.constant 0 : index
    %74 = vector.load %arg4[%c1_75, %c0_76, %c0_77] : memref<4x256x128xbf16, #tpu.memory_space<vmem>>, vector<1x256x128xbf16>
    %75 = vector.shape_cast %74 : vector<1x256x128xbf16> to vector<256x128xbf16>
    %cst_78 = arith.constant dense<0.000000e+00> : vector<16x128xf32>
    %76 = tpu.matmul %67, %75, %cst_78 {dimension_numbers = #tpu.dot_dimension_numbers<[1], [0], [0], [1], [0, 0, 1, 1], [], []>} : vector<16x256xbf16>, vector<256x128xbf16>, vector<16x128xf32> -> vector<16x128xf32>
    %c1_79 = arith.constant 1 : index
    %c0_80 = arith.constant 0 : index
    %c0_81 = arith.constant 0 : index
    %77 = vector.load %arg9[%c1_79, %c0_80, %c0_81] : memref<4x8x16xf32, #tpu.memory_space<vmem>>, vector<1x8x16xf32>
    %78 = vector.shape_cast %77 : vector<1x8x16xf32> to vector<8x16xf32>
    %cst_82 = arith.constant dense<0.000000e+00> : vector<8x128xf32>
    %79 = tpu.matmul %78, %76, %cst_82 {dimension_numbers = #tpu.dot_dimension_numbers<[1], [0], [0], [1], [0, 0, 1, 1], [], []>} : vector<8x16xf32>, vector<16x128xf32>, vector<8x128xf32> -> vector<8x128xf32>
    %80 = arith.addf %73, %79 : vector<8x128xf32>
    %c2_83 = arith.constant 2 : index
    %c0_84 = arith.constant 0 : index
    %c0_85 = arith.constant 0 : index
    %81 = vector.load %arg4[%c2_83, %c0_84, %c0_85] : memref<4x256x128xbf16, #tpu.memory_space<vmem>>, vector<1x256x128xbf16>
    %82 = vector.shape_cast %81 : vector<1x256x128xbf16> to vector<256x128xbf16>
    %cst_86 = arith.constant dense<0.000000e+00> : vector<16x128xf32>
    %83 = tpu.matmul %67, %82, %cst_86 {dimension_numbers = #tpu.dot_dimension_numbers<[1], [0], [0], [1], [0, 0, 1, 1], [], []>} : vector<16x256xbf16>, vector<256x128xbf16>, vector<16x128xf32> -> vector<16x128xf32>
    %c2_87 = arith.constant 2 : index
    %c0_88 = arith.constant 0 : index
    %c0_89 = arith.constant 0 : index
    %84 = vector.load %arg9[%c2_87, %c0_88, %c0_89] : memref<4x8x16xf32, #tpu.memory_space<vmem>>, vector<1x8x16xf32>
    %85 = vector.shape_cast %84 : vector<1x8x16xf32> to vector<8x16xf32>
    %cst_90 = arith.constant dense<0.000000e+00> : vector<8x128xf32>
    %86 = tpu.matmul %85, %83, %cst_90 {dimension_numbers = #tpu.dot_dimension_numbers<[1], [0], [0], [1], [0, 0, 1, 1], [], []>} : vector<8x16xf32>, vector<16x128xf32>, vector<8x128xf32> -> vector<8x128xf32>
    %87 = arith.addf %80, %86 : vector<8x128xf32>
    %c3_91 = arith.constant 3 : index
    %c0_92 = arith.constant 0 : index
    %c0_93 = arith.constant 0 : index
    %88 = vector.load %arg4[%c3_91, %c0_92, %c0_93] : memref<4x256x128xbf16, #tpu.memory_space<vmem>>, vector<1x256x128xbf16>
    %89 = vector.shape_cast %88 : vector<1x256x128xbf16> to vector<256x128xbf16>
    %cst_94 = arith.constant dense<0.000000e+00> : vector<16x128xf32>
    %90 = tpu.matmul %67, %89, %cst_94 {dimension_numbers = #tpu.dot_dimension_numbers<[1], [0], [0], [1], [0, 0, 1, 1], [], []>} : vector<16x256xbf16>, vector<256x128xbf16>, vector<16x128xf32> -> vector<16x128xf32>
    %c3_95 = arith.constant 3 : index
    %c0_96 = arith.constant 0 : index
    %c0_97 = arith.constant 0 : index
    %91 = vector.load %arg9[%c3_95, %c0_96, %c0_97] : memref<4x8x16xf32, #tpu.memory_space<vmem>>, vector<1x8x16xf32>
    %92 = vector.shape_cast %91 : vector<1x8x16xf32> to vector<8x16xf32>
    %cst_98 = arith.constant dense<0.000000e+00> : vector<8x128xf32>
    %93 = tpu.matmul %92, %90, %cst_98 {dimension_numbers = #tpu.dot_dimension_numbers<[1], [0], [0], [1], [0, 0, 1, 1], [], []>} : vector<8x16xf32>, vector<16x128xf32>, vector<8x128xf32> -> vector<8x128xf32>
    %94 = arith.addf %87, %93 : vector<8x128xf32>
    %c0_99 = arith.constant 0 : index
    %c0_100 = arith.constant 0 : index
    %95 = vector.load %arg12[%c0_99, %c0_100] : memref<1x128xf32, #tpu.memory_space<vmem>>, vector<1x128xf32>
    %96 = vector.broadcast %95 : vector<1x128xf32> to vector<8x128xf32>
    %97 = arith.addf %94, %96 : vector<8x128xf32>
    %cst_101 = arith.constant 0.000000e+00 : f32
    %98 = vector.broadcast %cst_101 : f32 to vector<8x128xf32>
    %99 = arith.maximumf %97, %98 : vector<8x128xf32>
    %100 = vector.extract_strided_slice %99 {offsets = [0, 0], sizes = [2, 128], strides = [1, 1]} : vector<8x128xf32> to vector<2x128xf32>
    %101 = arith.truncf %100 : vector<2x128xf32> to vector<2x128xbf16>
    %c0_102 = arith.constant 0 : index
    %c0_103 = arith.constant 0 : index
    %c0_104 = arith.constant 0 : index
    %102 = vector.load %arg5[%c0_102, %c0_103, %c0_104] : memref<4x128x256xbf16, #tpu.memory_space<vmem>>, vector<1x128x256xbf16>
    %103 = vector.shape_cast %102 : vector<1x128x256xbf16> to vector<128x256xbf16>
    %cst_105 = arith.constant dense<0.000000e+00> : vector<2x256xf32>
    %104 = tpu.matmul %101, %103, %cst_105 {dimension_numbers = #tpu.dot_dimension_numbers<[1], [0], [0], [1], [0, 0, 1, 1], [], []>} : vector<2x128xbf16>, vector<128x256xbf16>, vector<2x256xf32> -> vector<2x256xf32>
    %105 = vector.extract_strided_slice %99 {offsets = [2, 0], sizes = [2, 128], strides = [1, 1]} : vector<8x128xf32> to vector<2x128xf32>
    %106 = arith.truncf %105 : vector<2x128xf32> to vector<2x128xbf16>
    %c1_106 = arith.constant 1 : index
    %c0_107 = arith.constant 0 : index
    %c0_108 = arith.constant 0 : index
    %107 = vector.load %arg5[%c1_106, %c0_107, %c0_108] : memref<4x128x256xbf16, #tpu.memory_space<vmem>>, vector<1x128x256xbf16>
    %108 = vector.shape_cast %107 : vector<1x128x256xbf16> to vector<128x256xbf16>
    %cst_109 = arith.constant dense<0.000000e+00> : vector<2x256xf32>
    %109 = tpu.matmul %106, %108, %cst_109 {dimension_numbers = #tpu.dot_dimension_numbers<[1], [0], [0], [1], [0, 0, 1, 1], [], []>} : vector<2x128xbf16>, vector<128x256xbf16>, vector<2x256xf32> -> vector<2x256xf32>
    %110 = arith.addf %104, %109 : vector<2x256xf32>
    %111 = vector.extract_strided_slice %99 {offsets = [4, 0], sizes = [2, 128], strides = [1, 1]} : vector<8x128xf32> to vector<2x128xf32>
    %112 = arith.truncf %111 : vector<2x128xf32> to vector<2x128xbf16>
    %c2_110 = arith.constant 2 : index
    %c0_111 = arith.constant 0 : index
    %c0_112 = arith.constant 0 : index
    %113 = vector.load %arg5[%c2_110, %c0_111, %c0_112] : memref<4x128x256xbf16, #tpu.memory_space<vmem>>, vector<1x128x256xbf16>
    %114 = vector.shape_cast %113 : vector<1x128x256xbf16> to vector<128x256xbf16>
    %cst_113 = arith.constant dense<0.000000e+00> : vector<2x256xf32>
    %115 = tpu.matmul %112, %114, %cst_113 {dimension_numbers = #tpu.dot_dimension_numbers<[1], [0], [0], [1], [0, 0, 1, 1], [], []>} : vector<2x128xbf16>, vector<128x256xbf16>, vector<2x256xf32> -> vector<2x256xf32>
    %116 = arith.addf %110, %115 : vector<2x256xf32>
    %117 = vector.extract_strided_slice %99 {offsets = [6, 0], sizes = [2, 128], strides = [1, 1]} : vector<8x128xf32> to vector<2x128xf32>
    %118 = arith.truncf %117 : vector<2x128xf32> to vector<2x128xbf16>
    %c3_114 = arith.constant 3 : index
    %c0_115 = arith.constant 0 : index
    %c0_116 = arith.constant 0 : index
    %119 = vector.load %arg5[%c3_114, %c0_115, %c0_116] : memref<4x128x256xbf16, #tpu.memory_space<vmem>>, vector<1x128x256xbf16>
    %120 = vector.shape_cast %119 : vector<1x128x256xbf16> to vector<128x256xbf16>
    %cst_117 = arith.constant dense<0.000000e+00> : vector<2x256xf32>
    %121 = tpu.matmul %118, %120, %cst_117 {dimension_numbers = #tpu.dot_dimension_numbers<[1], [0], [0], [1], [0, 0, 1, 1], [], []>} : vector<2x128xbf16>, vector<128x256xbf16>, vector<2x256xf32> -> vector<2x256xf32>
    %122 = arith.addf %116, %121 : vector<2x256xf32>
    %c0_118 = arith.constant 0 : index
    %c0_119 = arith.constant 0 : index
    %123 = vector.load %arg13[%c0_118, %c0_119] : memref<1x256xf32, #tpu.memory_space<vmem>>, vector<1x256xf32>
    %124 = vector.broadcast %123 : vector<1x256xf32> to vector<2x256xf32>
    %125 = arith.addf %122, %124 : vector<2x256xf32>
    %cst_120 = arith.constant 0.000000e+00 : f32
    %126 = vector.broadcast %cst_120 : f32 to vector<2x256xf32>
    %127 = arith.maximumf %125, %126 : vector<2x256xf32>
    %128 = arith.truncf %127 : vector<2x256xf32> to vector<2x256xbf16>
    %c0_121 = arith.constant 0 : index
    %c0_122 = arith.constant 0 : index
    %129 = vector.load %arg6[%c0_121, %c0_122] : memref<256x16xbf16, #tpu.memory_space<vmem>>, vector<256x16xbf16>
    %cst_123 = arith.constant dense<0.000000e+00> : vector<2x16xf32>
    %130 = tpu.matmul %128, %129, %cst_123 {dimension_numbers = #tpu.dot_dimension_numbers<[1], [0], [0], [1], [0, 0, 1, 1], [], []>} : vector<2x256xbf16>, vector<256x16xbf16>, vector<2x16xf32> -> vector<2x16xf32>
    %c0_124 = arith.constant 0 : index
    %c0_125 = arith.constant 0 : index
    %131 = vector.load %arg14[%c0_124, %c0_125] : memref<1x16xf32, #tpu.memory_space<vmem>>, vector<1x16xf32>
    %132 = vector.broadcast %131 : vector<1x16xf32> to vector<2x16xf32>
    %133 = arith.addf %130, %132 : vector<2x16xf32>
    %c0_126 = arith.constant 0 : index
    %c0_127 = arith.constant 0 : index
    %134 = vector.load %arg15[%c0_126, %c0_127] : memref<2x16xf32, #tpu.memory_space<vmem>>, vector<2x16xf32>
    tpu.vector_store %arg15[%c0_126, %c0_127], %133 {strides = array<i32>} : memref<2x16xf32, #tpu.memory_space<vmem>>, vector<2x16xf32>,
    return
  }
  func.func @transform_0(%arg0: i32) -> (i32, i32) {
    %c0_i32 = arith.constant 0 : i32
    %c0_i32_0 = arith.constant 0 : i32
    return %arg0, %c0_i32 : i32, i32
  }
  func.func @transform_1(%arg0: i32) -> (i32, i32, i32) {
    %c0_i32 = arith.constant 0 : i32
    %c0_i32_0 = arith.constant 0 : i32
    %c0_i32_1 = arith.constant 0 : i32
    %c0_i32_2 = arith.constant 0 : i32
    return %c0_i32, %c0_i32_0, %c0_i32_1 : i32, i32, i32
  }
  func.func @transform_2(%arg0: i32) -> (i32, i32, i32) {
    %c0_i32 = arith.constant 0 : i32
    %c0_i32_0 = arith.constant 0 : i32
    %c0_i32_1 = arith.constant 0 : i32
    %c0_i32_2 = arith.constant 0 : i32
    return %c0_i32, %c0_i32_0, %c0_i32_1 : i32, i32, i32
  }
  func.func @transform_3(%arg0: i32) -> (i32, i32, i32) {
    %c0_i32 = arith.constant 0 : i32
    %c0_i32_0 = arith.constant 0 : i32
    %c0_i32_1 = arith.constant 0 : i32
    %c0_i32_2 = arith.constant 0 : i32
    return %c0_i32, %c0_i32_0, %c0_i32_1 : i32, i32, i32
  }
  func.func @transform_4(%arg0: i32) -> (i32, i32, i32) {
    %c0_i32 = arith.constant 0 : i32
    %c0_i32_0 = arith.constant 0 : i32
    %c0_i32_1 = arith.constant 0 : i32
    %c0_i32_2 = arith.constant 0 : i32
    return %c0_i32, %c0_i32_0, %c0_i32_1 : i32, i32, i32
  }
  func.func @transform_5(%arg0: i32) -> (i32, i32) {
    %c0_i32 = arith.constant 0 : i32
    %c0_i32_0 = arith.constant 0 : i32
    %c0_i32_1 = arith.constant 0 : i32
    return %c0_i32, %c0_i32_0 : i32, i32
  }
  func.func @transform_6(%arg0: i32) -> (i32, i32, i32) {
    %c0_i32 = arith.constant 0 : i32
    %c0_i32_0 = arith.constant 0 : i32
    %c0_i32_1 = arith.constant 0 : i32
    %c0_i32_2 = arith.constant 0 : i32
    return %c0_i32, %c0_i32_0, %c0_i32_1 : i32, i32, i32
  }
  func.func @transform_7(%arg0: i32) -> (i32, i32, i32) {
    %c0_i32 = arith.constant 0 : i32
    %c0_i32_0 = arith.constant 0 : i32
    %c0_i32_1 = arith.constant 0 : i32
    %c0_i32_2 = arith.constant 0 : i32
    return %c0_i32, %c0_i32_0, %c0_i32_1 : i32, i32, i32
  }
  func.func @transform_8(%arg0: i32) -> (i32, i32, i32) {
    %c0_i32 = arith.constant 0 : i32
    %c0_i32_0 = arith.constant 0 : i32
    %c0_i32_1 = arith.constant 0 : i32
    %c0_i32_2 = arith.constant 0 : i32
    return %c0_i32, %c0_i32_0, %c0_i32_1 : i32, i32, i32
  }
  func.func @transform_9(%arg0: i32) -> (i32, i32) {
    %c0_i32 = arith.constant 0 : i32
    %c0_i32_0 = arith.constant 0 : i32
    %c0_i32_1 = arith.constant 0 : i32
    return %c0_i32, %c0_i32_0 : i32, i32
  }
  func.func @transform_10(%arg0: i32) -> (i32, i32) {
    %c0_i32 = arith.constant 0 : i32
    %c0_i32_0 = arith.constant 0 : i32
    %c0_i32_1 = arith.constant 0 : i32
    return %c0_i32, %c0_i32_0 : i32, i32
  }
  func.func @transform_11(%arg0: i32) -> (i32, i32) {
    %c0_i32 = arith.constant 0 : i32
    %c0_i32_0 = arith.constant 0 : i32
    %c0_i32_1 = arith.constant 0 : i32
    return %c0_i32, %c0_i32_0 : i32, i32
  }
  func.func @transform_12(%arg0: i32) -> (i32, i32) {
    %c0_i32 = arith.constant 0 : i32
    %c0_i32_0 = arith.constant 0 : i32
    %c0_i32_1 = arith.constant 0 : i32
    return %c0_i32, %c0_i32_0 : i32, i32
  }
  func.func @transform_13(%arg0: i32) -> (i32, i32) {
    %c0_i32 = arith.constant 0 : i32
    %c0_i32_0 = arith.constant 0 : i32
    %c0_i32_1 = arith.constant 0 : i32
    return %c0_i32, %c0_i32_0 : i32, i32
  }
  func.func @transform_14(%arg0: i32) -> (i32, i32) {
    %c0_i32 = arith.constant 0 : i32
    %c0_i32_0 = arith.constant 0 : i32
    return %arg0, %c0_i32 : i32, i32
  }
}

</mosaic_0001>

<llo_original>
// kernel: encoder_a_forward.1
$region0: #{encoder_a_forward.1}
  #allocation0 [shape = 'u32[]', space=smem, size = 0x4, offset = 0x4, fixed_abs, tag = 'smem constant byte address 0x4 - core index']
  #allocation1 [shape = 'u32[144,128]{1,0:T(1,128)}', space=vmem, size = 0x12000, scoped, tag = 'internal scratch']
  %s0 = inlined_call_operand.hbm [shape: f32[64,32], index: 0, kind: input, shape index: {}]
  %s1 = inlined_call_operand.hbm [shape: bf16[4,32,512], index: 1, kind: input, shape index: {}]
  %s2 = inlined_call_operand.hbm [shape: bf16[4,512,256], index: 2, kind: input, shape index: {}]
  %s3 = inlined_call_operand.hbm [shape: bf16[4,256,128], index: 3, kind: input, shape index: {}]
  %s4 = inlined_call_operand.hbm [shape: bf16[4,128,256], index: 4, kind: input, shape index: {}]
  %s5 = inlined_call_operand.vmem [shape: bf16[256,16], index: 5, kind: input, shape index: {}]
  %s6 = inlined_call_operand.vmem [shape: f32[4,32,64], index: 6, kind: input, shape index: {}]
  %s7 = inlined_call_operand.vmem [shape: f32[4,16,32], index: 7, kind: input, shape index: {}]
  %s8 = inlined_call_operand.hbm [shape: f32[4,8,16], index: 8, kind: input, shape index: {}]
  %s9 = inlined_call_operand.hbm [shape: f32[1,512], index: 9, kind: input, shape index: {}]
  %s10 = inlined_call_operand.hbm [shape: f32[1,256], index: 10, kind: input, shape index: {}]
  %s11 = inlined_call_operand.vmem [shape: f32[1,128], index: 11, kind: input, shape index: {}]
  %s12 = inlined_call_operand.hbm [shape: f32[1,256], index: 12, kind: input, shape index: {}]
  %s13 = inlined_call_operand.hbm [shape: f32[1,16], index: 13, kind: input, shape index: {}]
  %s14 = inlined_call_operand.vmem [shape: f32[2,16], index: 14, kind: output, shape index: {}]
  %s15 = sld [smem:[#allocation0]]
  $region106: #{encoder_a_forward.1} parent=0
    _
  %s17 = ssub.s32 1, %s15
  %s18 = scalar_select 0, %s17, %s15
  $region1: #{encoder_a_forward.1} parent=0
    #allocation2 [shape = 'u8[32768]{0}', space=vmem, size = 0x8000, scoped, tag = 'input window, operand 0, single buffered']
    #allocation3 [shape = 's32[1]{0}', space=sflag, size = 0x4, scoped, tag = 'scoped memory for encoder_a_forward.1']
    #allocation4 [shape = 'u8[131072]{0}', space=vmem, size = 0x20000, scoped, tag = 'input window, operand 1, single buffered']
    #allocation5 [shape = 's32[1]{0}', space=sflag, size = 0x4, scoped, tag = 'scoped memory for encoder_a_forward.1']
    #allocation6 [shape = 'u8[1048576]{0}', space=vmem, size = 0x100000, scoped, tag = 'input window, operand 2, single buffered']
    #allocation7 [shape = 'u8[262144]{0}', space=vmem, size = 0x40000, scoped, tag = 'input window, operand 3, single buffered']
    #allocation8 [shape = 's32[1]{0}', space=sflag, size = 0x4, scoped, tag = 'scoped memory for encoder_a_forward.1']
    #allocation9 [shape = 'u8[262144]{0}', space=vmem, size = 0x40000, scoped, tag = 'input window, operand 4, single buffered']
    #allocation10 [shape = 'u8[16384]{0}', space=vmem, size = 0x4000, scoped, tag = 'input window, operand 8, single buffered']
    #allocation11 [shape = 's32[1]{0}', space=sflag, size = 0x4, scoped, tag = 'scoped memory for encoder_a_forward.1']
    #allocation12 [shape = 'u8[2048]{0}', space=vmem, size = 0x800, scoped, tag = 'input window, operand 9, single buffered']
    #allocation13 [shape = 'u8[1024]{0}', space=vmem, size = 0x400, scoped, tag = 'input window, operand 10, single buffered']
    #allocation14 [shape = 's32[1]{0}', space=sflag, size = 0x4, scoped, tag = 'scoped memory for encoder_a_forward.1']
    #allocation15 [shape = 'u8[1024]{0}', space=vmem, size = 0x400, scoped, tag = 'input window, operand 12, single buffered']
    #allocation16 [shape = 'u8[512]{0}', space=vmem, size = 0x400, scoped, tag = 'input window, operand 13, single buffered']
    #allocation17 [shape = 's32[1]{0}', space=sflag, size = 0x4, scoped, tag = 'scoped memory for encoder_a_forward.1']
    %19 = vsyncpa [#allocation3], 0
    %20 = vsyncpa [#allocation5], 0
    %21 = vsyncpa [#allocation8], 0
    %22 = vsyncpa [#allocation11], 0
    %23 = vsyncpa [#allocation14], 0
    %24 = vsyncpa [#allocation17], 0
    // Predicated region
    $region2: #{encoder_a_forward.1} parent=1 // pred_check
      _
    $region3: #{encoder_a_forward.1} parent=1 // pred_check_branch
      %26 = sbr.rel (0) target = $region5
    $region4: #{encoder_a_forward.1} parent=1 // pred_region
      %s28 = ssub.s32 1024, 1024
      %29 = vsyncadd [#allocation3], %s28
      %s30 = sshll.u32 [#allocation2], 4
      %s31 = int_to_ptr.vmem [resolvable:$true] %s30
      %36 = dma.hbm_to_vmem [thread:$0]  %s0, 1024, %s31, [#allocation3], 128, 128, 8
    $region5: #{encoder_a_forward.1} parent=1 // pred_fallthru
      _
    // Predicated region
    $region6: #{encoder_a_forward.1} parent=1 // pred_check
      _
    $region7: #{encoder_a_forward.1} parent=1 // pred_check_branch
      %38 = sbr.rel (0) target = $region9
    $region8: #{encoder_a_forward.1} parent=1 // pred_region
      %s40 = ssub.s32 4096, 4096
      %41 = vsyncadd [#allocation5], %s40
      %s42 = sshll.u32 [#allocation4], 4
      %s43 = int_to_ptr.vmem [resolvable:$true] %s42
      %48 = dma.hbm_to_vmem [thread:$0]  %s1, 4096, %s43, [#allocation5], 256, 256, 16
    $region9: #{encoder_a_forward.1} parent=1 // pred_fallthru
      _
    // Predicated region
    $region10: #{encoder_a_forward.1} parent=1 // pred_check
      _
    $region11: #{encoder_a_forward.1} parent=1 // pred_check_branch
      %50 = sbr.rel (0) target = $region13
    $region12: #{encoder_a_forward.1} parent=1 // pred_region
      %s52 = ssub.s32 32768, 32768
      %53 = vsyncadd [#allocation5], %s52
      %s54 = sshll.u32 [#allocation6], 4
      %s55 = int_to_ptr.vmem [resolvable:$true] %s54
      %60 = dma.hbm_to_vmem [thread:$0]  %s2, 32768, %s55, [#allocation5], 128, 128, 8
    $region13: #{encoder_a_forward.1} parent=1 // pred_fallthru
      _
    // Predicated region
    $region14: #{encoder_a_forward.1} parent=1 // pred_check
      _
    $region15: #{encoder_a_forward.1} parent=1 // pred_check_branch
      %62 = sbr.rel (0) target = $region17
    $region16: #{encoder_a_forward.1} parent=1 // pred_region
      %s64 = ssub.s32 8192, 8192
      %65 = vsyncadd [#allocation8], %s64
      %s66 = sshll.u32 [#allocation7], 4
      %s67 = int_to_ptr.vmem [resolvable:$true] %s66
      %72 = dma.hbm_to_vmem [thread:$0]  %s3, 8192, %s67, [#allocation8], 64, 64, 4
    $region17: #{encoder_a_forward.1} parent=1 // pred_fallthru
      _
    // Predicated region
    $region18: #{encoder_a_forward.1} parent=1 // pred_check
      _
    $region19: #{encoder_a_forward.1} parent=1 // pred_check_branch
      %74 = sbr.rel (0) target = $region21
    $region20: #{encoder_a_forward.1} parent=1 // pred_region
      %s76 = ssub.s32 8192, 8192
      %77 = vsyncadd [#allocation8], %s76
      %s78 = sshll.u32 [#allocation9], 4
      %s79 = int_to_ptr.vmem [resolvable:$true] %s78
      %84 = dma.hbm_to_vmem [thread:$0]  %s4, 8192, %s79, [#allocation8], 128, 128, 8
    $region21: #{encoder_a_forward.1} parent=1 // pred_fallthru
      _
    // Predicated region
    $region22: #{encoder_a_forward.1} parent=1 // pred_check
      _
    $region23: #{encoder_a_forward.1} parent=1 // pred_check_branch
      %86 = sbr.rel (0) target = $region25
    $region24: #{encoder_a_forward.1} parent=1 // pred_region
      _
    $region25: #{encoder_a_forward.1} parent=1 // pred_fallthru
      _
    // Predicated region
    $region26: #{encoder_a_forward.1} parent=1 // pred_check
      _
    $region27: #{encoder_a_forward.1} parent=1 // pred_check_branch
      %88 = sbr.rel (0) target = $region29
    $region28: #{encoder_a_forward.1} parent=1 // pred_region
      _
    $region29: #{encoder_a_forward.1} parent=1 // pred_fallthru
      _
    // Predicated region
    $region30: #{encoder_a_forward.1} parent=1 // pred_check
      _
    $region31: #{encoder_a_forward.1} parent=1 // pred_check_branch
      %90 = sbr.rel (0) target = $region33
    $region32: #{encoder_a_forward.1} parent=1 // pred_region
      _
    $region33: #{encoder_a_forward.1} parent=1 // pred_fallthru
      _
    // Predicated region
    $region34: #{encoder_a_forward.1} parent=1 // pred_check
      _
    $region35: #{encoder_a_forward.1} parent=1 // pred_check_branch
      %92 = sbr.rel (0) target = $region37
    $region36: #{encoder_a_forward.1} parent=1 // pred_region
      %s94 = ssub.s32 512, 512
      %95 = vsyncadd [#allocation11], %s94
      %s96 = sshll.u32 [#allocation10], 4
      %s97 = int_to_ptr.vmem [resolvable:$true] %s96
      %102 = dma.hbm_to_vmem [thread:$0]  %s8, 512, %s97, [#allocation11], 128, 128, 8
    $region37: #{encoder_a_forward.1} parent=1 // pred_fallthru
      _
    // Predicated region
    $region38: #{encoder_a_forward.1} parent=1 // pred_check
      _
    $region39: #{encoder_a_forward.1} parent=1 // pred_check_branch
      %104 = sbr.rel (0) target = $region41
    $region40: #{encoder_a_forward.1} parent=1 // pred_region
      %s106 = ssub.s32 64, 64
      %107 = vsyncadd [#allocation11], %s106
      %s109 = sshll.u32 [#allocation12], 4
      %s110 = int_to_ptr.vmem [resolvable:$true] %s109
      %112 = dma.hbm_to_vmem [thread:$0]  %s9, 64, %s110, [#allocation11]
    $region41: #{encoder_a_forward.1} parent=1 // pred_fallthru
      _
    // Predicated region
    $region42: #{encoder_a_forward.1} parent=1 // pred_check
      _
    $region43: #{encoder_a_forward.1} parent=1 // pred_check_branch
      %114 = sbr.rel (0) target = $region45
    $region44: #{encoder_a_forward.1} parent=1 // pred_region
      %s116 = ssub.s32 32, 32
      %117 = vsyncadd [#allocation14], %s116
      %s119 = sshll.u32 [#allocation13], 4
      %s120 = int_to_ptr.vmem [resolvable:$true] %s119
      %122 = dma.hbm_to_vmem [thread:$0]  %s10, 32, %s120, [#allocation14]
    $region45: #{encoder_a_forward.1} parent=1 // pred_fallthru
      _
    // Predicated region
    $region46: #{encoder_a_forward.1} parent=1 // pred_check
      _
    $region47: #{encoder_a_forward.1} parent=1 // pred_check_branch
      %124 = sbr.rel (0) target = $region49
    $region48: #{encoder_a_forward.1} parent=1 // pred_region
      _
    $region49: #{encoder_a_forward.1} parent=1 // pred_fallthru
      _
    // Predicated region
    $region50: #{encoder_a_forward.1} parent=1 // pred_check
      _
    $region51: #{encoder_a_forward.1} parent=1 // pred_check_branch
      %126 = sbr.rel (0) target = $region53
    $region52: #{encoder_a_forward.1} parent=1 // pred_region
      %s128 = ssub.s32 32, 32
      %129 = vsyncadd [#allocation14], %s128
      %s131 = sshll.u32 [#allocation15], 4
      %s132 = int_to_ptr.vmem [resolvable:$true] %s131
      %134 = dma.hbm_to_vmem [thread:$0]  %s12, 32, %s132, [#allocation14]
    $region53: #{encoder_a_forward.1} parent=1 // pred_fallthru
      _
    // Predicated region
    $region54: #{encoder_a_forward.1} parent=1 // pred_check
      _
    $region55: #{encoder_a_forward.1} parent=1 // pred_check_branch
      %136 = sbr.rel (0) target = $region57
    $region56: #{encoder_a_forward.1} parent=1 // pred_region
      %s138 = ssub.s32 16, 16
      %139 = vsyncadd [#allocation17], %s138
      %s141 = sshll.u32 [#allocation16], 4
      %s142 = int_to_ptr.vmem [resolvable:$true] %s141
      %144 = dma.hbm_to_vmem [thread:$0]  %s13, 16, %s142, [#allocation17]
    $region57: #{encoder_a_forward.1} parent=1 // pred_fallthru
      _
    // Predicated region
    $region58: #{encoder_a_forward.1} parent=1 // pred_check
      _
    $region59: #{encoder_a_forward.1} parent=1 // pred_check_branch
      %146 = sbr.rel (0) target = $region61
    $region60: #{encoder_a_forward.1} parent=1 // pred_region
      %147 = dma.done [#allocation3], 1024
    $region61: #{encoder_a_forward.1} parent=1 // pred_fallthru
      _
    // Predicated region
    $region62: #{encoder_a_forward.1} parent=1 // pred_check
      _
    $region63: #{encoder_a_forward.1} parent=1 // pred_check_branch
      %149 = sbr.rel (0) target = $region65
    $region64: #{encoder_a_forward.1} parent=1 // pred_region
      %150 = dma.done [#allocation5], 4096
    $region65: #{encoder_a_forward.1} parent=1 // pred_fallthru
      _
    // Predicated region
    $region66: #{encoder_a_forward.1} parent=1 // pred_check
      _
    $region67: #{encoder_a_forward.1} parent=1 // pred_check_branch
      %152 = sbr.rel (0) target = $region69
    $region68: #{encoder_a_forward.1} parent=1 // pred_region
      %153 = dma.done [#allocation5], 32768
    $region69: #{encoder_a_forward.1} parent=1 // pred_fallthru
      _
    // Predicated region
    $region70: #{encoder_a_forward.1} parent=1 // pred_check
      _
    $region71: #{encoder_a_forward.1} parent=1 // pred_check_branch
      %155 = sbr.rel (0) target = $region73
    $region72: #{encoder_a_forward.1} parent=1 // pred_region
      %156 = dma.done [#allocation8], 8192
    $region73: #{encoder_a_forward.1} parent=1 // pred_fallthru
      _
    // Predicated region
    $region74: #{encoder_a_forward.1} parent=1 // pred_check
      _
    $region75: #{encoder_a_forward.1} parent=1 // pred_check_branch
      %158 = sbr.rel (0) target = $region77
    $region76: #{encoder_a_forward.1} parent=1 // pred_region
      %159 = dma.done [#allocation8], 8192
    $region77: #{encoder_a_forward.1} parent=1 // pred_fallthru
      _
    // Predicated region
    $region78: #{encoder_a_forward.1} parent=1 // pred_check
      _
    $region79: #{encoder_a_forward.1} parent=1 // pred_check_branch
      %161 = sbr.rel (0) target = $region81
    $region80: #{encoder_a_forward.1} parent=1 // pred_region
      %162 = dma.done [#allocation11], 512
    $region81: #{encoder_a_forward.1} parent=1 // pred_fallthru
      _
    // Predicated region
    $region82: #{encoder_a_forward.1} parent=1 // pred_check
      _
    $region83: #{encoder_a_forward.1} parent=1 // pred_check_branch
      %164 = sbr.rel (0) target = $region85
    $region84: #{encoder_a_forward.1} parent=1 // pred_region
      %165 = dma.done [#allocation11], 64
    $region85: #{encoder_a_forward.1} parent=1 // pred_fallthru
      _
    // Predicated region
    $region86: #{encoder_a_forward.1} parent=1 // pred_check
      _
    $region87: #{encoder_a_forward.1} parent=1 // pred_check_branch
      %167 = sbr.rel (0) target = $region89
    $region88: #{encoder_a_forward.1} parent=1 // pred_region
      %168 = dma.done [#allocation14], 32
    $region89: #{encoder_a_forward.1} parent=1 // pred_fallthru
      _
    // Predicated region
    $region90: #{encoder_a_forward.1} parent=1 // pred_check
      _
    $region91: #{encoder_a_forward.1} parent=1 // pred_check_branch
      %170 = sbr.rel (0) target = $region93
    $region92: #{encoder_a_forward.1} parent=1 // pred_region
      %171 = dma.done [#allocation14], 32
    $region93: #{encoder_a_forward.1} parent=1 // pred_fallthru
      _
    // Predicated region
    $region94: #{encoder_a_forward.1} parent=1 // pred_check
      _
    $region95: #{encoder_a_forward.1} parent=1 // pred_check_branch
      %173 = sbr.rel (0) target = $region97
    $region96: #{encoder_a_forward.1} parent=1 // pred_region
      %174 = dma.done [#allocation17], 16
    $region97: #{encoder_a_forward.1} parent=1 // pred_fallthru
      _
    %v176 = vld [vmem:[#allocation2] sm:$0xff]
    %v177 = vld [vmem:[#allocation2 + $0x8] sm:$0xff]
    %v178 = vld [vmem:[#allocation2 + $0x10] sm:$0xff]
    %v179 = vld [vmem:[#allocation2 + $0x18] sm:$0xff]
    %v180 = vld [vmem:[#allocation2 + $0x20] sm:$0xff]
    %v181 = vld [vmem:[#allocation2 + $0x28] sm:$0xff]
    %v182 = vld [vmem:[#allocation2 + $0x30] sm:$0xff]
    %v183 = vld [vmem:[#allocation2 + $0x38] sm:$0xff]
    %v184 = vpack.c.bf16 %v177, %v176
    %v185 = vpack.c.bf16 %v179, %v178
    %v186 = vpack.c.bf16 %v181, %v180
    %v187 = vpack.c.bf16 %v183, %v182
    %v188 = vld [vmem:[#allocation4] sm:$0xff]
    %v189 = vld [vmem:[#allocation4 + $0x8] sm:$0xff]
    %v190 = vld [vmem:[#allocation4 + $0x10] sm:$0xff]
    %v191 = vld [vmem:[#allocation4 + $0x18] sm:$0xff]
    %v192 = vld [vmem:[#allocation4 + $0x20] sm:$0xff]
    %v193 = vld [vmem:[#allocation4 + $0x28] sm:$0xff]
    %v194 = vld [vmem:[#allocation4 + $0x30] sm:$0xff]
    %v195 = vld [vmem:[#allocation4 + $0x38] sm:$0xff]
    %v204 = vunpack.c.l.b16 %v188
    %v205 = vunpack.c.h.b16 %v188
    %v206 = vunpack.c.l.b16 %v189
    %v207 = vunpack.c.h.b16 %v189
    %v208 = vunpack.c.l.b16 %v190
    %v209 = vunpack.c.h.b16 %v190
    %v210 = vunpack.c.l.b16 %v191
    %v211 = vunpack.c.h.b16 %v191
    %v212 = vunpack.c.l.b16 %v192
    %v213 = vunpack.c.h.b16 %v192
    %v214 = vunpack.c.l.b16 %v193
    %v215 = vunpack.c.h.b16 %v193
    %v216 = vunpack.c.l.b16 %v194
    %v217 = vunpack.c.h.b16 %v194
    %v218 = vunpack.c.l.b16 %v195
    %v219 = vunpack.c.h.b16 %v195
    %v220 = vpack.c.b16 %v208, %v204
    %v221 = vpack.c.b16 %v209, %v205
    %v222 = vpack.c.b16 %v210, %v206
    %v223 = vpack.c.b16 %v211, %v207
    %v224 = vpack.c.b16 %v216, %v212
    %v225 = vpack.c.b16 %v217, %v213
    %v226 = vpack.c.b16 %v218, %v214
    %v227 = vpack.c.b16 %v219, %v215
    %vm236 = vcmask 261120
    %v238 = vsel %vm236, %v184, 0
    %v241 = vsel %vm236, %v185, 0
    %v244 = vsel %vm236, %v186, 0
    %v247 = vsel %vm236, %v187, 0
    %249 = vmatprep.subr.bf16.mxu0 %v221
    %250 = vmatpush1.bf16.msra.mxu0 %v220
    %251 = vmatprep.subr.bf16.mxu0 %v225
    %252 = vmatpush1.bf16.msra.mxu0 %v224
    %253 = vmatprep.subr.bf16.mxu0 0
    %254 = vmatpush1.bf16.msra.mxu0 0
    %255 = vmatprep.subr.bf16.mxu0 0
    %256 = vmatpush1.bf16.msra.mxu0 0
    %257 = vmatprep.subr.bf16.mxu0 0
    %258 = vmatpush1.bf16.msra.mxu0 0
    %259 = vmatprep.subr.bf16.mxu0 0
    %260 = vmatpush1.bf16.msra.mxu0 0
    %261 = vmatprep.subr.bf16.mxu0 0
    %262 = vmatpush1.bf16.msra.mxu0 0
    %263 = vmatprep.subr.bf16.mxu0 0
    %264 = vmatpush1.bf16.msra.mxu0 0
    %265 = vmatprep.subr.bf16.mxu0 0
    %266 = vmatpush1.bf16.msra.mxu0 0
    %267 = vmatprep.subr.bf16.mxu0 0
    %268 = vmatpush1.bf16.msra.mxu0 0
    %269 = vmatprep.subr.bf16.mxu0 0
    %270 = vmatpush1.bf16.msra.mxu0 0
    %271 = vmatprep.subr.bf16.mxu0 0
    %272 = vmatpush1.bf16.msra.mxu0 0
    %273 = vmatprep.subr.bf16.mxu0 0
    %274 = vmatpush1.bf16.msra.mxu0 0
    %275 = vmatprep.subr.bf16.mxu0 0
    %276 = vmatpush1.bf16.msra.mxu0 0
    %277 = vmatprep.subr.bf16.mxu0 0
    %278 = vmatpush1.bf16.msra.mxu0 0
    %279 = vmatprep.subr.bf16.mxu0 0
    %280 = vmatpush1.bf16.msra.mxu0 0
    %281 = vmatprep.mubr.bf16.mxu0 0
    %282 = vmatmul.mubr.bf16.gmra.mrb[0].mxu0 %v238
    %v283 = vpop.f32.mrb[0].mxu0
    %v284 = vadd.f32 0.0, %v283
    %v285 = vpop.f32.mrb[0].mxu0
    %v286 = vadd.f32 0.0, %v285
    %v287 = vpop.f32.mrb[0].mxu0
    %v288 = vadd.f32 0.0, %v287
    %v289 = vpop.f32.mrb[0].mxu0
    %v290 = vadd.f32 0.0, %v289
    %291 = vmatprep.mubr.bf16.mxu0 0
    %292 = vmatmul.mubr.bf16.gmra.mrb[0].mxu0 %v241
    %v293 = vpop.f32.mrb[0].mxu0
    %v294 = vadd.f32 0.0, %v293
    %v295 = vpop.f32.mrb[0].mxu0
    %v296 = vadd.f32 0.0, %v295
    %v297 = vpop.f32.mrb[0].mxu0
    %v298 = vadd.f32 0.0, %v297
    %v299 = vpop.f32.mrb[0].mxu0
    %v300 = vadd.f32 0.0, %v299
    %301 = vmatprep.mubr.bf16.mxu0 0
    %302 = vmatmul.mubr.bf16.gmra.mrb[0].mxu0 %v244
    %v303 = vpop.f32.mrb[0].mxu0
    %v304 = vadd.f32 0.0, %v303
    %v305 = vpop.f32.mrb[0].mxu0
    %v306 = vadd.f32 0.0, %v305
    %v307 = vpop.f32.mrb[0].mxu0
    %v308 = vadd.f32 0.0, %v307
    %v309 = vpop.f32.mrb[0].mxu0
    %v310 = vadd.f32 0.0, %v309
    %311 = vmatprep.mubr.bf16.mxu0 0
    %312 = vmatmul.mubr.bf16.gmra.mrb[0].mxu0 %v247
    %v313 = vpop.f32.mrb[0].mxu0
    %v314 = vadd.f32 0.0, %v313
    %v315 = vpop.f32.mrb[0].mxu0
    %v316 = vadd.f32 0.0, %v315
    %v317 = vpop.f32.mrb[0].mxu0
    %v318 = vadd.f32 0.0, %v317
    %v319 = vpop.f32.mrb[0].mxu0
    %v320 = vadd.f32 0.0, %v319
    %321 = vdwg.mxu0
    %322 = vmatprep.subr.bf16.mxu0 %v223
    %323 = vmatpush1.bf16.msra.mxu0 %v222
    %324 = vmatprep.subr.bf16.mxu0 %v227
    %325 = vmatpush1.bf16.msra.mxu0 %v226
    %326 = vmatprep.subr.bf16.mxu0 0
    %327 = vmatpush1.bf16.msra.mxu0 0
    %328 = vmatprep.subr.bf16.mxu0 0
    %329 = vmatpush1.bf16.msra.mxu0 0
    %330 = vmatprep.subr.bf16.mxu0 0
    %331 = vmatpush1.bf16.msra.mxu0 0
    %332 = vmatprep.subr.bf16.mxu0 0
    %333 = vmatpush1.bf16.msra.mxu0 0
    %334 = vmatprep.subr.bf16.mxu0 0
    %335 = vmatpush1.bf16.msra.mxu0 0
    %336 = vmatprep.subr.bf16.mxu0 0
    %337 = vmatpush1.bf16.msra.mxu0 0
    %338 = vmatprep.subr.bf16.mxu0 0
    %339 = vmatpush1.bf16.msra.mxu0 0
    %340 = vmatprep.subr.bf16.mxu0 0
    %341 = vmatpush1.bf16.msra.mxu0 0
    %342 = vmatprep.subr.bf16.mxu0 0
    %343 = vmatpush1.bf16.msra.mxu0 0
    %344 = vmatprep.subr.bf16.mxu0 0
    %345 = vmatpush1.bf16.msra.mxu0 0
    %346 = vmatprep.subr.bf16.mxu0 0
    %347 = vmatpush1.bf16.msra.mxu0 0
    %348 = vmatprep.subr.bf16.mxu0 0
    %349 = vmatpush1.bf16.msra.mxu0 0
    %350 = vmatprep.subr.bf16.mxu0 0
    %351 = vmatpush1.bf16.msra.mxu0 0
    %352 = vmatprep.subr.bf16.mxu0 0
    %353 = vmatpush1.bf16.msra.mxu0 0
    %354 = vmatprep.mubr.bf16.mxu0 0
    %355 = vmatmul.mubr.bf16.gmra.mrb[0].mxu0 %v238
    %v356 = vpop.f32.mrb[0].mxu0
    %v357 = vadd.f32 0.0, %v356
    %v358 = vpop.f32.mrb[0].mxu0
    %v359 = vadd.f32 0.0, %v358
    %v360 = vpop.f32.mrb[0].mxu0
    %v361 = vadd.f32 0.0, %v360
    %v362 = vpop.f32.mrb[0].mxu0
    %v363 = vadd.f32 0.0, %v362
    %364 = vmatprep.mubr.bf16.mxu0 0
    %365 = vmatmul.mubr.bf16.gmra.mrb[0].mxu0 %v241
    %v366 = vpop.f32.mrb[0].mxu0
    %v367 = vadd.f32 0.0, %v366
    %v368 = vpop.f32.mrb[0].mxu0
    %v369 = vadd.f32 0.0, %v368
    %v370 = vpop.f32.mrb[0].mxu0
    %v371 = vadd.f32 0.0, %v370
    %v372 = vpop.f32.mrb[0].mxu0
    %v373 = vadd.f32 0.0, %v372
    %374 = vmatprep.mubr.bf16.mxu0 0
    %375 = vmatmul.mubr.bf16.gmra.mrb[0].mxu0 %v244
    %v376 = vpop.f32.mrb[0].mxu0
    %v377 = vadd.f32 0.0, %v376
    %v378 = vpop.f32.mrb[0].mxu0
    %v379 = vadd.f32 0.0, %v378
    %v380 = vpop.f32.mrb[0].mxu0
    %v381 = vadd.f32 0.0, %v380
    %v382 = vpop.f32.mrb[0].mxu0
    %v383 = vadd.f32 0.0, %v382
    %384 = vmatprep.mubr.bf16.mxu0 0
    %385 = vmatmul.mubr.bf16.gmra.mrb[0].mxu0 %v247
    %v386 = vpop.f32.mrb[0].mxu0
    %v387 = vadd.f32 0.0, %v386
    %v388 = vpop.f32.mrb[0].mxu0
    %v389 = vadd.f32 0.0, %v388
    %v390 = vpop.f32.mrb[0].mxu0
    %v391 = vadd.f32 0.0, %v390
    %v392 = vpop.f32.mrb[0].mxu0
    %v393 = vadd.f32 0.0, %v392
    %394 = vdwg.mxu0
    %v395 = vld [vmem:[%s6] sm:$0xff]
    %v396 = vld [vmem:[%s6 + $0x8] sm:$0xff]
    %v397 = vld [vmem:[%s6 + $0x10] sm:$0xff]
    %v398 = vld [vmem:[%s6 + $0x18] sm:$0xff]
    %s399 = scalar_lea.vmem [#allocation4], 64
    %v400 = vld [vmem:[%s399] sm:$0xff]
    %v401 = vld [vmem:[%s399 + $0x8] sm:$0xff]
    %v402 = vld [vmem:[%s399 + $0x10] sm:$0xff]
    %v403 = vld [vmem:[%s399 + $0x18] sm:$0xff]
    %v404 = vld [vmem:[%s399 + $0x20] sm:$0xff]
    %v405 = vld [vmem:[%s399 + $0x28] sm:$0xff]
    %v406 = vld [vmem:[%s399 + $0x30] sm:$0xff]
    %v407 = vld [vmem:[%s399 + $0x38] sm:$0xff]
    %v416 = vunpack.c.l.b16 %v400
    %v417 = vunpack.c.h.b16 %v400
    %v418 = vunpack.c.l.b16 %v401
    %v419 = vunpack.c.h.b16 %v401
    %v420 = vunpack.c.l.b16 %v402
    %v421 = vunpack.c.h.b16 %v402
    %v422 = vunpack.c.l.b16 %v403
    %v423 = vunpack.c.h.b16 %v403
    %v424 = vunpack.c.l.b16 %v404
    %v425 = vunpack.c.h.b16 %v404
    %v426 = vunpack.c.l.b16 %v405
    %v427 = vunpack.c.h.b16 %v405
    %v428 = vunpack.c.l.b16 %v406
    %v429 = vunpack.c.h.b16 %v406
    %v430 = vunpack.c.l.b16 %v407
    %v431 = vunpack.c.h.b16 %v407
    %v432 = vpack.c.b16 %v420, %v416
    %v433 = vpack.c.b16 %v421, %v417
    %v434 = vpack.c.b16 %v422, %v418
    %v435 = vpack.c.b16 %v423, %v419
    %v436 = vpack.c.b16 %v428, %v424
    %v437 = vpack.c.b16 %v429, %v425
    %v438 = vpack.c.b16 %v430, %v426
    %v439 = vpack.c.b16 %v431, %v427
    %448 = vmatprep.subr.bf16.mxu0 %v433
    %449 = vmatpush1.bf16.msra.mxu0 %v432
    %450 = vmatprep.subr.bf16.mxu0 %v437
    %451 = vmatpush1.bf16.msra.mxu0 %v436
    %452 = vmatprep.subr.bf16.mxu0 0
    %453 = vmatpush1.bf16.msra.mxu0 0
    %454 = vmatprep.subr.bf16.mxu0 0
    %455 = vmatpush1.bf16.msra.mxu0 0
    %456 = vmatprep.subr.bf16.mxu0 0
    %457 = vmatpush1.bf16.msra.mxu0 0
    %458 = vmatprep.subr.bf16.mxu0 0
    %459 = vmatpush1.bf16.msra.mxu0 0
    %460 = vmatprep.subr.bf16.mxu0 0
    %461 = vmatpush1.bf16.msra.mxu0 0
    %462 = vmatprep.subr.bf16.mxu0 0
    %463 = vmatpush1.bf16.msra.mxu0 0
    %464 = vmatprep.subr.bf16.mxu0 0
    %465 = vmatpush1.bf16.msra.mxu0 0
    %466 = vmatprep.subr.bf16.mxu0 0
    %467 = vmatpush1.bf16.msra.mxu0 0
    %468 = vmatprep.subr.bf16.mxu0 0
    %469 = vmatpush1.bf16.msra.mxu0 0
    %470 = vmatprep.subr.bf16.mxu0 0
    %471 = vmatpush1.bf16.msra.mxu0 0
    %472 = vmatprep.subr.bf16.mxu0 0
    %473 = vmatpush1.bf16.msra.mxu0 0
    %474 = vmatprep.subr.bf16.mxu0 0
    %475 = vmatpush1.bf16.msra.mxu0 0
    %476 = vmatprep.subr.bf16.mxu0 0
    %477 = vmatpush1.bf16.msra.mxu0 0
    %478 = vmatprep.subr.bf16.mxu0 0
    %479 = vmatpush1.bf16.msra.mxu0 0
    %480 = vmatprep.mubr.bf16.mxu0 0
    %481 = vmatmul.mubr.bf16.gmra.mrb[0].mxu0 %v238
    %v482 = vpop.f32.mrb[0].mxu0
    %v483 = vadd.f32 0.0, %v482
    %v484 = vpop.f32.mrb[0].mxu0
    %v485 = vadd.f32 0.0, %v484
    %v486 = vpop.f32.mrb[0].mxu0
    %v487 = vadd.f32 0.0, %v486
    %v488 = vpop.f32.mrb[0].mxu0
    %v489 = vadd.f32 0.0, %v488
    %490 = vmatprep.mubr.bf16.mxu0 0
    %491 = vmatmul.mubr.bf16.gmra.mrb[0].mxu0 %v241
    %v492 = vpop.f32.mrb[0].mxu0
    %v493 = vadd.f32 0.0, %v492
    %v494 = vpop.f32.mrb[0].mxu0
    %v495 = vadd.f32 0.0, %v494
    %v496 = vpop.f32.mrb[0].mxu0
    %v497 = vadd.f32 0.0, %v496
    %v498 = vpop.f32.mrb[0].mxu0
    %v499 = vadd.f32 0.0, %v498
    %500 = vmatprep.mubr.bf16.mxu0 0
    %501 = vmatmul.mubr.bf16.gmra.mrb[0].mxu0 %v244
    %v502 = vpop.f32.mrb[0].mxu0
    %v503 = vadd.f32 0.0, %v502
    %v504 = vpop.f32.mrb[0].mxu0
    %v505 = vadd.f32 0.0, %v504
    %v506 = vpop.f32.mrb[0].mxu0
    %v507 = vadd.f32 0.0, %v506
    %v508 = vpop.f32.mrb[0].mxu0
    %v509 = vadd.f32 0.0, %v508
    %510 = vmatprep.mubr.bf16.mxu0 0
    %511 = vmatmul.mubr.bf16.gmra.mrb[0].mxu0 %v247
    %v512 = vpop.f32.mrb[0].mxu0
    %v513 = vadd.f32 0.0, %v512
    %v514 = vpop.f32.mrb[0].mxu0
    %v515 = vadd.f32 0.0, %v514
    %v516 = vpop.f32.mrb[0].mxu0
    %v517 = vadd.f32 0.0, %v516
    %v518 = vpop.f32.mrb[0].mxu0
    %v519 = vadd.f32 0.0, %v518
    %520 = vdwg.mxu0
    %521 = vmatprep.subr.bf16.mxu0 %v435
    %522 = vmatpush1.bf16.msra.mxu0 %v434
    %523 = vmatprep.subr.bf16.mxu0 %v439
    %524 = vmatpush1.bf16.msra.mxu0 %v438
    %525 = vmatprep.subr.bf16.mxu0 0
    %526 = vmatpush1.bf16.msra.mxu0 0
    %527 = vmatprep.subr.bf16.mxu0 0
    %528 = vmatpush1.bf16.msra.mxu0 0
    %529 = vmatprep.subr.bf16.mxu0 0
    %530 = vmatpush1.bf16.msra.mxu0 0
    %531 = vmatprep.subr.bf16.mxu0 0
    %532 = vmatpush1.bf16.msra.mxu0 0
    %533 = vmatprep.subr.bf16.mxu0 0
    %534 = vmatpush1.bf16.msra.mxu0 0
    %535 = vmatprep.subr.bf16.mxu0 0
    %536 = vmatpush1.bf16.msra.mxu0 0
    %537 = vmatprep.subr.bf16.mxu0 0
    %538 = vmatpush1.bf16.msra.mxu0 0
    %539 = vmatprep.subr.bf16.mxu0 0
    %540 = vmatpush1.bf16.msra.mxu0 0
    %541 = vmatprep.subr.bf16.mxu0 0
    %542 = vmatpush1.bf16.msra.mxu0 0
    %543 = vmatprep.subr.bf16.mxu0 0
    %544 = vmatpush1.bf16.msra.mxu0 0
    %545 = vmatprep.subr.bf16.mxu0 0
    %546 = vmatpush1.bf16.msra.mxu0 0
    %547 = vmatprep.subr.bf16.mxu0 0
    %548 = vmatpush1.bf16.msra.mxu0 0
    %549 = vmatprep.subr.bf16.mxu0 0
    %550 = vmatpush1.bf16.msra.mxu0 0
    %551 = vmatprep.subr.bf16.mxu0 0
    %552 = vmatpush1.bf16.msra.mxu0 0
    %553 = vmatprep.mubr.bf16.mxu0 0
    %554 = vmatmul.mubr.bf16.gmra.mrb[0].mxu0 %v238
    %v555 = vpop.f32.mrb[0].mxu0
    %v556 = vadd.f32 0.0, %v555
    %v557 = vpop.f32.mrb[0].mxu0
    %v558 = vadd.f32 0.0, %v557
    %v559 = vpop.f32.mrb[0].mxu0
    %v560 = vadd.f32 0.0, %v559
    %v561 = vpop.f32.mrb[0].mxu0
    %v562 = vadd.f32 0.0, %v561
    %563 = vmatprep.mubr.bf16.mxu0 0
    %564 = vmatmul.mubr.bf16.gmra.mrb[0].mxu0 %v241
    %v565 = vpop.f32.mrb[0].mxu0
    %v566 = vadd.f32 0.0, %v565
    %v567 = vpop.f32.mrb[0].mxu0
    %v568 = vadd.f32 0.0, %v567
    %v569 = vpop.f32.mrb[0].mxu0
    %v570 = vadd.f32 0.0, %v569
    %v571 = vpop.f32.mrb[0].mxu0
    %v572 = vadd.f32 0.0, %v571
    %573 = vmatprep.mubr.bf16.mxu0 0
    %574 = vmatmul.mubr.bf16.gmra.mrb[0].mxu0 %v244
    %v575 = vpop.f32.mrb[0].mxu0
    %v576 = vadd.f32 0.0, %v575
    %v577 = vpop.f32.mrb[0].mxu0
    %v578 = vadd.f32 0.0, %v577
    %v579 = vpop.f32.mrb[0].mxu0
    %v580 = vadd.f32 0.0, %v579
    %v581 = vpop.f32.mrb[0].mxu0
    %v582 = vadd.f32 0.0, %v581
    %583 = vmatprep.mubr.bf16.mxu0 0
    %584 = vmatmul.mubr.bf16.gmra.mrb[0].mxu0 %v247
    %v585 = vpop.f32.mrb[0].mxu0
    %v586 = vadd.f32 0.0, %v585
    %v587 = vpop.f32.mrb[0].mxu0
    %v588 = vadd.f32 0.0, %v587
    %v589 = vpop.f32.mrb[0].mxu0
    %v590 = vadd.f32 0.0, %v589
    %v591 = vpop.f32.mrb[0].mxu0
    %v592 = vadd.f32 0.0, %v591
    %593 = vdwg.mxu0
    %s594 = scalar_lea.vmem %s6, 32
    %v595 = vld [vmem:[%s594] sm:$0xff]
    %v596 = vld [vmem:[%s594 + $0x8] sm:$0xff]
    %v597 = vld [vmem:[%s594 + $0x10] sm:$0xff]
    %v598 = vld [vmem:[%s594 + $0x18] sm:$0xff]
    %vm599 = vcmask 523264
    %v601 = vsel %vm599, %v595, 0
    %v604 = vsel %vm599, %v596, 0
    %v607 = vsel %vm599, %v597, 0
    %v610 = vsel %vm599, %v598, 0
    %612 = vmatprep.subr.mxu0 %v485
    %613 = vmatpush1.msra.mxu0 %v483
    %614 = vmatprep.subr.mxu0 %v489
    %615 = vmatpush1.msra.mxu0 %v487
    %616 = vmatprep.subr.mxu0 %v495
    %617 = vmatpush1.msra.mxu0 %v493
    %618 = vmatprep.subr.mxu0 %v499
    %619 = vmatpush1.msra.mxu0 %v497
    %620 = vmatprep.subr.mxu0 %v505
    %621 = vmatpush1.msra.mxu0 %v503
    %622 = vmatprep.subr.mxu0 %v509
    %623 = vmatpush1.msra.mxu0 %v507
    %624 = vmatprep.subr.mxu0 %v515
    %625 = vmatpush1.msra.mxu0 %v513
    %626 = vmatprep.subr.mxu0 %v519
    %627 = vmatpush1.msra.mxu0 %v517
    %628 = vmatprep.subr.mxu0 0.0
    %629 = vmatpush1.msra.mxu0 0.0
    %630 = vmatprep.subr.mxu0 0.0
    %631 = vmatpush1.msra.mxu0 0.0
    %632 = vmatprep.subr.mxu0 0.0
    %633 = vmatpush1.msra.mxu0 0.0
    %634 = vmatprep.subr.mxu0 0.0
    %635 = vmatpush1.msra.mxu0 0.0
    %636 = vmatprep.subr.mxu0 0.0
    %637 = vmatpush1.msra.mxu0 0.0
    %638 = vmatprep.subr.mxu0 0.0
    %639 = vmatpush1.msra.mxu0 0.0
    %640 = vmatprep.subr.mxu0 0.0
    %641 = vmatpush1.msra.mxu0 0.0
    %642 = vmatprep.subr.mxu0 0.0
    %643 = vmatpush1.msra.mxu0 0.0
    %644 = vmatprep.subr.mxu0 0.0
    %645 = vmatpush1.msra.mxu0 0.0
    %646 = vmatprep.subr.mxu0 0.0
    %647 = vmatpush1.msra.mxu0 0.0
    %648 = vmatprep.subr.mxu0 0.0
    %649 = vmatpush1.msra.mxu0 0.0
    %650 = vmatprep.subr.mxu0 0.0
    %651 = vmatpush1.msra.mxu0 0.0
    %652 = vmatprep.subr.mxu0 0.0
    %653 = vmatpush1.msra.mxu0 0.0
    %654 = vmatprep.subr.mxu0 0.0
    %655 = vmatpush1.msra.mxu0 0.0
    %656 = vmatprep.subr.mxu0 0.0
    %657 = vmatpush1.msra.mxu0 0.0
    %658 = vmatprep.subr.mxu0 0.0
    %659 = vmatpush1.msra.mxu0 0.0
    %660 = vmatprep.subr.mxu0 0.0
    %661 = vmatpush1.msra.mxu0 0.0
    %662 = vmatprep.subr.mxu0 0.0
    %663 = vmatpush1.msra.mxu0 0.0
    %664 = vmatprep.subr.mxu0 0.0
    %665 = vmatpush1.msra.mxu0 0.0
    %666 = vmatprep.subr.mxu0 0.0
    %667 = vmatpush1.msra.mxu0 0.0
    %668 = vmatprep.subr.mxu0 0.0
    %669 = vmatpush1.msra.mxu0 0.0
    %670 = vmatprep.subr.mxu0 0.0
    %671 = vmatpush1.msra.mxu0 0.0
    %672 = vmatprep.subr.mxu0 0.0
    %673 = vmatpush1.msra.mxu0 0.0
    %674 = vmatprep.subr.mxu0 0.0
    %675 = vmatpush1.msra.mxu0 0.0
    %676 = vmatprep.mubr.f32.mxu0 0.0
    %677 = vmatmul.mubr.f32.gmra.mrb[0].mxu0 %v601
    %v678 = vpop.f32.mrb[0].mxu0
    %v679 = vadd.f32 0.0, %v678
    %v680 = vpop.f32.mrb[0].mxu0
    %v681 = vadd.f32 0.0, %v680
    %682 = vmatprep.mubr.f32.mxu0 0.0
    %683 = vmatmul.mubr.f32.gmra.mrb[0].mxu0 %v604
    %v684 = vpop.f32.mrb[0].mxu0
    %v685 = vadd.f32 0.0, %v684
    %v686 = vpop.f32.mrb[0].mxu0
    %v687 = vadd.f32 0.0, %v686
    %688 = vmatprep.mubr.f32.mxu0 0.0
    %689 = vmatmul.mubr.f32.gmra.mrb[0].mxu0 %v607
    %v690 = vpop.f32.mrb[0].mxu0
    %v691 = vadd.f32 0.0, %v690
    %v692 = vpop.f32.mrb[0].mxu0
    %v693 = vadd.f32 0.0, %v692
    %694 = vmatprep.mubr.f32.mxu0 0.0
    %695 = vmatmul.mubr.f32.gmra.mrb[0].mxu0 %v610
    %v696 = vpop.f32.mrb[0].mxu0
    %v697 = vadd.f32 0.0, %v696
    %v698 = vpop.f32.mrb[0].mxu0
    %v699 = vadd.f32 0.0, %v698
    %700 = vdwg.mxu0
    %701 = vmatprep.subr.mxu0 %v558
    %702 = vmatpush1.msra.mxu0 %v556
    %703 = vmatprep.subr.mxu0 %v562
    %704 = vmatpush1.msra.mxu0 %v560
    %705 = vmatprep.subr.mxu0 %v568
    %706 = vmatpush1.msra.mxu0 %v566
    %707 = vmatprep.subr.mxu0 %v572
    %708 = vmatpush1.msra.mxu0 %v570
    %709 = vmatprep.subr.mxu0 %v578
    %710 = vmatpush1.msra.mxu0 %v576
    %711 = vmatprep.subr.mxu0 %v582
    %712 = vmatpush1.msra.mxu0 %v580
    %713 = vmatprep.subr.mxu0 %v588
    %714 = vmatpush1.msra.mxu0 %v586
    %715 = vmatprep.subr.mxu0 %v592
    %716 = vmatpush1.msra.mxu0 %v590
    %717 = vmatprep.subr.mxu0 0.0
    %718 = vmatpush1.msra.mxu0 0.0
    %719 = vmatprep.subr.mxu0 0.0
    %720 = vmatpush1.msra.mxu0 0.0
    %721 = vmatprep.subr.mxu0 0.0
    %722 = vmatpush1.msra.mxu0 0.0
    %723 = vmatprep.subr.mxu0 0.0
    %724 = vmatpush1.msra.mxu0 0.0
    %725 = vmatprep.subr.mxu0 0.0
    %726 = vmatpush1.msra.mxu0 0.0
    %727 = vmatprep.subr.mxu0 0.0
    %728 = vmatpush1.msra.mxu0 0.0
    %729 = vmatprep.subr.mxu0 0.0
    %730 = vmatpush1.msra.mxu0 0.0
    %731 = vmatprep.subr.mxu0 0.0
    %732 = vmatpush1.msra.mxu0 0.0
    %733 = vmatprep.subr.mxu0 0.0
    %734 = vmatpush1.msra.mxu0 0.0
    %735 = vmatprep.subr.mxu0 0.0
    %736 = vmatpush1.msra.mxu0 0.0
    %737 = vmatprep.subr.mxu0 0.0
    %738 = vmatpush1.msra.mxu0 0.0
    %739 = vmatprep.subr.mxu0 0.0
    %740 = vmatpush1.msra.mxu0 0.0
    %741 = vmatprep.subr.mxu0 0.0
    %742 = vmatpush1.msra.mxu0 0.0
    %743 = vmatprep.subr.mxu0 0.0
    %744 = vmatpush1.msra.mxu0 0.0
    %745 = vmatprep.subr.mxu0 0.0
    %746 = vmatpush1.msra.mxu0 0.0
    %747 = vmatprep.subr.mxu0 0.0
    %748 = vmatpush1.msra.mxu0 0.0
    %749 = vmatprep.subr.mxu0 0.0
    %750 = vmatpush1.msra.mxu0 0.0
    %751 = vmatprep.subr.mxu0 0.0
    %752 = vmatpush1.msra.mxu0 0.0
    %753 = vmatprep.subr.mxu0 0.0
    %754 = vmatpush1.msra.mxu0 0.0
    %755 = vmatprep.subr.mxu0 0.0
    %756 = vmatpush1.msra.mxu0 0.0
    %757 = vmatprep.subr.mxu0 0.0
    %758 = vmatpush1.msra.mxu0 0.0
    %759 = vmatprep.subr.mxu0 0.0
    %760 = vmatpush1.msra.mxu0 0.0
    %761 = vmatprep.subr.mxu0 0.0
    %762 = vmatpush1.msra.mxu0 0.0
    %763 = vmatprep.subr.mxu0 0.0
    %764 = vmatpush1.msra.mxu0 0.0
    %765 = vmatprep.mubr.f32.mxu0 0.0
    %766 = vmatmul.mubr.f32.gmra.mrb[0].mxu0 %v601
    %v767 = vpop.f32.mrb[0].mxu0
    %v768 = vadd.f32 0.0, %v767
    %v769 = vpop.f32.mrb[0].mxu0
    %v770 = vadd.f32 0.0, %v769
    %771 = vmatprep.mubr.f32.mxu0 0.0
    %772 = vmatmul.mubr.f32.gmra.mrb[0].mxu0 %v604
    %v773 = vpop.f32.mrb[0].mxu0
    %v774 = vadd.f32 0.0, %v773
    %v775 = vpop.f32.mrb[0].mxu0
    %v776 = vadd.f32 0.0, %v775
    %777 = vmatprep.mubr.f32.mxu0 0.0
    %778 = vmatmul.mubr.f32.gmra.mrb[0].mxu0 %v607
    %v779 = vpop.f32.mrb[0].mxu0
    %v780 = vadd.f32 0.0, %v779
    %v781 = vpop.f32.mrb[0].mxu0
    %v782 = vadd.f32 0.0, %v781
    %783 = vmatprep.mubr.f32.mxu0 0.0
    %784 = vmatmul.mubr.f32.gmra.mrb[0].mxu0 %v610
    %v785 = vpop.f32.mrb[0].mxu0
    %v786 = vadd.f32 0.0, %v785
    %v787 = vpop.f32.mrb[0].mxu0
    %v788 = vadd.f32 0.0, %v787
    %789 = vdwg.mxu0
    %v791 = vsel %vm599, %v395, 0
    %v794 = vsel %vm599, %v396, 0
    %v797 = vsel %vm599, %v397, 0
    %v800 = vsel %vm599, %v398, 0
    %802 = vmatprep.subr.mxu0 %v286
    %803 = vmatpush1.msra.mxu0 %v284
    %804 = vmatprep.subr.mxu0 %v290
    %805 = vmatpush1.msra.mxu0 %v288
    %806 = vmatprep.subr.mxu0 %v296
    %807 = vmatpush1.msra.mxu0 %v294
    %808 = vmatprep.subr.mxu0 %v300
    %809 = vmatpush1.msra.mxu0 %v298
    %810 = vmatprep.subr.mxu0 %v306
    %811 = vmatpush1.msra.mxu0 %v304
    %812 = vmatprep.subr.mxu0 %v310
    %813 = vmatpush1.msra.mxu0 %v308
    %814 = vmatprep.subr.mxu0 %v316
    %815 = vmatpush1.msra.mxu0 %v314
    %816 = vmatprep.subr.mxu0 %v320
    %817 = vmatpush1.msra.mxu0 %v318
    %818 = vmatprep.subr.mxu0 0.0
    %819 = vmatpush1.msra.mxu0 0.0
    %820 = vmatprep.subr.mxu0 0.0
    %821 = vmatpush1.msra.mxu0 0.0
    %822 = vmatprep.subr.mxu0 0.0
    %823 = vmatpush1.msra.mxu0 0.0
    %824 = vmatprep.subr.mxu0 0.0
    %825 = vmatpush1.msra.mxu0 0.0
    %826 = vmatprep.subr.mxu0 0.0
    %827 = vmatpush1.msra.mxu0 0.0
    %828 = vmatprep.subr.mxu0 0.0
    %829 = vmatpush1.msra.mxu0 0.0
    %830 = vmatprep.subr.mxu0 0.0
    %831 = vmatpush1.msra.mxu0 0.0
    %832 = vmatprep.subr.mxu0 0.0
    %833 = vmatpush1.msra.mxu0 0.0
    %834 = vmatprep.subr.mxu0 0.0
    %835 = vmatpush1.msra.mxu0 0.0
    %836 = vmatprep.subr.mxu0 0.0
    %837 = vmatpush1.msra.mxu0 0.0
    %838 = vmatprep.subr.mxu0 0.0
    %839 = vmatpush1.msra.mxu0 0.0
    %840 = vmatprep.subr.mxu0 0.0
    %841 = vmatpush1.msra.mxu0 0.0
    %842 = vmatprep.subr.mxu0 0.0
    %843 = vmatpush1.msra.mxu0 0.0
    %844 = vmatprep.subr.mxu0 0.0
    %845 = vmatpush1.msra.mxu0 0.0
    %846 = vmatprep.subr.mxu0 0.0
    %847 = vmatpush1.msra.mxu0 0.0
    %848 = vmatprep.subr.mxu0 0.0
    %849 = vmatpush1.msra.mxu0 0.0
    %850 = vmatprep.subr.mxu0 0.0
    %851 = vmatpush1.msra.mxu0 0.0
    %852 = vmatprep.subr.mxu0 0.0
    %853 = vmatpush1.msra.mxu0 0.0
    %854 = vmatprep.subr.mxu0 0.0
    %855 = vmatpush1.msra.mxu0 0.0
    %856 = vmatprep.subr.mxu0 0.0
    %857 = vmatpush1.msra.mxu0 0.0
    %858 = vmatprep.subr.mxu0 0.0
    %859 = vmatpush1.msra.mxu0 0.0
    %860 = vmatprep.subr.mxu0 0.0
    %861 = vmatpush1.msra.mxu0 0.0
    %862 = vmatprep.subr.mxu0 0.0
    %863 = vmatpush1.msra.mxu0 0.0
    %864 = vmatprep.subr.mxu0 0.0
    %865 = vmatpush1.msra.mxu0 0.0
    %866 = vmatprep.mubr.f32.mxu0 0.0
    %867 = vmatmul.mubr.f32.gmra.mrb[0].mxu0 %v791
    %v868 = vpop.f32.mrb[0].mxu0
    %v869 = vadd.f32 %v679, %v868
    %v870 = vpop.f32.mrb[0].mxu0
    %v871 = vadd.f32 %v681, %v870
    %872 = vmatprep.mubr.f32.mxu0 0.0
    %873 = vmatmul.mubr.f32.gmra.mrb[0].mxu0 %v794
    %v874 = vpop.f32.mrb[0].mxu0
    %v875 = vadd.f32 %v685, %v874
    %v876 = vpop.f32.mrb[0].mxu0
    %v877 = vadd.f32 %v687, %v876
    %878 = vmatprep.mubr.f32.mxu0 0.0
    %879 = vmatmul.mubr.f32.gmra.mrb[0].mxu0 %v797
    %v880 = vpop.f32.mrb[0].mxu0
    %v881 = vadd.f32 %v691, %v880
    %v882 = vpop.f32.mrb[0].mxu0
    %v883 = vadd.f32 %v693, %v882
    %884 = vmatprep.mubr.f32.mxu0 0.0
    %885 = vmatmul.mubr.f32.gmra.mrb[0].mxu0 %v800
    %v886 = vpop.f32.mrb[0].mxu0
    %v887 = vadd.f32 %v697, %v886
    %v888 = vpop.f32.mrb[0].mxu0
    %v889 = vadd.f32 %v699, %v888
    %890 = vdwg.mxu0
    %891 = vmatprep.subr.mxu0 %v359
    %892 = vmatpush1.msra.mxu0 %v357
    %893 = vmatprep.subr.mxu0 %v363
    %894 = vmatpush1.msra.mxu0 %v361
    %895 = vmatprep.subr.mxu0 %v369
    %896 = vmatpush1.msra.mxu0 %v367
    %897 = vmatprep.subr.mxu0 %v373
    %898 = vmatpush1.msra.mxu0 %v371
    %899 = vmatprep.subr.mxu0 %v379
    %900 = vmatpush1.msra.mxu0 %v377
    %901 = vmatprep.subr.mxu0 %v383
    %902 = vmatpush1.msra.mxu0 %v381
    %903 = vmatprep.subr.mxu0 %v389
    %904 = vmatpush1.msra.mxu0 %v387
    %905 = vmatprep.subr.mxu0 %v393
    %906 = vmatpush1.msra.mxu0 %v391
    %907 = vmatprep.subr.mxu0 0.0
    %908 = vmatpush1.msra.mxu0 0.0
    %909 = vmatprep.subr.mxu0 0.0
    %910 = vmatpush1.msra.mxu0 0.0
    %911 = vmatprep.subr.mxu0 0.0
    %912 = vmatpush1.msra.mxu0 0.0
    %913 = vmatprep.subr.mxu0 0.0
    %914 = vmatpush1.msra.mxu0 0.0
    %915 = vmatprep.subr.mxu0 0.0
    %916 = vmatpush1.msra.mxu0 0.0
    %917 = vmatprep.subr.mxu0 0.0
    %918 = vmatpush1.msra.mxu0 0.0
    %919 = vmatprep.subr.mxu0 0.0
    %920 = vmatpush1.msra.mxu0 0.0
    %921 = vmatprep.subr.mxu0 0.0
    %922 = vmatpush1.msra.mxu0 0.0
    %923 = vmatprep.subr.mxu0 0.0
    %924 = vmatpush1.msra.mxu0 0.0
    %925 = vmatprep.subr.mxu0 0.0
    %926 = vmatpush1.msra.mxu0 0.0
    %927 = vmatprep.subr.mxu0 0.0
    %928 = vmatpush1.msra.mxu0 0.0
    %929 = vmatprep.subr.mxu0 0.0
    %930 = vmatpush1.msra.mxu0 0.0
    %931 = vmatprep.subr.mxu0 0.0
    %932 = vmatpush1.msra.mxu0 0.0
    %933 = vmatprep.subr.mxu0 0.0
    %934 = vmatpush1.msra.mxu0 0.0
    %935 = vmatprep.subr.mxu0 0.0
    %936 = vmatpush1.msra.mxu0 0.0
    %937 = vmatprep.subr.mxu0 0.0
    %938 = vmatpush1.msra.mxu0 0.0
    %939 = vmatprep.subr.mxu0 0.0
    %940 = vmatpush1.msra.mxu0 0.0
    %941 = vmatprep.subr.mxu0 0.0
    %942 = vmatpush1.msra.mxu0 0.0
    %943 = vmatprep.subr.mxu0 0.0
    %944 = vmatpush1.msra.mxu0 0.0
    %945 = vmatprep.subr.mxu0 0.0
    %946 = vmatpush1.msra.mxu0 0.0
    %947 = vmatprep.subr.mxu0 0.0
    %948 = vmatpush1.msra.mxu0 0.0
    %949 = vmatprep.subr.mxu0 0.0
    %950 = vmatpush1.msra.mxu0 0.0
    %951 = vmatprep.subr.mxu0 0.0
    %952 = vmatpush1.msra.mxu0 0.0
    %953 = vmatprep.subr.mxu0 0.0
    %954 = vmatpush1.msra.mxu0 0.0
    %955 = vmatprep.mubr.f32.mxu0 0.0
    %956 = vmatmul.mubr.f32.gmra.mrb[0].mxu0 %v791
    %v957 = vpop.f32.mrb[0].mxu0
    %v958 = vadd.f32 %v768, %v957
    %v959 = vpop.f32.mrb[0].mxu0
    %v960 = vadd.f32 %v770, %v959
    %961 = vmatprep.mubr.f32.mxu0 0.0
    %962 = vmatmul.mubr.f32.gmra.mrb[0].mxu0 %v794
    %v963 = vpop.f32.mrb[0].mxu0
    %v964 = vadd.f32 %v774, %v963
    %v965 = vpop.f32.mrb[0].mxu0
    %v966 = vadd.f32 %v776, %v965
    %967 = vmatprep.mubr.f32.mxu0 0.0
    %968 = vmatmul.mubr.f32.gmra.mrb[0].mxu0 %v797
    %v969 = vpop.f32.mrb[0].mxu0
    %v970 = vadd.f32 %v780, %v969
    %v971 = vpop.f32.mrb[0].mxu0
    %v972 = vadd.f32 %v782, %v971
    %973 = vmatprep.mubr.f32.mxu0 0.0
    %974 = vmatmul.mubr.f32.gmra.mrb[0].mxu0 %v800
    %v975 = vpop.f32.mrb[0].mxu0
    %v976 = vadd.f32 %v786, %v975
    %v977 = vpop.f32.mrb[0].mxu0
    %v978 = vadd.f32 %v788, %v977
    %979 = vdwg.mxu0
    %s980 = scalar_lea.vmem [#allocation4], 128
    %v981 = vld [vmem:[%s980] sm:$0xff]
    %v982 = vld [vmem:[%s980 + $0x8] sm:$0xff]
    %v983 = vld [vmem:[%s980 + $0x10] sm:$0xff]
    %v984 = vld [vmem:[%s980 + $0x18] sm:$0xff]
    %v985 = vld [vmem:[%s980 + $0x20] sm:$0xff]
    %v986 = vld [vmem:[%s980 + $0x28] sm:$0xff]
    %v987 = vld [vmem:[%s980 + $0x30] sm:$0xff]
    %v988 = vld [vmem:[%s980 + $0x38] sm:$0xff]
    %v997 = vunpack.c.l.b16 %v981
    %v998 = vunpack.c.h.b16 %v981
    %v999 = vunpack.c.l.b16 %v982
    %v1000 = vunpack.c.h.b16 %v982
    %v1001 = vunpack.c.l.b16 %v983
    %v1002 = vunpack.c.h.b16 %v983
    %v1003 = vunpack.c.l.b16 %v984
    %v1004 = vunpack.c.h.b16 %v984
    %v1005 = vunpack.c.l.b16 %v985
    %v1006 = vunpack.c.h.b16 %v985
    %v1007 = vunpack.c.l.b16 %v986
    %v1008 = vunpack.c.h.b16 %v986
    %v1009 = vunpack.c.l.b16 %v987
    %v1010 = vunpack.c.h.b16 %v987
    %v1011 = vunpack.c.l.b16 %v988
    %v1012 = vunpack.c.h.b16 %v988
    %v1013 = vpack.c.b16 %v1001, %v997
    %v1014 = vpack.c.b16 %v1002, %v998
    %v1015 = vpack.c.b16 %v1003, %v999
    %v1016 = vpack.c.b16 %v1004, %v1000
    %v1017 = vpack.c.b16 %v1009, %v1005
    %v1018 = vpack.c.b16 %v1010, %v1006
    %v1019 = vpack.c.b16 %v1011, %v1007
    %v1020 = vpack.c.b16 %v1012, %v1008
    %1029 = vmatprep.subr.bf16.mxu0 %v1014
    %1030 = vmatpush1.bf16.msra.mxu0 %v1013
    %1031 = vmatprep.subr.bf16.mxu0 %v1018
    %1032 = vmatpush1.bf16.msra.mxu0 %v1017
    %1033 = vmatprep.subr.bf16.mxu0 0
    %1034 = vmatpush1.bf16.msra.mxu0 0
    %1035 = vmatprep.subr.bf16.mxu0 0
    %1036 = vmatpush1.bf16.msra.mxu0 0
    %1037 = vmatprep.subr.bf16.mxu0 0
    %1038 = vmatpush1.bf16.msra.mxu0 0
    %1039 = vmatprep.subr.bf16.mxu0 0
    %1040 = vmatpush1.bf16.msra.mxu0 0
    %1041 = vmatprep.subr.bf16.mxu0 0
    %1042 = vmatpush1.bf16.msra.mxu0 0
    %1043 = vmatprep.subr.bf16.mxu0 0
    %1044 = vmatpush1.bf16.msra.mxu0 0
    %1045 = vmatprep.subr.bf16.mxu0 0
    %1046 = vmatpush1.bf16.msra.mxu0 0
    %1047 = vmatprep.subr.bf16.mxu0 0
    %1048 = vmatpush1.bf16.msra.mxu0 0
    %1049 = vmatprep.subr.bf16.mxu0 0
    %1050 = vmatpush1.bf16.msra.mxu0 0
    %1051 = vmatprep.subr.bf16.mxu0 0
    %1052 = vmatpush1.bf16.msra.mxu0 0
    %1053 = vmatprep.subr.bf16.mxu0 0
    %1054 = vmatpush1.bf16.msra.mxu0 0
    %1055 = vmatprep.subr.bf16.mxu0 0
    %1056 = vmatpush1.bf16.msra.mxu0 0
    %1057 = vmatprep.subr.bf16.mxu0 0
    %1058 = vmatpush1.bf16.msra.mxu0 0
    %1059 = vmatprep.subr.bf16.mxu0 0
    %1060 = vmatpush1.bf16.msra.mxu0 0
    %1061 = vmatprep.mubr.bf16.mxu0 0
    %1062 = vmatmul.mubr.bf16.gmra.mrb[0].mxu0 %v238
    %v1063 = vpop.f32.mrb[0].mxu0
    %v1064 = vadd.f32 0.0, %v1063
    %v1065 = vpop.f32.mrb[0].mxu0
    %v1066 = vadd.f32 0.0, %v1065
    %v1067 = vpop.f32.mrb[0].mxu0
    %v1068 = vadd.f32 0.0, %v1067
    %v1069 = vpop.f32.mrb[0].mxu0
    %v1070 = vadd.f32 0.0, %v1069
    %1071 = vmatprep.mubr.bf16.mxu0 0
    %1072 = vmatmul.mubr.bf16.gmra.mrb[0].mxu0 %v241
    %v1073 = vpop.f32.mrb[0].mxu0
    %v1074 = vadd.f32 0.0, %v1073
    %v1075 = vpop.f32.mrb[0].mxu0
    %v1076 = vadd.f32 0.0, %v1075
    %v1077 = vpop.f32.mrb[0].mxu0
    %v1078 = vadd.f32 0.0, %v1077
    %v1079 = vpop.f32.mrb[0].mxu0
    %v1080 = vadd.f32 0.0, %v1079
    %1081 = vmatprep.mubr.bf16.mxu0 0
    %1082 = vmatmul.mubr.bf16.gmra.mrb[0].mxu0 %v244
    %v1083 = vpop.f32.mrb[0].mxu0
    %v1084 = vadd.f32 0.0, %v1083
    %v1085 = vpop.f32.mrb[0].mxu0
    %v1086 = vadd.f32 0.0, %v1085
    %v1087 = vpop.f32.mrb[0].mxu0
    %v1088 = vadd.f32 0.0, %v1087
    %v1089 = vpop.f32.mrb[0].mxu0
    %v1090 = vadd.f32 0.0, %v1089
    %1091 = vmatprep.mubr.bf16.mxu0 0
    %1092 = vmatmul.mubr.bf16.gmra.mrb[0].mxu0 %v247
    %v1093 = vpop.f32.mrb[0].mxu0
    %v1094 = vadd.f32 0.0, %v1093
    %v1095 = vpop.f32.mrb[0].mxu0
    %v1096 = vadd.f32 0.0, %v1095
    %v1097 = vpop.f32.mrb[0].mxu0
    %v1098 = vadd.f32 0.0, %v1097
    %v1099 = vpop.f32.mrb[0].mxu0
    %v1100 = vadd.f32 0.0, %v1099
    %1101 = vdwg.mxu0
    %1102 = vmatprep.subr.bf16.mxu0 %v1016
    %1103 = vmatpush1.bf16.msra.mxu0 %v1015
    %1104 = vmatprep.subr.bf16.mxu0 %v1020
    %1105 = vmatpush1.bf16.msra.mxu0 %v1019
    %1106 = vmatprep.subr.bf16.mxu0 0
    %1107 = vmatpush1.bf16.msra.mxu0 0
    %1108 = vmatprep.subr.bf16.mxu0 0
    %1109 = vmatpush1.bf16.msra.mxu0 0
    %1110 = vmatprep.subr.bf16.mxu0 0
    %1111 = vmatpush1.bf16.msra.mxu0 0
    %1112 = vmatprep.subr.bf16.mxu0 0
    %1113 = vmatpush1.bf16.msra.mxu0 0
    %1114 = vmatprep.subr.bf16.mxu0 0
    %1115 = vmatpush1.bf16.msra.mxu0 0
    %1116 = vmatprep.subr.bf16.mxu0 0
    %1117 = vmatpush1.bf16.msra.mxu0 0
    %1118 = vmatprep.subr.bf16.mxu0 0
    %1119 = vmatpush1.bf16.msra.mxu0 0
    %1120 = vmatprep.subr.bf16.mxu0 0
    %1121 = vmatpush1.bf16.msra.mxu0 0
    %1122 = vmatprep.subr.bf16.mxu0 0
    %1123 = vmatpush1.bf16.msra.mxu0 0
    %1124 = vmatprep.subr.bf16.mxu0 0
    %1125 = vmatpush1.bf16.msra.mxu0 0
    %1126 = vmatprep.subr.bf16.mxu0 0
    %1127 = vmatpush1.bf16.msra.mxu0 0
    %1128 = vmatprep.subr.bf16.mxu0 0
    %1129 = vmatpush1.bf16.msra.mxu0 0
    %1130 = vmatprep.subr.bf16.mxu0 0
    %1131 = vmatpush1.bf16.msra.mxu0 0
    %1132 = vmatprep.subr.bf16.mxu0 0
    %1133 = vmatpush1.bf16.msra.mxu0 0
    %1134 = vmatprep.mubr.bf16.mxu0 0
    %1135 = vmatmul.mubr.bf16.gmra.mrb[0].mxu0 %v238
    %v1136 = vpop.f32.mrb[0].mxu0
    %v1137 = vadd.f32 0.0, %v1136
    %v1138 = vpop.f32.mrb[0].mxu0
    %v1139 = vadd.f32 0.0, %v1138
    %v1140 = vpop.f32.mrb[0].mxu0
    %v1141 = vadd.f32 0.0, %v1140
    %v1142 = vpop.f32.mrb[0].mxu0
    %v1143 = vadd.f32 0.0, %v1142
    %1144 = vmatprep.mubr.bf16.mxu0 0
    %1145 = vmatmul.mubr.bf16.gmra.mrb[0].mxu0 %v241
    %v1146 = vpop.f32.mrb[0].mxu0
    %v1147 = vadd.f32 0.0, %v1146
    %v1148 = vpop.f32.mrb[0].mxu0
    %v1149 = vadd.f32 0.0, %v1148
    %v1150 = vpop.f32.mrb[0].mxu0
    %v1151 = vadd.f32 0.0, %v1150
    %v1152 = vpop.f32.mrb[0].mxu0
    %v1153 = vadd.f32 0.0, %v1152
    %1154 = vmatprep.mubr.bf16.mxu0 0
    %1155 = vmatmul.mubr.bf16.gmra.mrb[0].mxu0 %v244
    %v1156 = vpop.f32.mrb[0].mxu0
    %v1157 = vadd.f32 0.0, %v1156
    %v1158 = vpop.f32.mrb[0].mxu0
    %v1159 = vadd.f32 0.0, %v1158
    %v1160 = vpop.f32.mrb[0].mxu0
    %v1161 = vadd.f32 0.0, %v1160
    %v1162 = vpop.f32.mrb[0].mxu0
    %v1163 = vadd.f32 0.0, %v1162
    %1164 = vmatprep.mubr.bf16.mxu0 0
    %1165 = vmatmul.mubr.bf16.gmra.mrb[0].mxu0 %v247
    %v1166 = vpop.f32.mrb[0].mxu0
    %v1167 = vadd.f32 0.0, %v1166
    %v1168 = vpop.f32.mrb[0].mxu0
    %v1169 = vadd.f32 0.0, %v1168
    %v1170 = vpop.f32.mrb[0].mxu0
    %v1171 = vadd.f32 0.0, %v1170
    %v1172 = vpop.f32.mrb[0].mxu0
    %v1173 = vadd.f32 0.0, %v1172
    %1174 = vdwg.mxu0
    %s1175 = scalar_lea.vmem %s6, 64
    %v1176 = vld [vmem:[%s1175] sm:$0xff]
    %v1177 = vld [vmem:[%s1175 + $0x8] sm:$0xff]
    %v1178 = vld [vmem:[%s1175 + $0x10] sm:$0xff]
    %v1179 = vld [vmem:[%s1175 + $0x18] sm:$0xff]
    %v1181 = vsel %vm599, %v1176, 0
    %v1184 = vsel %vm599, %v1177, 0
    %v1187 = vsel %vm599, %v1178, 0
    %v1190 = vsel %vm599, %v1179, 0
    %1192 = vmatprep.subr.mxu0 %v1066
    %1193 = vmatpush1.msra.mxu0 %v1064
    %1194 = vmatprep.subr.mxu0 %v1070
    %1195 = vmatpush1.msra.mxu0 %v1068
    %1196 = vmatprep.subr.mxu0 %v1076
    %1197 = vmatpush1.msra.mxu0 %v1074
    %1198 = vmatprep.subr.mxu0 %v1080
    %1199 = vmatpush1.msra.mxu0 %v1078
    %1200 = vmatprep.subr.mxu0 %v1086
    %1201 = vmatpush1.msra.mxu0 %v1084
    %1202 = vmatprep.subr.mxu0 %v1090
    %1203 = vmatpush1.msra.mxu0 %v1088
    %1204 = vmatprep.subr.mxu0 %v1096
    %1205 = vmatpush1.msra.mxu0 %v1094
    %1206 = vmatprep.subr.mxu0 %v1100
    %1207 = vmatpush1.msra.mxu0 %v1098
    %1208 = vmatprep.subr.mxu0 0.0
    %1209 = vmatpush1.msra.mxu0 0.0
    %1210 = vmatprep.subr.mxu0 0.0
    %1211 = vmatpush1.msra.mxu0 0.0
    %1212 = vmatprep.subr.mxu0 0.0
    %1213 = vmatpush1.msra.mxu0 0.0
    %1214 = vmatprep.subr.mxu0 0.0
    %1215 = vmatpush1.msra.mxu0 0.0
    %1216 = vmatprep.subr.mxu0 0.0
    %1217 = vmatpush1.msra.mxu0 0.0
    %1218 = vmatprep.subr.mxu0 0.0
    %1219 = vmatpush1.msra.mxu0 0.0
    %1220 = vmatprep.subr.mxu0 0.0
    %1221 = vmatpush1.msra.mxu0 0.0
    %1222 = vmatprep.subr.mxu0 0.0
    %1223 = vmatpush1.msra.mxu0 0.0
    %1224 = vmatprep.subr.mxu0 0.0
    %1225 = vmatpush1.msra.mxu0 0.0
    %1226 = vmatprep.subr.mxu0 0.0
    %1227 = vmatpush1.msra.mxu0 0.0
    %1228 = vmatprep.subr.mxu0 0.0
    %1229 = vmatpush1.msra.mxu0 0.0
    %1230 = vmatprep.subr.mxu0 0.0
    %1231 = vmatpush1.msra.mxu0 0.0
    %1232 = vmatprep.subr.mxu0 0.0
    %1233 = vmatpush1.msra.mxu0 0.0
    %1234 = vmatprep.subr.mxu0 0.0
    %1235 = vmatpush1.msra.mxu0 0.0
    %1236 = vmatprep.subr.mxu0 0.0
    %1237 = vmatpush1.msra.mxu0 0.0
    %1238 = vmatprep.subr.mxu0 0.0
    %1239 = vmatpush1.msra.mxu0 0.0
    %1240 = vmatprep.subr.mxu0 0.0
    %1241 = vmatpush1.msra.mxu0 0.0
    %1242 = vmatprep.subr.mxu0 0.0
    %1243 = vmatpush1.msra.mxu0 0.0
    %1244 = vmatprep.subr.mxu0 0.0
    %1245 = vmatpush1.msra.mxu0 0.0
    %1246 = vmatprep.subr.mxu0 0.0
    %1247 = vmatpush1.msra.mxu0 0.0
    %1248 = vmatprep.subr.mxu0 0.0
    %1249 = vmatpush1.msra.mxu0 0.0
    %1250 = vmatprep.subr.mxu0 0.0
    %1251 = vmatpush1.msra.mxu0 0.0
    %1252 = vmatprep.subr.mxu0 0.0
    %1253 = vmatpush1.msra.mxu0 0.0
    %1254 = vmatprep.subr.mxu0 0.0
    %1255 = vmatpush1.msra.mxu0 0.0
    %1256 = vmatprep.mubr.f32.mxu0 0.0
    %1257 = vmatmul.mubr.f32.gmra.mrb[0].mxu0 %v1181
    %v1258 = vpop.f32.mrb[0].mxu0
    %v1259 = vadd.f32 0.0, %v1258
    %v1260 = vpop.f32.mrb[0].mxu0
    %v1261 = vadd.f32 0.0, %v1260
    %1262 = vmatprep.mubr.f32.mxu0 0.0
    %1263 = vmatmul.mubr.f32.gmra.mrb[0].mxu0 %v1184
    %v1264 = vpop.f32.mrb[0].mxu0
    %v1265 = vadd.f32 0.0, %v1264
    %v1266 = vpop.f32.mrb[0].mxu0
    %v1267 = vadd.f32 0.0, %v1266
    %1268 = vmatprep.mubr.f32.mxu0 0.0
    %1269 = vmatmul.mubr.f32.gmra.mrb[0].mxu0 %v1187
    %v1270 = vpop.f32.mrb[0].mxu0
    %v1271 = vadd.f32 0.0, %v1270
    %v1272 = vpop.f32.mrb[0].mxu0
    %v1273 = vadd.f32 0.0, %v1272
    %1274 = vmatprep.mubr.f32.mxu0 0.0
    %1275 = vmatmul.mubr.f32.gmra.mrb[0].mxu0 %v1190
    %v1276 = vpop.f32.mrb[0].mxu0
    %v1277 = vadd.f32 0.0, %v1276
    %v1278 = vpop.f32.mrb[0].mxu0
    %v1279 = vadd.f32 0.0, %v1278
    %1280 = vdwg.mxu0
    %1281 = vmatprep.subr.mxu0 %v1139
    %1282 = vmatpush1.msra.mxu0 %v1137
    %1283 = vmatprep.subr.mxu0 %v1143
    %1284 = vmatpush1.msra.mxu0 %v1141
    %1285 = vmatprep.subr.mxu0 %v1149
    %1286 = vmatpush1.msra.mxu0 %v1147
    %1287 = vmatprep.subr.mxu0 %v1153
    %1288 = vmatpush1.msra.mxu0 %v1151
    %1289 = vmatprep.subr.mxu0 %v1159
    %1290 = vmatpush1.msra.mxu0 %v1157
    %1291 = vmatprep.subr.mxu0 %v1163
    %1292 = vmatpush1.msra.mxu0 %v1161
    %1293 = vmatprep.subr.mxu0 %v1169
    %1294 = vmatpush1.msra.mxu0 %v1167
    %1295 = vmatprep.subr.mxu0 %v1173
    %1296 = vmatpush1.msra.mxu0 %v1171
    %1297 = vmatprep.subr.mxu0 0.0
    %1298 = vmatpush1.msra.mxu0 0.0
    %1299 = vmatprep.subr.mxu0 0.0
    %1300 = vmatpush1.msra.mxu0 0.0
    %1301 = vmatprep.subr.mxu0 0.0
    %1302 = vmatpush1.msra.mxu0 0.0
    %1303 = vmatprep.subr.mxu0 0.0
    %1304 = vmatpush1.msra.mxu0 0.0
    %1305 = vmatprep.subr.mxu0 0.0
    %1306 = vmatpush1.msra.mxu0 0.0
    %1307 = vmatprep.subr.mxu0 0.0
    %1308 = vmatpush1.msra.mxu0 0.0
    %1309 = vmatprep.subr.mxu0 0.0
    %1310 = vmatpush1.msra.mxu0 0.0
    %1311 = vmatprep.subr.mxu0 0.0
    %1312 = vmatpush1.msra.mxu0 0.0
    %1313 = vmatprep.subr.mxu0 0.0
    %1314 = vmatpush1.msra.mxu0 0.0
    %1315 = vmatprep.subr.mxu0 0.0
    %1316 = vmatpush1.msra.mxu0 0.0
    %1317 = vmatprep.subr.mxu0 0.0
    %1318 = vmatpush1.msra.mxu0 0.0
    %1319 = vmatprep.subr.mxu0 0.0
    %1320 = vmatpush1.msra.mxu0 0.0
    %1321 = vmatprep.subr.mxu0 0.0
    %1322 = vmatpush1.msra.mxu0 0.0
    %1323 = vmatprep.subr.mxu0 0.0
    %1324 = vmatpush1.msra.mxu0 0.0
    %1325 = vmatprep.subr.mxu0 0.0
    %1326 = vmatpush1.msra.mxu0 0.0
    %1327 = vmatprep.subr.mxu0 0.0
    %1328 = vmatpush1.msra.mxu0 0.0
    %1329 = vmatprep.subr.mxu0 0.0
    %1330 = vmatpush1.msra.mxu0 0.0
    %1331 = vmatprep.subr.mxu0 0.0
    %1332 = vmatpush1.msra.mxu0 0.0
    %1333 = vmatprep.subr.mxu0 0.0
    %1334 = vmatpush1.msra.mxu0 0.0
    %1335 = vmatprep.subr.mxu0 0.0
    %1336 = vmatpush1.msra.mxu0 0.0
    %1337 = vmatprep.subr.mxu0 0.0
    %1338 = vmatpush1.msra.mxu0 0.0
    %1339 = vmatprep.subr.mxu0 0.0
    %1340 = vmatpush1.msra.mxu0 0.0
    %1341 = vmatprep.subr.mxu0 0.0
    %1342 = vmatpush1.msra.mxu0 0.0
    %1343 = vmatprep.subr.mxu0 0.0
    %1344 = vmatpush1.msra.mxu0 0.0
    %1345 = vmatprep.mubr.f32.mxu0 0.0
    %1346 = vmatmul.mubr.f32.gmra.mrb[0].mxu0 %v1181
    %v1347 = vpop.f32.mrb[0].mxu0
    %v1348 = vadd.f32 0.0, %v1347
    %v1349 = vpop.f32.mrb[0].mxu0
    %v1350 = vadd.f32 0.0, %v1349
    %1351 = vmatprep.mubr.f32.mxu0 0.0
    %1352 = vmatmul.mubr.f32.gmra.mrb[0].mxu0 %v1184
    %v1353 = vpop.f32.mrb[0].mxu0
    %v1354 = vadd.f32 0.0, %v1353
    %v1355 = vpop.f32.mrb[0].mxu0
    %v1356 = vadd.f32 0.0, %v1355
    %1357 = vmatprep.mubr.f32.mxu0 0.0
    %1358 = vmatmul.mubr.f32.gmra.mrb[0].mxu0 %v1187
    %v1359 = vpop.f32.mrb[0].mxu0
    %v1360 = vadd.f32 0.0, %v1359
    %v1361 = vpop.f32.mrb[0].mxu0
    %v1362 = vadd.f32 0.0, %v1361
    %1363 = vmatprep.mubr.f32.mxu0 0.0
    %1364 = vmatmul.mubr.f32.gmra.mrb[0].mxu0 %v1190
    %v1365 = vpop.f32.mrb[0].mxu0
    %v1366 = vadd.f32 0.0, %v1365
    %v1367 = vpop.f32.mrb[0].mxu0
    %v1368 = vadd.f32 0.0, %v1367
    %1369 = vdwg.mxu0
    %v1370 = vadd.f32 %v869, %v1259
    %v1371 = vadd.f32 %v871, %v1261
    %v1372 = vadd.f32 %v958, %v1348
    %v1373 = vadd.f32 %v960, %v1350
    %v1374 = vadd.f32 %v875, %v1265
    %v1375 = vadd.f32 %v877, %v1267
    %v1376 = vadd.f32 %v964, %v1354
    %v1377 = vadd.f32 %v966, %v1356
    %v1378 = vadd.f32 %v881, %v1271
    %v1379 = vadd.f32 %v883, %v1273
    %v1380 = vadd.f32 %v970, %v1360
    %v1381 = vadd.f32 %v972, %v1362
    %v1382 = vadd.f32 %v887, %v1277
    %v1383 = vadd.f32 %v889, %v1279
    %v1384 = vadd.f32 %v976, %v1366
    %v1385 = vadd.f32 %v978, %v1368
    %s1386 = scalar_lea.vmem [#allocation4], 192
    %v1387 = vld [vmem:[%s1386] sm:$0xff]
    %v1388 = vld [vmem:[%s1386 + $0x8] sm:$0xff]
    %v1389 = vld [vmem:[%s1386 + $0x10] sm:$0xff]
    %v1390 = vld [vmem:[%s1386 + $0x18] sm:$0xff]
    %v1391 = vld [vmem:[%s1386 + $0x20] sm:$0xff]
    %v1392 = vld [vmem:[%s1386 + $0x28] sm:$0xff]
    %v1393 = vld [vmem:[%s1386 + $0x30] sm:$0xff]
    %v1394 = vld [vmem:[%s1386 + $0x38] sm:$0xff]
    %v1403 = vunpack.c.l.b16 %v1387
    %v1404 = vunpack.c.h.b16 %v1387
    %v1405 = vunpack.c.l.b16 %v1388
    %v1406 = vunpack.c.h.b16 %v1388
    %v1407 = vunpack.c.l.b16 %v1389
    %v1408 = vunpack.c.h.b16 %v1389
    %v1409 = vunpack.c.l.b16 %v1390
    %v1410 = vunpack.c.h.b16 %v1390
    %v1411 = vunpack.c.l.b16 %v1391
    %v1412 = vunpack.c.h.b16 %v1391
    %v1413 = vunpack.c.l.b16 %v1392
    %v1414 = vunpack.c.h.b16 %v1392
    %v1415 = vunpack.c.l.b16 %v1393
    %v1416 = vunpack.c.h.b16 %v1393
    %v1417 = vunpack.c.l.b16 %v1394
    %v1418 = vunpack.c.h.b16 %v1394
    %v1419 = vpack.c.b16 %v1407, %v1403
    %v1420 = vpack.c.b16 %v1408, %v1404
    %v1421 = vpack.c.b16 %v1409, %v1405
    %v1422 = vpack.c.b16 %v1410, %v1406
    %v1423 = vpack.c.b16 %v1415, %v1411
    %v1424 = vpack.c.b16 %v1416, %v1412
    %v1425 = vpack.c.b16 %v1417, %v1413
    %v1426 = vpack.c.b16 %v1418, %v1414
    %1435 = vmatprep.subr.bf16.mxu0 %v1420
    %1436 = vmatpush1.bf16.msra.mxu0 %v1419
    %1437 = vmatprep.subr.bf16.mxu0 %v1424
    %1438 = vmatpush1.bf16.msra.mxu0 %v1423
    %1439 = vmatprep.subr.bf16.mxu0 0
    %1440 = vmatpush1.bf16.msra.mxu0 0
    %1441 = vmatprep.subr.bf16.mxu0 0
    %1442 = vmatpush1.bf16.msra.mxu0 0
    %1443 = vmatprep.subr.bf16.mxu0 0
    %1444 = vmatpush1.bf16.msra.mxu0 0
    %1445 = vmatprep.subr.bf16.mxu0 0
    %1446 = vmatpush1.bf16.msra.mxu0 0
    %1447 = vmatprep.subr.bf16.mxu0 0
    %1448 = vmatpush1.bf16.msra.mxu0 0
    %1449 = vmatprep.subr.bf16.mxu0 0
    %1450 = vmatpush1.bf16.msra.mxu0 0
    %1451 = vmatprep.subr.bf16.mxu0 0
    %1452 = vmatpush1.bf16.msra.mxu0 0
    %1453 = vmatprep.subr.bf16.mxu0 0
    %1454 = vmatpush1.bf16.msra.mxu0 0
    %1455 = vmatprep.subr.bf16.mxu0 0
    %1456 = vmatpush1.bf16.msra.mxu0 0
    %1457 = vmatprep.subr.bf16.mxu0 0
    %1458 = vmatpush1.bf16.msra.mxu0 0
    %1459 = vmatprep.subr.bf16.mxu0 0
    %1460 = vmatpush1.bf16.msra.mxu0 0
    %1461 = vmatprep.subr.bf16.mxu0 0
    %1462 = vmatpush1.bf16.msra.mxu0 0
    %1463 = vmatprep.subr.bf16.mxu0 0
    %1464 = vmatpush1.bf16.msra.mxu0 0
    %1465 = vmatprep.subr.bf16.mxu0 0
    %1466 = vmatpush1.bf16.msra.mxu0 0
    %1467 = vmatprep.mubr.bf16.mxu0 0
    %1468 = vmatmul.mubr.bf16.gmra.mrb[0].mxu0 %v238
    %v1469 = vpop.f32.mrb[0].mxu0
    %v1470 = vadd.f32 0.0, %v1469
    %v1471 = vpop.f32.mrb[0].mxu0
    %v1472 = vadd.f32 0.0, %v1471
    %v1473 = vpop.f32.mrb[0].mxu0
    %v1474 = vadd.f32 0.0, %v1473
    %v1475 = vpop.f32.mrb[0].mxu0
    %v1476 = vadd.f32 0.0, %v1475
    %1477 = vmatprep.mubr.bf16.mxu0 0
    %1478 = vmatmul.mubr.bf16.gmra.mrb[0].mxu0 %v241
    %v1479 = vpop.f32.mrb[0].mxu0
    %v1480 = vadd.f32 0.0, %v1479
    %v1481 = vpop.f32.mrb[0].mxu0
    %v1482 = vadd.f32 0.0, %v1481
    %v1483 = vpop.f32.mrb[0].mxu0
    %v1484 = vadd.f32 0.0, %v1483
    %v1485 = vpop.f32.mrb[0].mxu0
    %v1486 = vadd.f32 0.0, %v1485
    %1487 = vmatprep.mubr.bf16.mxu0 0
    %1488 = vmatmul.mubr.bf16.gmra.mrb[0].mxu0 %v244
    %v1489 = vpop.f32.mrb[0].mxu0
    %v1490 = vadd.f32 0.0, %v1489
    %v1491 = vpop.f32.mrb[0].mxu0
    %v1492 = vadd.f32 0.0, %v1491
    %v1493 = vpop.f32.mrb[0].mxu0
    %v1494 = vadd.f32 0.0, %v1493
    %v1495 = vpop.f32.mrb[0].mxu0
    %v1496 = vadd.f32 0.0, %v1495
    %1497 = vmatprep.mubr.bf16.mxu0 0
    %1498 = vmatmul.mubr.bf16.gmra.mrb[0].mxu0 %v247
    %v1499 = vpop.f32.mrb[0].mxu0
    %v1500 = vadd.f32 0.0, %v1499
    %v1501 = vpop.f32.mrb[0].mxu0
    %v1502 = vadd.f32 0.0, %v1501
    %v1503 = vpop.f32.mrb[0].mxu0
    %v1504 = vadd.f32 0.0, %v1503
    %v1505 = vpop.f32.mrb[0].mxu0
    %v1506 = vadd.f32 0.0, %v1505
    %1507 = vdwg.mxu0
    %1508 = vmatprep.subr.bf16.mxu0 %v1422
    %1509 = vmatpush1.bf16.msra.mxu0 %v1421
    %1510 = vmatprep.subr.bf16.mxu0 %v1426
    %1511 = vmatpush1.bf16.msra.mxu0 %v1425
    %1512 = vmatprep.subr.bf16.mxu0 0
    %1513 = vmatpush1.bf16.msra.mxu0 0
    %1514 = vmatprep.subr.bf16.mxu0 0
    %1515 = vmatpush1.bf16.msra.mxu0 0
    %1516 = vmatprep.subr.bf16.mxu0 0
    %1517 = vmatpush1.bf16.msra.mxu0 0
    %1518 = vmatprep.subr.bf16.mxu0 0
    %1519 = vmatpush1.bf16.msra.mxu0 0
    %1520 = vmatprep.subr.bf16.mxu0 0
    %1521 = vmatpush1.bf16.msra.mxu0 0
    %1522 = vmatprep.subr.bf16.mxu0 0
    %1523 = vmatpush1.bf16.msra.mxu0 0
    %1524 = vmatprep.subr.bf16.mxu0 0
    %1525 = vmatpush1.bf16.msra.mxu0 0
    %1526 = vmatprep.subr.bf16.mxu0 0
    %1527 = vmatpush1.bf16.msra.mxu0 0
    %1528 = vmatprep.subr.bf16.mxu0 0
    %1529 = vmatpush1.bf16.msra.mxu0 0
    %1530 = vmatprep.subr.bf16.mxu0 0
    %1531 = vmatpush1.bf16.msra.mxu0 0
    %1532 = vmatprep.subr.bf16.mxu0 0
    %1533 = vmatpush1.bf16.msra.mxu0 0
    %1534 = vmatprep.subr.bf16.mxu0 0
    %1535 = vmatpush1.bf16.msra.mxu0 0
    %1536 = vmatprep.subr.bf16.mxu0 0
    %1537 = vmatpush1.bf16.msra.mxu0 0
    %1538 = vmatprep.subr.bf16.mxu0 0
    %1539 = vmatpush1.bf16.msra.mxu0 0
    %1540 = vmatprep.mubr.bf16.mxu0 0
    %1541 = vmatmul.mubr.bf16.gmra.mrb[0].mxu0 %v238
    %v1542 = vpop.f32.mrb[0].mxu0
    %v1543 = vadd.f32 0.0, %v1542
    %v1544 = vpop.f32.mrb[0].mxu0
    %v1545 = vadd.f32 0.0, %v1544
    %v1546 = vpop.f32.mrb[0].mxu0
    %v1547 = vadd.f32 0.0, %v1546
    %v1548 = vpop.f32.mrb[0].mxu0
    %v1549 = vadd.f32 0.0, %v1548
    %1550 = vmatprep.mubr.bf16.mxu0 0
    %1551 = vmatmul.mubr.bf16.gmra.mrb[0].mxu0 %v241
    %v1552 = vpop.f32.mrb[0].mxu0
    %v1553 = vadd.f32 0.0, %v1552
    %v1554 = vpop.f32.mrb[0].mxu0
    %v1555 = vadd.f32 0.0, %v1554
    %v1556 = vpop.f32.mrb[0].mxu0
    %v1557 = vadd.f32 0.0, %v1556
    %v1558 = vpop.f32.mrb[0].mxu0
    %v1559 = vadd.f32 0.0, %v1558
    %1560 = vmatprep.mubr.bf16.mxu0 0
    %1561 = vmatmul.mubr.bf16.gmra.mrb[0].mxu0 %v244
    %v1562 = vpop.f32.mrb[0].mxu0
    %v1563 = vadd.f32 0.0, %v1562
    %v1564 = vpop.f32.mrb[0].mxu0
    %v1565 = vadd.f32 0.0, %v1564
    %v1566 = vpop.f32.mrb[0].mxu0
    %v1567 = vadd.f32 0.0, %v1566
    %v1568 = vpop.f32.mrb[0].mxu0
    %v1569 = vadd.f32 0.0, %v1568
    %1570 = vmatprep.mubr.bf16.mxu0 0
    %1571 = vmatmul.mubr.bf16.gmra.mrb[0].mxu0 %v247
    %v1572 = vpop.f32.mrb[0].mxu0
    %v1573 = vadd.f32 0.0, %v1572
    %v1574 = vpop.f32.mrb[0].mxu0
    %v1575 = vadd.f32 0.0, %v1574
    %v1576 = vpop.f32.mrb[0].mxu0
    %v1577 = vadd.f32 0.0, %v1576
    %v1578 = vpop.f32.mrb[0].mxu0
    %v1579 = vadd.f32 0.0, %v1578
    %1580 = vdwg.mxu0
    %s1581 = scalar_lea.vmem %s6, 96
    %v1582 = vld [vmem:[%s1581] sm:$0xff]
    %v1583 = vld [vmem:[%s1581 + $0x8] sm:$0xff]
    %v1584 = vld [vmem:[%s1581 + $0x10] sm:$0xff]
    %v1585 = vld [vmem:[%s1581 + $0x18] sm:$0xff]
    %v1587 = vsel %vm599, %v1582, 0
    %v1590 = vsel %vm599, %v1583, 0
    %v1593 = vsel %vm599, %v1584, 0
    %v1596 = vsel %vm599, %v1585, 0
    %1598 = vmatprep.subr.mxu0 %v1472
    %1599 = vmatpush1.msra.mxu0 %v1470
    %1600 = vmatprep.subr.mxu0 %v1476
    %1601 = vmatpush1.msra.mxu0 %v1474
    %1602 = vmatprep.subr.mxu0 %v1482
    %1603 = vmatpush1.msra.mxu0 %v1480
    %1604 = vmatprep.subr.mxu0 %v1486
    %1605 = vmatpush1.msra.mxu0 %v1484
    %1606 = vmatprep.subr.mxu0 %v1492
    %1607 = vmatpush1.msra.mxu0 %v1490
    %1608 = vmatprep.subr.mxu0 %v1496
    %1609 = vmatpush1.msra.mxu0 %v1494
    %1610 = vmatprep.subr.mxu0 %v1502
    %1611 = vmatpush1.msra.mxu0 %v1500
    %1612 = vmatprep.subr.mxu0 %v1506
    %1613 = vmatpush1.msra.mxu0 %v1504
    %1614 = vmatprep.subr.mxu0 0.0
    %1615 = vmatpush1.msra.mxu0 0.0
    %1616 = vmatprep.subr.mxu0 0.0
    %1617 = vmatpush1.msra.mxu0 0.0
    %1618 = vmatprep.subr.mxu0 0.0
    %1619 = vmatpush1.msra.mxu0 0.0
    %1620 = vmatprep.subr.mxu0 0.0
    %1621 = vmatpush1.msra.mxu0 0.0
    %1622 = vmatprep.subr.mxu0 0.0
    %1623 = vmatpush1.msra.mxu0 0.0
    %1624 = vmatprep.subr.mxu0 0.0
    %1625 = vmatpush1.msra.mxu0 0.0
    %1626 = vmatprep.subr.mxu0 0.0
    %1627 = vmatpush1.msra.mxu0 0.0
    %1628 = vmatprep.subr.mxu0 0.0
    %1629 = vmatpush1.msra.mxu0 0.0
    %1630 = vmatprep.subr.mxu0 0.0
    %1631 = vmatpush1.msra.mxu0 0.0
    %1632 = vmatprep.subr.mxu0 0.0
    %1633 = vmatpush1.msra.mxu0 0.0
    %1634 = vmatprep.subr.mxu0 0.0
    %1635 = vmatpush1.msra.mxu0 0.0
    %1636 = vmatprep.subr.mxu0 0.0
    %1637 = vmatpush1.msra.mxu0 0.0
    %1638 = vmatprep.subr.mxu0 0.0
    %1639 = vmatpush1.msra.mxu0 0.0
    %1640 = vmatprep.subr.mxu0 0.0
    %1641 = vmatpush1.msra.mxu0 0.0
    %1642 = vmatprep.subr.mxu0 0.0
    %1643 = vmatpush1.msra.mxu0 0.0
    %1644 = vmatprep.subr.mxu0 0.0
    %1645 = vmatpush1.msra.mxu0 0.0
    %1646 = vmatprep.subr.mxu0 0.0
    %1647 = vmatpush1.msra.mxu0 0.0
    %1648 = vmatprep.subr.mxu0 0.0
    %1649 = vmatpush1.msra.mxu0 0.0
    %1650 = vmatprep.subr.mxu0 0.0
    %1651 = vmatpush1.msra.mxu0 0.0
    %1652 = vmatprep.subr.mxu0 0.0
    %1653 = vmatpush1.msra.mxu0 0.0
    %1654 = vmatprep.subr.mxu0 0.0
    %1655 = vmatpush1.msra.mxu0 0.0
    %1656 = vmatprep.subr.mxu0 0.0
    %1657 = vmatpush1.msra.mxu0 0.0
    %1658 = vmatprep.subr.mxu0 0.0
    %1659 = vmatpush1.msra.mxu0 0.0
    %1660 = vmatprep.subr.mxu0 0.0
    %1661 = vmatpush1.msra.mxu0 0.0
    %1662 = vmatprep.mubr.f32.mxu0 0.0
    %1663 = vmatmul.mubr.f32.gmra.mrb[0].mxu0 %v1587
    %v1664 = vpop.f32.mrb[0].mxu0
    %v1665 = vadd.f32 0.0, %v1664
    %v1666 = vpop.f32.mrb[0].mxu0
    %v1667 = vadd.f32 0.0, %v1666
    %1668 = vmatprep.mubr.f32.mxu0 0.0
    %1669 = vmatmul.mubr.f32.gmra.mrb[0].mxu0 %v1590
    %v1670 = vpop.f32.mrb[0].mxu0
    %v1671 = vadd.f32 0.0, %v1670
    %v1672 = vpop.f32.mrb[0].mxu0
    %v1673 = vadd.f32 0.0, %v1672
    %1674 = vmatprep.mubr.f32.mxu0 0.0
    %1675 = vmatmul.mubr.f32.gmra.mrb[0].mxu0 %v1593
    %v1676 = vpop.f32.mrb[0].mxu0
    %v1677 = vadd.f32 0.0, %v1676
    %v1678 = vpop.f32.mrb[0].mxu0
    %v1679 = vadd.f32 0.0, %v1678
    %1680 = vmatprep.mubr.f32.mxu0 0.0
    %1681 = vmatmul.mubr.f32.gmra.mrb[0].mxu0 %v1596
    %v1682 = vpop.f32.mrb[0].mxu0
    %v1683 = vadd.f32 0.0, %v1682
    %v1684 = vpop.f32.mrb[0].mxu0
    %v1685 = vadd.f32 0.0, %v1684
    %1686 = vdwg.mxu0
    %1687 = vmatprep.subr.mxu0 %v1545
    %1688 = vmatpush1.msra.mxu0 %v1543
    %1689 = vmatprep.subr.mxu0 %v1549
    %1690 = vmatpush1.msra.mxu0 %v1547
    %1691 = vmatprep.subr.mxu0 %v1555
    %1692 = vmatpush1.msra.mxu0 %v1553
    %1693 = vmatprep.subr.mxu0 %v1559
    %1694 = vmatpush1.msra.mxu0 %v1557
    %1695 = vmatprep.subr.mxu0 %v1565
    %1696 = vmatpush1.msra.mxu0 %v1563
    %1697 = vmatprep.subr.mxu0 %v1569
    %1698 = vmatpush1.msra.mxu0 %v1567
    %1699 = vmatprep.subr.mxu0 %v1575
    %1700 = vmatpush1.msra.mxu0 %v1573
    %1701 = vmatprep.subr.mxu0 %v1579
    %1702 = vmatpush1.msra.mxu0 %v1577
    %1703 = vmatprep.subr.mxu0 0.0
    %1704 = vmatpush1.msra.mxu0 0.0
    %1705 = vmatprep.subr.mxu0 0.0
    %1706 = vmatpush1.msra.mxu0 0.0
    %1707 = vmatprep.subr.mxu0 0.0
    %1708 = vmatpush1.msra.mxu0 0.0
    %1709 = vmatprep.subr.mxu0 0.0
    %1710 = vmatpush1.msra.mxu0 0.0
    %1711 = vmatprep.subr.mxu0 0.0
    %1712 = vmatpush1.msra.mxu0 0.0
    %1713 = vmatprep.subr.mxu0 0.0
    %1714 = vmatpush1.msra.mxu0 0.0
    %1715 = vmatprep.subr.mxu0 0.0
    %1716 = vmatpush1.msra.mxu0 0.0
    %1717 = vmatprep.subr.mxu0 0.0
    %1718 = vmatpush1.msra.mxu0 0.0
    %1719 = vmatprep.subr.mxu0 0.0
    %1720 = vmatpush1.msra.mxu0 0.0
    %1721 = vmatprep.subr.mxu0 0.0
    %1722 = vmatpush1.msra.mxu0 0.0
    %1723 = vmatprep.subr.mxu0 0.0
    %1724 = vmatpush1.msra.mxu0 0.0
    %1725 = vmatprep.subr.mxu0 0.0
    %1726 = vmatpush1.msra.mxu0 0.0
    %1727 = vmatprep.subr.mxu0 0.0
    %1728 = vmatpush1.msra.mxu0 0.0
    %1729 = vmatprep.subr.mxu0 0.0
    %1730 = vmatpush1.msra.mxu0 0.0
    %1731 = vmatprep.subr.mxu0 0.0
    %1732 = vmatpush1.msra.mxu0 0.0
    %1733 = vmatprep.subr.mxu0 0.0
    %1734 = vmatpush1.msra.mxu0 0.0
    %1735 = vmatprep.subr.mxu0 0.0
    %1736 = vmatpush1.msra.mxu0 0.0
    %1737 = vmatprep.subr.mxu0 0.0
    %1738 = vmatpush1.msra.mxu0 0.0
    %1739 = vmatprep.subr.mxu0 0.0
    %1740 = vmatpush1.msra.mxu0 0.0
    %1741 = vmatprep.subr.mxu0 0.0
    %1742 = vmatpush1.msra.mxu0 0.0
    %1743 = vmatprep.subr.mxu0 0.0
    %1744 = vmatpush1.msra.mxu0 0.0
    %1745 = vmatprep.subr.mxu0 0.0
    %1746 = vmatpush1.msra.mxu0 0.0
    %1747 = vmatprep.subr.mxu0 0.0
    %1748 = vmatpush1.msra.mxu0 0.0
    %1749 = vmatprep.subr.mxu0 0.0
    %1750 = vmatpush1.msra.mxu0 0.0
    %1751 = vmatprep.mubr.f32.mxu0 0.0
    %1752 = vmatmul.mubr.f32.gmra.mrb[0].mxu0 %v1587
    %v1753 = vpop.f32.mrb[0].mxu0
    %v1754 = vadd.f32 0.0, %v1753
    %v1755 = vpop.f32.mrb[0].mxu0
    %v1756 = vadd.f32 0.0, %v1755
    %1757 = vmatprep.mubr.f32.mxu0 0.0
    %1758 = vmatmul.mubr.f32.gmra.mrb[0].mxu0 %v1590
    %v1759 = vpop.f32.mrb[0].mxu0
    %v1760 = vadd.f32 0.0, %v1759
    %v1761 = vpop.f32.mrb[0].mxu0
    %v1762 = vadd.f32 0.0, %v1761
    %1763 = vmatprep.mubr.f32.mxu0 0.0
    %1764 = vmatmul.mubr.f32.gmra.mrb[0].mxu0 %v1593
    %v1765 = vpop.f32.mrb[0].mxu0
    %v1766 = vadd.f32 0.0, %v1765
    %v1767 = vpop.f32.mrb[0].mxu0
    %v1768 = vadd.f32 0.0, %v1767
    %1769 = vmatprep.mubr.f32.mxu0 0.0
    %1770 = vmatmul.mubr.f32.gmra.mrb[0].mxu0 %v1596
    %v1771 = vpop.f32.mrb[0].mxu0
    %v1772 = vadd.f32 0.0, %v1771
    %v1773 = vpop.f32.mrb[0].mxu0
    %v1774 = vadd.f32 0.0, %v1773
    %1775 = vdwg.mxu0
    %v1776 = vadd.f32 %v1370, %v1665
    %v1777 = vadd.f32 %v1371, %v1667
    %v1778 = vadd.f32 %v1372, %v1754
    %v1779 = vadd.f32 %v1373, %v1756
    %v1780 = vadd.f32 %v1374, %v1671
    %v1781 = vadd.f32 %v1375, %v1673
    %v1782 = vadd.f32 %v1376, %v1760
    %v1783 = vadd.f32 %v1377, %v1762
    %v1784 = vadd.f32 %v1378, %v1677
    %v1785 = vadd.f32 %v1379, %v1679
    %v1786 = vadd.f32 %v1380, %v1766
    %v1787 = vadd.f32 %v1381, %v1768
    %v1788 = vadd.f32 %v1382, %v1683
    %v1789 = vadd.f32 %v1383, %v1685
    %v1790 = vadd.f32 %v1384, %v1772
    %v1791 = vadd.f32 %v1385, %v1774
    %v1792 = vld [vmem:[#allocation12] sm:$0xf]
    %v1794 = vlaneseq
    %v1795 = vshrl.u32 %v1794, 7
    %v1796 = vsub.s32 0, %v1795
    %v1797 = vrot.slane %v1792, %v1796
    %v1798 = vlaneseq
    %v1799 = vshrl.u32 %v1798, 7
    %v1800 = vsub.s32 1, %v1799
    %v1801 = vrot.slane %v1792, %v1800
    %v1802 = vlaneseq
    %v1803 = vshrl.u32 %v1802, 7
    %v1804 = vsub.s32 2, %v1803
    %v1805 = vrot.slane %v1792, %v1804
    %v1806 = vlaneseq
    %v1807 = vshrl.u32 %v1806, 7
    %v1808 = vsub.s32 3, %v1807
    %v1809 = vrot.slane %v1792, %v1808
    %v1814 = vadd.f32 %v1776, %v1797
    %v1815 = vadd.f32 %v1777, %v1801
    %v1816 = vadd.f32 %v1778, %v1805
    %v1817 = vadd.f32 %v1779, %v1809
    %v1818 = vadd.f32 %v1780, %v1797
    %v1819 = vadd.f32 %v1781, %v1801
    %v1820 = vadd.f32 %v1782, %v1805
    %v1821 = vadd.f32 %v1783, %v1809
    %v1822 = vadd.f32 %v1784, %v1797
    %v1823 = vadd.f32 %v1785, %v1801
    %v1824 = vadd.f32 %v1786, %v1805
    %v1825 = vadd.f32 %v1787, %v1809
    %v1826 = vadd.f32 %v1788, %v1797
    %v1827 = vadd.f32 %v1789, %v1801
    %v1828 = vadd.f32 %v1790, %v1805
    %v1829 = vadd.f32 %v1791, %v1809
    %v1830 = vmax.f32 %v1814, 0.0
    %v1831 = vmax.f32 %v1815, 0.0
    %v1832 = vmax.f32 %v1816, 0.0
    %v1833 = vmax.f32 %v1817, 0.0
    %v1834 = vmax.f32 %v1818, 0.0
    %v1835 = vmax.f32 %v1819, 0.0
    %v1836 = vmax.f32 %v1820, 0.0
    %v1837 = vmax.f32 %v1821, 0.0
    %v1838 = vmax.f32 %v1822, 0.0
    %v1839 = vmax.f32 %v1823, 0.0
    %v1840 = vmax.f32 %v1824, 0.0
    %v1841 = vmax.f32 %v1825, 0.0
    %v1842 = vmax.f32 %v1826, 0.0
    %v1843 = vmax.f32 %v1827, 0.0
    %v1844 = vmax.f32 %v1828, 0.0
    %v1845 = vmax.f32 %v1829, 0.0
    %v1846 = vpack.c.bf16 %v1834, %v1830
    %v1847 = vpack.c.bf16 %v1835, %v1831
    %v1848 = vpack.c.bf16 %v1836, %v1832
    %v1849 = vpack.c.bf16 %v1837, %v1833
    %v1850 = vpack.c.bf16 %v1842, %v1838
    %v1851 = vpack.c.bf16 %v1843, %v1839
    %v1852 = vpack.c.bf16 %v1844, %v1840
    %v1853 = vpack.c.bf16 %v1845, %v1841
    %v1854 = vld [vmem:[#allocation6] sm:$0xff]
    %v1855 = vld [vmem:[#allocation6 + $0x8] sm:$0xff]
    %v1856 = vld [vmem:[#allocation6 + $0x10] sm:$0xff]
    %v1857 = vld [vmem:[#allocation6 + $0x18] sm:$0xff]
    %v1858 = vld [vmem:[#allocation6 + $0x20] sm:$0xff]
    %v1859 = vld [vmem:[#allocation6 + $0x28] sm:$0xff]
    %v1860 = vld [vmem:[#allocation6 + $0x30] sm:$0xff]
    %v1861 = vld [vmem:[#allocation6 + $0x38] sm:$0xff]
    %v1862 = vld [vmem:[#allocation6 + $0x40] sm:$0xff]
    %v1863 = vld [vmem:[#allocation6 + $0x48] sm:$0xff]
    %v1864 = vld [vmem:[#allocation6 + $0x50] sm:$0xff]
    %v1865 = vld [vmem:[#allocation6 + $0x58] sm:$0xff]
    %v1866 = vld [vmem:[#allocation6 + $0x60] sm:$0xff]
    %v1867 = vld [vmem:[#allocation6 + $0x68] sm:$0xff]
    %v1868 = vld [vmem:[#allocation6 + $0x70] sm:$0xff]
    %v1869 = vld [vmem:[#allocation6 + $0x78] sm:$0xff]
    %v1870 = vld [vmem:[#allocation6 + $0x80] sm:$0xff]
    %v1871 = vld [vmem:[#allocation6 + $0x88] sm:$0xff]
    %v1872 = vld [vmem:[#allocation6 + $0x90] sm:$0xff]
    %v1873 = vld [vmem:[#allocation6 + $0x98] sm:$0xff]
    %v1874 = vld [vmem:[#allocation6 + $0xa0] sm:$0xff]
    %v1875 = vld [vmem:[#allocation6 + $0xa8] sm:$0xff]
    %v1876 = vld [vmem:[#allocation6 + $0xb0] sm:$0xff]
    %v1877 = vld [vmem:[#allocation6 + $0xb8] sm:$0xff]
    %v1878 = vld [vmem:[#allocation6 + $0xc0] sm:$0xff]
    %v1879 = vld [vmem:[#allocation6 + $0xc8] sm:$0xff]
    %v1880 = vld [vmem:[#allocation6 + $0xd0] sm:$0xff]
    %v1881 = vld [vmem:[#allocation6 + $0xd8] sm:$0xff]
    %v1882 = vld [vmem:[#allocation6 + $0xe0] sm:$0xff]
    %v1883 = vld [vmem:[#allocation6 + $0xe8] sm:$0xff]
    %v1884 = vld [vmem:[#allocation6 + $0xf0] sm:$0xff]
    %v1885 = vld [vmem:[#allocation6 + $0xf8] sm:$0xff]
    %v1886 = vld [vmem:[#allocation6 + $0x100] sm:$0xff]
    %v1887 = vld [vmem:[#allocation6 + $0x108] sm:$0xff]
    %v1888 = vld [vmem:[#allocation6 + $0x110] sm:$0xff]
    %v1889 = vld [vmem:[#allocation6 + $0x118] sm:$0xff]
    %v1890 = vld [vmem:[#allocation6 + $0x120] sm:$0xff]
    %v1891 = vld [vmem:[#allocation6 + $0x128] sm:$0xff]
    %v1892 = vld [vmem:[#allocation6 + $0x130] sm:$0xff]
    %v1893 = vld [vmem:[#allocation6 + $0x138] sm:$0xff]
    %v1894 = vld [vmem:[#allocation6 + $0x140] sm:$0xff]
    %v1895 = vld [vmem:[#allocation6 + $0x148] sm:$0xff]
    %v1896 = vld [vmem:[#allocation6 + $0x150] sm:$0xff]
    %v1897 = vld [vmem:[#allocation6 + $0x158] sm:$0xff]
    %v1898 = vld [vmem:[#allocation6 + $0x160] sm:$0xff]
    %v1899 = vld [vmem:[#allocation6 + $0x168] sm:$0xff]
    %v1900 = vld [vmem:[#allocation6 + $0x170] sm:$0xff]
    %v1901 = vld [vmem:[#allocation6 + $0x178] sm:$0xff]
    %v1902 = vld [vmem:[#allocation6 + $0x180] sm:$0xff]
    %v1903 = vld [vmem:[#allocation6 + $0x188] sm:$0xff]
    %v1904 = vld [vmem:[#allocation6 + $0x190] sm:$0xff]
    %v1905 = vld [vmem:[#allocation6 + $0x198] sm:$0xff]
    %v1906 = vld [vmem:[#allocation6 + $0x1a0] sm:$0xff]
    %v1907 = vld [vmem:[#allocation6 + $0x1a8] sm:$0xff]
    %v1908 = vld [vmem:[#allocation6 + $0x1b0] sm:$0xff]
    %v1909 = vld [vmem:[#allocation6 + $0x1b8] sm:$0xff]
    %v1910 = vld [vmem:[#allocation6 + $0x1c0] sm:$0xff]
    %v1911 = vld [vmem:[#allocation6 + $0x1c8] sm:$0xff]
    %v1912 = vld [vmem:[#allocation6 + $0x1d0] sm:$0xff]
    %v1913 = vld [vmem:[#allocation6 + $0x1d8] sm:$0xff]
    %v1914 = vld [vmem:[#allocation6 + $0x1e0] sm:$0xff]
    %v1915 = vld [vmem:[#allocation6 + $0x1e8] sm:$0xff]
    %v1916 = vld [vmem:[#allocation6 + $0x1f0] sm:$0xff]
    %v1917 = vld [vmem:[#allocation6 + $0x1f8] sm:$0xff]
    %v1982 = vunpack.c.l.b16 %v1854
    %v1983 = vunpack.c.h.b16 %v1854
    %v1984 = vunpack.c.l.b16 %v1855
    %v1985 = vunpack.c.h.b16 %v1855
    %v1986 = vunpack.c.l.b16 %v1856
    %v1987 = vunpack.c.h.b16 %v1856
    %v1988 = vunpack.c.l.b16 %v1857
    %v1989 = vunpack.c.h.b16 %v1857
    %v1990 = vunpack.c.l.b16 %v1858
    %v1991 = vunpack.c.h.b16 %v1858
    %v1992 = vunpack.c.l.b16 %v1859
    %v1993 = vunpack.c.h.b16 %v1859
    %v1994 = vunpack.c.l.b16 %v1860
    %v1995 = vunpack.c.h.b16 %v1860
    %v1996 = vunpack.c.l.b16 %v1861
    %v1997 = vunpack.c.h.b16 %v1861
    %v1998 = vunpack.c.l.b16 %v1862
    %v1999 = vunpack.c.h.b16 %v1862
    %v2000 = vunpack.c.l.b16 %v1863
    %v2001 = vunpack.c.h.b16 %v1863
    %v2002 = vunpack.c.l.b16 %v1864
    %v2003 = vunpack.c.h.b16 %v1864
    %v2004 = vunpack.c.l.b16 %v1865
    %v2005 = vunpack.c.h.b16 %v1865
    %v2006 = vunpack.c.l.b16 %v1866
    %v2007 = vunpack.c.h.b16 %v1866
    %v2008 = vunpack.c.l.b16 %v1867
    %v2009 = vunpack.c.h.b16 %v1867
    %v2010 = vunpack.c.l.b16 %v1868
    %v2011 = vunpack.c.h.b16 %v1868
    %v2012 = vunpack.c.l.b16 %v1869
    %v2013 = vunpack.c.h.b16 %v1869
    %v2014 = vunpack.c.l.b16 %v1870
    %v2015 = vunpack.c.h.b16 %v1870
    %v2016 = vunpack.c.l.b16 %v1871
    %v2017 = vunpack.c.h.b16 %v1871
    %v2018 = vunpack.c.l.b16 %v1872
    %v2019 = vunpack.c.h.b16 %v1872
    %v2020 = vunpack.c.l.b16 %v1873
    %v2021 = vunpack.c.h.b16 %v1873
    %v2022 = vunpack.c.l.b16 %v1874
    %v2023 = vunpack.c.h.b16 %v1874
    %v2024 = vunpack.c.l.b16 %v1875
    %v2025 = vunpack.c.h.b16 %v1875
    %v2026 = vunpack.c.l.b16 %v1876
    %v2027 = vunpack.c.h.b16 %v1876
    %v2028 = vunpack.c.l.b16 %v1877
    %v2029 = vunpack.c.h.b16 %v1877
    %v2030 = vunpack.c.l.b16 %v1878
    %v2031 = vunpack.c.h.b16 %v1878
    %v2032 = vunpack.c.l.b16 %v1879
    %v2033 = vunpack.c.h.b16 %v1879
    %v2034 = vunpack.c.l.b16 %v1880
    %v2035 = vunpack.c.h.b16 %v1880
    %v2036 = vunpack.c.l.b16 %v1881
    %v2037 = vunpack.c.h.b16 %v1881
    %v2038 = vunpack.c.l.b16 %v1882
    %v2039 = vunpack.c.h.b16 %v1882
    %v2040 = vunpack.c.l.b16 %v1883
    %v2041 = vunpack.c.h.b16 %v1883
    %v2042 = vunpack.c.l.b16 %v1884
    %v2043 = vunpack.c.h.b16 %v1884
    %v2044 = vunpack.c.l.b16 %v1885
    %v2045 = vunpack.c.h.b16 %v1885
    %v2046 = vunpack.c.l.b16 %v1886
    %v2047 = vunpack.c.h.b16 %v1886
    %v2048 = vunpack.c.l.b16 %v1887
    %v2049 = vunpack.c.h.b16 %v1887
    %v2050 = vunpack.c.l.b16 %v1888
    %v2051 = vunpack.c.h.b16 %v1888
    %v2052 = vunpack.c.l.b16 %v1889
    %v2053 = vunpack.c.h.b16 %v1889
    %v2054 = vunpack.c.l.b16 %v1890
    %v2055 = vunpack.c.h.b16 %v1890
    %v2056 = vunpack.c.l.b16 %v1891
    %v2057 = vunpack.c.h.b16 %v1891
    %v2058 = vunpack.c.l.b16 %v1892
    %v2059 = vunpack.c.h.b16 %v1892
    %v2060 = vunpack.c.l.b16 %v1893
    %v2061 = vunpack.c.h.b16 %v1893
    %v2062 = vunpack.c.l.b16 %v1894
    %v2063 = vunpack.c.h.b16 %v1894
    %v2064 = vunpack.c.l.b16 %v1895
    %v2065 = vunpack.c.h.b16 %v1895
    %v2066 = vunpack.c.l.b16 %v1896
    %v2067 = vunpack.c.h.b16 %v1896
    %v2068 = vunpack.c.l.b16 %v1897
    %v2069 = vunpack.c.h.b16 %v1897
    %v2070 = vunpack.c.l.b16 %v1898
    %v2071 = vunpack.c.h.b16 %v1898
    %v2072 = vunpack.c.l.b16 %v1899
    %v2073 = vunpack.c.h.b16 %v1899
    %v2074 = vunpack.c.l.b16 %v1900
    %v2075 = vunpack.c.h.b16 %v1900
    %v2076 = vunpack.c.l.b16 %v1901
    %v2077 = vunpack.c.h.b16 %v1901
    %v2078 = vunpack.c.l.b16 %v1902
    %v2079 = vunpack.c.h.b16 %v1902
    %v2080 = vunpack.c.l.b16 %v1903
    %v2081 = vunpack.c.h.b16 %v1903
    %v2082 = vunpack.c.l.b16 %v1904
    %v2083 = vunpack.c.h.b16 %v1904
    %v2084 = vunpack.c.l.b16 %v1905
    %v2085 = vunpack.c.h.b16 %v1905
    %v2086 = vunpack.c.l.b16 %v1906
    %v2087 = vunpack.c.h.b16 %v1906
    %v2088 = vunpack.c.l.b16 %v1907
    %v2089 = vunpack.c.h.b16 %v1907
    %v2090 = vunpack.c.l.b16 %v1908
    %v2091 = vunpack.c.h.b16 %v1908
    %v2092 = vunpack.c.l.b16 %v1909
    %v2093 = vunpack.c.h.b16 %v1909
    %v2094 = vunpack.c.l.b16 %v1910
    %v2095 = vunpack.c.h.b16 %v1910
    %v2096 = vunpack.c.l.b16 %v1911
    %v2097 = vunpack.c.h.b16 %v1911
    %v2098 = vunpack.c.l.b16 %v1912
    %v2099 = vunpack.c.h.b16 %v1912
    %v2100 = vunpack.c.l.b16 %v1913
    %v2101 = vunpack.c.h.b16 %v1913
    %v2102 = vunpack.c.l.b16 %v1914
    %v2103 = vunpack.c.h.b16 %v1914
    %v2104 = vunpack.c.l.b16 %v1915
    %v2105 = vunpack.c.h.b16 %v1915
    %v2106 = vunpack.c.l.b16 %v1916
    %v2107 = vunpack.c.h.b16 %v1916
    %v2108 = vunpack.c.l.b16 %v1917
    %v2109 = vunpack.c.h.b16 %v1917
    %v2110 = vpack.c.b16 %v1984, %v1982
    %v2111 = vpack.c.b16 %v1985, %v1983
    %v2112 = vpack.c.b16 %v1988, %v1986
    %v2113 = vpack.c.b16 %v1989, %v1987
    %v2114 = vpack.c.b16 %v1992, %v1990
    %v2115 = vpack.c.b16 %v1993, %v1991
    %v2116 = vpack.c.b16 %v1996, %v1994
    %v2117 = vpack.c.b16 %v1997, %v1995
    %v2118 = vpack.c.b16 %v2000, %v1998
    %v2119 = vpack.c.b16 %v2001, %v1999
    %v2120 = vpack.c.b16 %v2004, %v2002
    %v2121 = vpack.c.b16 %v2005, %v2003
    %v2122 = vpack.c.b16 %v2008, %v2006
    %v2123 = vpack.c.b16 %v2009, %v2007
    %v2124 = vpack.c.b16 %v2012, %v2010
    %v2125 = vpack.c.b16 %v2013, %v2011
    %v2126 = vpack.c.b16 %v2016, %v2014
    %v2127 = vpack.c.b16 %v2017, %v2015
    %v2128 = vpack.c.b16 %v2020, %v2018
    %v2129 = vpack.c.b16 %v2021, %v2019
    %v2130 = vpack.c.b16 %v2024, %v2022
    %v2131 = vpack.c.b16 %v2025, %v2023
    %v2132 = vpack.c.b16 %v2028, %v2026
    %v2133 = vpack.c.b16 %v2029, %v2027
    %v2134 = vpack.c.b16 %v2032, %v2030
    %v2135 = vpack.c.b16 %v2033, %v2031
    %v2136 = vpack.c.b16 %v2036, %v2034
    %v2137 = vpack.c.b16 %v2037, %v2035
    %v2138 = vpack.c.b16 %v2040, %v2038
    %v2139 = vpack.c.b16 %v2041, %v2039
    %v2140 = vpack.c.b16 %v2044, %v2042
    %v2141 = vpack.c.b16 %v2045, %v2043
    %v2142 = vpack.c.b16 %v2048, %v2046
    %v2143 = vpack.c.b16 %v2049, %v2047
    %v2144 = vpack.c.b16 %v2052, %v2050
    %v2145 = vpack.c.b16 %v2053, %v2051
    %v2146 = vpack.c.b16 %v2056, %v2054
    %v2147 = vpack.c.b16 %v2057, %v2055
    %v2148 = vpack.c.b16 %v2060, %v2058
    %v2149 = vpack.c.b16 %v2061, %v2059
    %v2150 = vpack.c.b16 %v2064, %v2062
    %v2151 = vpack.c.b16 %v2065, %v2063
    %v2152 = vpack.c.b16 %v2068, %v2066
    %v2153 = vpack.c.b16 %v2069, %v2067
    %v2154 = vpack.c.b16 %v2072, %v2070
    %v2155 = vpack.c.b16 %v2073, %v2071
    %v2156 = vpack.c.b16 %v2076, %v2074
    %v2157 = vpack.c.b16 %v2077, %v2075
    %v2158 = vpack.c.b16 %v2080, %v2078
    %v2159 = vpack.c.b16 %v2081, %v2079
    %v2160 = vpack.c.b16 %v2084, %v2082
    %v2161 = vpack.c.b16 %v2085, %v2083
    %v2162 = vpack.c.b16 %v2088, %v2086
    %v2163 = vpack.c.b16 %v2089, %v2087
    %v2164 = vpack.c.b16 %v2092, %v2090
    %v2165 = vpack.c.b16 %v2093, %v2091
    %v2166 = vpack.c.b16 %v2096, %v2094
    %v2167 = vpack.c.b16 %v2097, %v2095
    %v2168 = vpack.c.b16 %v2100, %v2098
    %v2169 = vpack.c.b16 %v2101, %v2099
    %v2170 = vpack.c.b16 %v2104, %v2102
    %v2171 = vpack.c.b16 %v2105, %v2103
    %v2172 = vpack.c.b16 %v2108, %v2106
    %v2173 = vpack.c.b16 %v2109, %v2107
    %2238 = vmatprep.subr.bf16.mxu0 %v2111
    %2239 = vmatpush1.bf16.msra.mxu0 %v2110
    %2240 = vmatprep.subr.bf16.mxu0 %v2113
    %2241 = vmatpush1.bf16.msra.mxu0 %v2112
    %2242 = vmatprep.subr.bf16.mxu0 %v2115
    %2243 = vmatpush1.bf16.msra.mxu0 %v2114
    %2244 = vmatprep.subr.bf16.mxu0 %v2117
    %2245 = vmatpush1.bf16.msra.mxu0 %v2116
    %2246 = vmatprep.subr.bf16.mxu0 %v2119
    %2247 = vmatpush1.bf16.msra.mxu0 %v2118
    %2248 = vmatprep.subr.bf16.mxu0 %v2121
    %2249 = vmatpush1.bf16.msra.mxu0 %v2120
    %2250 = vmatprep.subr.bf16.mxu0 %v2123
    %2251 = vmatpush1.bf16.msra.mxu0 %v2122
    %2252 = vmatprep.subr.bf16.mxu0 %v2125
    %2253 = vmatpush1.bf16.msra.mxu0 %v2124
    %2254 = vmatprep.subr.bf16.mxu0 %v2127
    %2255 = vmatpush1.bf16.msra.mxu0 %v2126
    %2256 = vmatprep.subr.bf16.mxu0 %v2129
    %2257 = vmatpush1.bf16.msra.mxu0 %v2128
    %2258 = vmatprep.subr.bf16.mxu0 %v2131
    %2259 = vmatpush1.bf16.msra.mxu0 %v2130
    %2260 = vmatprep.subr.bf16.mxu0 %v2133
    %2261 = vmatpush1.bf16.msra.mxu0 %v2132
    %2262 = vmatprep.subr.bf16.mxu0 %v2135
    %2263 = vmatpush1.bf16.msra.mxu0 %v2134
    %2264 = vmatprep.subr.bf16.mxu0 %v2137
    %2265 = vmatpush1.bf16.msra.mxu0 %v2136
    %2266 = vmatprep.subr.bf16.mxu0 %v2139
    %2267 = vmatpush1.bf16.msra.mxu0 %v2138
    %2268 = vmatprep.subr.bf16.mxu0 %v2141
    %2269 = vmatpush1.bf16.msra.mxu0 %v2140
    %2270 = vmatprep.mubr.bf16.mxu0 %v1847
    %2271 = vmatmul.mubr.bf16.gmra.mrb[0].mxu0 %v1846
    %v2272 = vpop.f32.mrb[0].mxu0
    %v2273 = vadd.f32 0.0, %v2272
    %v2274 = vpop.f32.mrb[0].mxu0
    %v2275 = vadd.f32 0.0, %v2274
    %v2276 = vpop.f32.mrb[0].mxu0
    %v2277 = vadd.f32 0.0, %v2276
    %v2278 = vpop.f32.mrb[0].mxu0
    %v2279 = vadd.f32 0.0, %v2278
    %2280 = vmatprep.mubr.bf16.mxu0 %v1851
    %2281 = vmatmul.mubr.bf16.gmra.mrb[0].mxu0 %v1850
    %v2282 = vpop.f32.mrb[0].mxu0
    %v2283 = vadd.f32 0.0, %v2282
    %v2284 = vpop.f32.mrb[0].mxu0
    %v2285 = vadd.f32 0.0, %v2284
    %v2286 = vpop.f32.mrb[0].mxu0
    %v2287 = vadd.f32 0.0, %v2286
    %v2288 = vpop.f32.mrb[0].mxu0
    %v2289 = vadd.f32 0.0, %v2288
    %2290 = vdwg.mxu0
    %2291 = vmatprep.subr.bf16.mxu0 %v2143
    %2292 = vmatpush1.bf16.msra.mxu0 %v2142
    %2293 = vmatprep.subr.bf16.mxu0 %v2145
    %2294 = vmatpush1.bf16.msra.mxu0 %v2144
    %2295 = vmatprep.subr.bf16.mxu0 %v2147
    %2296 = vmatpush1.bf16.msra.mxu0 %v2146
    %2297 = vmatprep.subr.bf16.mxu0 %v2149
    %2298 = vmatpush1.bf16.msra.mxu0 %v2148
    %2299 = vmatprep.subr.bf16.mxu0 %v2151
    %2300 = vmatpush1.bf16.msra.mxu0 %v2150
    %2301 = vmatprep.subr.bf16.mxu0 %v2153
    %2302 = vmatpush1.bf16.msra.mxu0 %v2152
    %2303 = vmatprep.subr.bf16.mxu0 %v2155
    %2304 = vmatpush1.bf16.msra.mxu0 %v2154
    %2305 = vmatprep.subr.bf16.mxu0 %v2157
    %2306 = vmatpush1.bf16.msra.mxu0 %v2156
    %2307 = vmatprep.subr.bf16.mxu0 %v2159
    %2308 = vmatpush1.bf16.msra.mxu0 %v2158
    %2309 = vmatprep.subr.bf16.mxu0 %v2161
    %2310 = vmatpush1.bf16.msra.mxu0 %v2160
    %2311 = vmatprep.subr.bf16.mxu0 %v2163
    %2312 = vmatpush1.bf16.msra.mxu0 %v2162
    %2313 = vmatprep.subr.bf16.mxu0 %v2165
    %2314 = vmatpush1.bf16.msra.mxu0 %v2164
    %2315 = vmatprep.subr.bf16.mxu0 %v2167
    %2316 = vmatpush1.bf16.msra.mxu0 %v2166
    %2317 = vmatprep.subr.bf16.mxu0 %v2169
    %2318 = vmatpush1.bf16.msra.mxu0 %v2168
    %2319 = vmatprep.subr.bf16.mxu0 %v2171
    %2320 = vmatpush1.bf16.msra.mxu0 %v2170
    %2321 = vmatprep.subr.bf16.mxu0 %v2173
    %2322 = vmatpush1.bf16.msra.mxu0 %v2172
    %2323 = vmatprep.mubr.bf16.mxu0 %v1849
    %2324 = vmatmul.mubr.bf16.gmra.mrb[0].mxu0 %v1848
    %v2325 = vpop.f32.mrb[0].mxu0
    %v2326 = vadd.f32 %v2273, %v2325
    %v2327 = vpop.f32.mrb[0].mxu0
    %v2328 = vadd.f32 %v2275, %v2327
    %v2329 = vpop.f32.mrb[0].mxu0
    %v2330 = vadd.f32 %v2277, %v2329
    %v2331 = vpop.f32.mrb[0].mxu0
    %v2332 = vadd.f32 %v2279, %v2331
    %2333 = vmatprep.mubr.bf16.mxu0 %v1853
    %2334 = vmatmul.mubr.bf16.gmra.mrb[0].mxu0 %v1852
    %v2335 = vpop.f32.mrb[0].mxu0
    %v2336 = vadd.f32 %v2283, %v2335
    %v2337 = vpop.f32.mrb[0].mxu0
    %v2338 = vadd.f32 %v2285, %v2337
    %v2339 = vpop.f32.mrb[0].mxu0
    %v2340 = vadd.f32 %v2287, %v2339
    %v2341 = vpop.f32.mrb[0].mxu0
    %v2342 = vadd.f32 %v2289, %v2341
    %2343 = vdwg.mxu0
    %v2344 = vld [vmem:[%s7] sm:$0xff]
    %v2345 = vld [vmem:[%s7 + $0x8] sm:$0xff]
    %s2346 = scalar_lea.vmem [#allocation6], 512
    %v2347 = vld [vmem:[%s2346] sm:$0xff]
    %v2348 = vld [vmem:[%s2346 + $0x8] sm:$0xff]
    %v2349 = vld [vmem:[%s2346 + $0x10] sm:$0xff]
    %v2350 = vld [vmem:[%s2346 + $0x18] sm:$0xff]
    %v2351 = vld [vmem:[%s2346 + $0x20] sm:$0xff]
    %v2352 = vld [vmem:[%s2346 + $0x28] sm:$0xff]
    %v2353 = vld [vmem:[%s2346 + $0x30] sm:$0xff]
    %v2354 = vld [vmem:[%s2346 + $0x38] sm:$0xff]
    %v2355 = vld [vmem:[%s2346 + $0x40] sm:$0xff]
    %v2356 = vld [vmem:[%s2346 + $0x48] sm:$0xff]
    %v2357 = vld [vmem:[%s2346 + $0x50] sm:$0xff]
    %v2358 = vld [vmem:[%s2346 + $0x58] sm:$0xff]
    %v2359 = vld [vmem:[%s2346 + $0x60] sm:$0xff]
    %v2360 = vld [vmem:[%s2346 + $0x68] sm:$0xff]
    %v2361 = vld [vmem:[%s2346 + $0x70] sm:$0xff]
    %v2362 = vld [vmem:[%s2346 + $0x78] sm:$0xff]
    %v2363 = vld [vmem:[%s2346 + $0x80] sm:$0xff]
    %v2364 = vld [vmem:[%s2346 + $0x88] sm:$0xff]
    %v2365 = vld [vmem:[%s2346 + $0x90] sm:$0xff]
    %v2366 = vld [vmem:[%s2346 + $0x98] sm:$0xff]
    %v2367 = vld [vmem:[%s2346 + $0xa0] sm:$0xff]
    %v2368 = vld [vmem:[%s2346 + $0xa8] sm:$0xff]
    %v2369 = vld [vmem:[%s2346 + $0xb0] sm:$0xff]
    %v2370 = vld [vmem:[%s2346 + $0xb8] sm:$0xff]
    %v2371 = vld [vmem:[%s2346 + $0xc0] sm:$0xff]
    %v2372 = vld [vmem:[%s2346 + $0xc8] sm:$0xff]
    %v2373 = vld [vmem:[%s2346 + $0xd0] sm:$0xff]
    %v2374 = vld [vmem:[%s2346 + $0xd8] sm:$0xff]
    %v2375 = vld [vmem:[%s2346 + $0xe0] sm:$0xff]
    %v2376 = vld [vmem:[%s2346 + $0xe8] sm:$0xff]
    %v2377 = vld [vmem:[%s2346 + $0xf0] sm:$0xff]
    %v2378 = vld [vmem:[%s2346 + $0xf8] sm:$0xff]
    %v2379 = vld [vmem:[%s2346 + $0x100] sm:$0xff]
    %v2380 = vld [vmem:[%s2346 + $0x108] sm:$0xff]
    %v2381 = vld [vmem:[%s2346 + $0x110] sm:$0xff]
    %v2382 = vld [vmem:[%s2346 + $0x118] sm:$0xff]
    %v2383 = vld [vmem:[%s2346 + $0x120] sm:$0xff]
    %v2384 = vld [vmem:[%s2346 + $0x128] sm:$0xff]
    %v2385 = vld [vmem:[%s2346 + $0x130] sm:$0xff]
    %v2386 = vld [vmem:[%s2346 + $0x138] sm:$0xff]
    %v2387 = vld [vmem:[%s2346 + $0x140] sm:$0xff]
    %v2388 = vld [vmem:[%s2346 + $0x148] sm:$0xff]
    %v2389 = vld [vmem:[%s2346 + $0x150] sm:$0xff]
    %v2390 = vld [vmem:[%s2346 + $0x158] sm:$0xff]
    %v2391 = vld [vmem:[%s2346 + $0x160] sm:$0xff]
    %v2392 = vld [vmem:[%s2346 + $0x168] sm:$0xff]
    %v2393 = vld [vmem:[%s2346 + $0x170] sm:$0xff]
    %v2394 = vld [vmem:[%s2346 + $0x178] sm:$0xff]
    %v2395 = vld [vmem:[%s2346 + $0x180] sm:$0xff]
    %v2396 = vld [vmem:[%s2346 + $0x188] sm:$0xff]
    %v2397 = vld [vmem:[%s2346 + $0x190] sm:$0xff]
    %v2398 = vld [vmem:[%s2346 + $0x198] sm:$0xff]
    %v2399 = vld [vmem:[%s2346 + $0x1a0] sm:$0xff]
    %v2400 = vld [vmem:[%s2346 + $0x1a8] sm:$0xff]
    %v2401 = vld [vmem:[%s2346 + $0x1b0] sm:$0xff]
    %v2402 = vld [vmem:[%s2346 + $0x1b8] sm:$0xff]
    %v2403 = vld [vmem:[%s2346 + $0x1c0] sm:$0xff]
    %v2404 = vld [vmem:[%s2346 + $0x1c8] sm:$0xff]
    %v2405 = vld [vmem:[%s2346 + $0x1d0] sm:$0xff]
    %v2406 = vld [vmem:[%s2346 + $0x1d8] sm:$0xff]
    %v2407 = vld [vmem:[%s2346 + $0x1e0] sm:$0xff]
    %v2408 = vld [vmem:[%s2346 + $0x1e8] sm:$0xff]
    %v2409 = vld [vmem:[%s2346 + $0x1f0] sm:$0xff]
    %v2410 = vld [vmem:[%s2346 + $0x1f8] sm:$0xff]
    %v2475 = vunpack.c.l.b16 %v2347
    %v2476 = vunpack.c.h.b16 %v2347
    %v2477 = vunpack.c.l.b16 %v2348
    %v2478 = vunpack.c.h.b16 %v2348
    %v2479 = vunpack.c.l.b16 %v2349
    %v2480 = vunpack.c.h.b16 %v2349
    %v2481 = vunpack.c.l.b16 %v2350
    %v2482 = vunpack.c.h.b16 %v2350
    %v2483 = vunpack.c.l.b16 %v2351
    %v2484 = vunpack.c.h.b16 %v2351
    %v2485 = vunpack.c.l.b16 %v2352
    %v2486 = vunpack.c.h.b16 %v2352
    %v2487 = vunpack.c.l.b16 %v2353
    %v2488 = vunpack.c.h.b16 %v2353
    %v2489 = vunpack.c.l.b16 %v2354
    %v2490 = vunpack.c.h.b16 %v2354
    %v2491 = vunpack.c.l.b16 %v2355
    %v2492 = vunpack.c.h.b16 %v2355
    %v2493 = vunpack.c.l.b16 %v2356
    %v2494 = vunpack.c.h.b16 %v2356
    %v2495 = vunpack.c.l.b16 %v2357
    %v2496 = vunpack.c.h.b16 %v2357
    %v2497 = vunpack.c.l.b16 %v2358
    %v2498 = vunpack.c.h.b16 %v2358
    %v2499 = vunpack.c.l.b16 %v2359
    %v2500 = vunpack.c.h.b16 %v2359
    %v2501 = vunpack.c.l.b16 %v2360
    %v2502 = vunpack.c.h.b16 %v2360
    %v2503 = vunpack.c.l.b16 %v2361
    %v2504 = vunpack.c.h.b16 %v2361
    %v2505 = vunpack.c.l.b16 %v2362
    %v2506 = vunpack.c.h.b16 %v2362
    %v2507 = vunpack.c.l.b16 %v2363
    %v2508 = vunpack.c.h.b16 %v2363
    %v2509 = vunpack.c.l.b16 %v2364
    %v2510 = vunpack.c.h.b16 %v2364
    %v2511 = vunpack.c.l.b16 %v2365
    %v2512 = vunpack.c.h.b16 %v2365
    %v2513 = vunpack.c.l.b16 %v2366
    %v2514 = vunpack.c.h.b16 %v2366
    %v2515 = vunpack.c.l.b16 %v2367
    %v2516 = vunpack.c.h.b16 %v2367
    %v2517 = vunpack.c.l.b16 %v2368
    %v2518 = vunpack.c.h.b16 %v2368
    %v2519 = vunpack.c.l.b16 %v2369
    %v2520 = vunpack.c.h.b16 %v2369
    %v2521 = vunpack.c.l.b16 %v2370
    %v2522 = vunpack.c.h.b16 %v2370
    %v2523 = vunpack.c.l.b16 %v2371
    %v2524 = vunpack.c.h.b16 %v2371
    %v2525 = vunpack.c.l.b16 %v2372
    %v2526 = vunpack.c.h.b16 %v2372
    %v2527 = vunpack.c.l.b16 %v2373
    %v2528 = vunpack.c.h.b16 %v2373
    %v2529 = vunpack.c.l.b16 %v2374
    %v2530 = vunpack.c.h.b16 %v2374
    %v2531 = vunpack.c.l.b16 %v2375
    %v2532 = vunpack.c.h.b16 %v2375
    %v2533 = vunpack.c.l.b16 %v2376
    %v2534 = vunpack.c.h.b16 %v2376
    %v2535 = vunpack.c.l.b16 %v2377
    %v2536 = vunpack.c.h.b16 %v2377
    %v2537 = vunpack.c.l.b16 %v2378
    %v2538 = vunpack.c.h.b16 %v2378
    %v2539 = vunpack.c.l.b16 %v2379
    %v2540 = vunpack.c.h.b16 %v2379
    %v2541 = vunpack.c.l.b16 %v2380
    %v2542 = vunpack.c.h.b16 %v2380
    %v2543 = vunpack.c.l.b16 %v2381
    %v2544 = vunpack.c.h.b16 %v2381
    %v2545 = vunpack.c.l.b16 %v2382
    %v2546 = vunpack.c.h.b16 %v2382
    %v2547 = vunpack.c.l.b16 %v2383
    %v2548 = vunpack.c.h.b16 %v2383
    %v2549 = vunpack.c.l.b16 %v2384
    %v2550 = vunpack.c.h.b16 %v2384
    %v2551 = vunpack.c.l.b16 %v2385
    %v2552 = vunpack.c.h.b16 %v2385
    %v2553 = vunpack.c.l.b16 %v2386
    %v2554 = vunpack.c.h.b16 %v2386
    %v2555 = vunpack.c.l.b16 %v2387
    %v2556 = vunpack.c.h.b16 %v2387
    %v2557 = vunpack.c.l.b16 %v2388
    %v2558 = vunpack.c.h.b16 %v2388
    %v2559 = vunpack.c.l.b16 %v2389
    %v2560 = vunpack.c.h.b16 %v2389
    %v2561 = vunpack.c.l.b16 %v2390
    %v2562 = vunpack.c.h.b16 %v2390
    %v2563 = vunpack.c.l.b16 %v2391
    %v2564 = vunpack.c.h.b16 %v2391
    %v2565 = vunpack.c.l.b16 %v2392
    %v2566 = vunpack.c.h.b16 %v2392
    %v2567 = vunpack.c.l.b16 %v2393
    %v2568 = vunpack.c.h.b16 %v2393
    %v2569 = vunpack.c.l.b16 %v2394
    %v2570 = vunpack.c.h.b16 %v2394
    %v2571 = vunpack.c.l.b16 %v2395
    %v2572 = vunpack.c.h.b16 %v2395
    %v2573 = vunpack.c.l.b16 %v2396
    %v2574 = vunpack.c.h.b16 %v2396
    %v2575 = vunpack.c.l.b16 %v2397
    %v2576 = vunpack.c.h.b16 %v2397
    %v2577 = vunpack.c.l.b16 %v2398
    %v2578 = vunpack.c.h.b16 %v2398
    %v2579 = vunpack.c.l.b16 %v2399
    %v2580 = vunpack.c.h.b16 %v2399
    %v2581 = vunpack.c.l.b16 %v2400
    %v2582 = vunpack.c.h.b16 %v2400
    %v2583 = vunpack.c.l.b16 %v2401
    %v2584 = vunpack.c.h.b16 %v2401
    %v2585 = vunpack.c.l.b16 %v2402
    %v2586 = vunpack.c.h.b16 %v2402
    %v2587 = vunpack.c.l.b16 %v2403
    %v2588 = vunpack.c.h.b16 %v2403
    %v2589 = vunpack.c.l.b16 %v2404
    %v2590 = vunpack.c.h.b16 %v2404
    %v2591 = vunpack.c.l.b16 %v2405
    %v2592 = vunpack.c.h.b16 %v2405
    %v2593 = vunpack.c.l.b16 %v2406
    %v2594 = vunpack.c.h.b16 %v2406
    %v2595 = vunpack.c.l.b16 %v2407
    %v2596 = vunpack.c.h.b16 %v2407
    %v2597 = vunpack.c.l.b16 %v2408
    %v2598 = vunpack.c.h.b16 %v2408
    %v2599 = vunpack.c.l.b16 %v2409
    %v2600 = vunpack.c.h.b16 %v2409
    %v2601 = vunpack.c.l.b16 %v2410
    %v2602 = vunpack.c.h.b16 %v2410
    %v2603 = vpack.c.b16 %v2477, %v2475
    %v2604 = vpack.c.b16 %v2478, %v2476
    %v2605 = vpack.c.b16 %v2481, %v2479
    %v2606 = vpack.c.b16 %v2482, %v2480
    %v2607 = vpack.c.b16 %v2485, %v2483
    %v2608 = vpack.c.b16 %v2486, %v2484
    %v2609 = vpack.c.b16 %v2489, %v2487
    %v2610 = vpack.c.b16 %v2490, %v2488
    %v2611 = vpack.c.b16 %v2493, %v2491
    %v2612 = vpack.c.b16 %v2494, %v2492
    %v2613 = vpack.c.b16 %v2497, %v2495
    %v2614 = vpack.c.b16 %v2498, %v2496
    %v2615 = vpack.c.b16 %v2501, %v2499
    %v2616 = vpack.c.b16 %v2502, %v2500
    %v2617 = vpack.c.b16 %v2505, %v2503
    %v2618 = vpack.c.b16 %v2506, %v2504
    %v2619 = vpack.c.b16 %v2509, %v2507
    %v2620 = vpack.c.b16 %v2510, %v2508
    %v2621 = vpack.c.b16 %v2513, %v2511
    %v2622 = vpack.c.b16 %v2514, %v2512
    %v2623 = vpack.c.b16 %v2517, %v2515
    %v2624 = vpack.c.b16 %v2518, %v2516
    %v2625 = vpack.c.b16 %v2521, %v2519
    %v2626 = vpack.c.b16 %v2522, %v2520
    %v2627 = vpack.c.b16 %v2525, %v2523
    %v2628 = vpack.c.b16 %v2526, %v2524
    %v2629 = vpack.c.b16 %v2529, %v2527
    %v2630 = vpack.c.b16 %v2530, %v2528
    %v2631 = vpack.c.b16 %v2533, %v2531
    %v2632 = vpack.c.b16 %v2534, %v2532
    %v2633 = vpack.c.b16 %v2537, %v2535
    %v2634 = vpack.c.b16 %v2538, %v2536
    %v2635 = vpack.c.b16 %v2541, %v2539
    %v2636 = vpack.c.b16 %v2542, %v2540
    %v2637 = vpack.c.b16 %v2545, %v2543
    %v2638 = vpack.c.b16 %v2546, %v2544
    %v2639 = vpack.c.b16 %v2549, %v2547
    %v2640 = vpack.c.b16 %v2550, %v2548
    %v2641 = vpack.c.b16 %v2553, %v2551
    %v2642 = vpack.c.b16 %v2554, %v2552
    %v2643 = vpack.c.b16 %v2557, %v2555
    %v2644 = vpack.c.b16 %v2558, %v2556
    %v2645 = vpack.c.b16 %v2561, %v2559
    %v2646 = vpack.c.b16 %v2562, %v2560
    %v2647 = vpack.c.b16 %v2565, %v2563
    %v2648 = vpack.c.b16 %v2566, %v2564
    %v2649 = vpack.c.b16 %v2569, %v2567
    %v2650 = vpack.c.b16 %v2570, %v2568
    %v2651 = vpack.c.b16 %v2573, %v2571
    %v2652 = vpack.c.b16 %v2574, %v2572
    %v2653 = vpack.c.b16 %v2577, %v2575
    %v2654 = vpack.c.b16 %v2578, %v2576
    %v2655 = vpack.c.b16 %v2581, %v2579
    %v2656 = vpack.c.b16 %v2582, %v2580
    %v2657 = vpack.c.b16 %v2585, %v2583
    %v2658 = vpack.c.b16 %v2586, %v2584
    %v2659 = vpack.c.b16 %v2589, %v2587
    %v2660 = vpack.c.b16 %v2590, %v2588
    %v2661 = vpack.c.b16 %v2593, %v2591
    %v2662 = vpack.c.b16 %v2594, %v2592
    %v2663 = vpack.c.b16 %v2597, %v2595
    %v2664 = vpack.c.b16 %v2598, %v2596
    %v2665 = vpack.c.b16 %v2601, %v2599
    %v2666 = vpack.c.b16 %v2602, %v2600
    %2731 = vmatprep.subr.bf16.mxu0 %v2604
    %2732 = vmatpush1.bf16.msra.mxu0 %v2603
    %2733 = vmatprep.subr.bf16.mxu0 %v2606
    %2734 = vmatpush1.bf16.msra.mxu0 %v2605
    %2735 = vmatprep.subr.bf16.mxu0 %v2608
    %2736 = vmatpush1.bf16.msra.mxu0 %v2607
    %2737 = vmatprep.subr.bf16.mxu0 %v2610
    %2738 = vmatpush1.bf16.msra.mxu0 %v2609
    %2739 = vmatprep.subr.bf16.mxu0 %v2612
    %2740 = vmatpush1.bf16.msra.mxu0 %v2611
    %2741 = vmatprep.subr.bf16.mxu0 %v2614
    %2742 = vmatpush1.bf16.msra.mxu0 %v2613
    %2743 = vmatprep.subr.bf16.mxu0 %v2616
    %2744 = vmatpush1.bf16.msra.mxu0 %v2615
    %2745 = vmatprep.subr.bf16.mxu0 %v2618
    %2746 = vmatpush1.bf16.msra.mxu0 %v2617
    %2747 = vmatprep.subr.bf16.mxu0 %v2620
    %2748 = vmatpush1.bf16.msra.mxu0 %v2619
    %2749 = vmatprep.subr.bf16.mxu0 %v2622
    %2750 = vmatpush1.bf16.msra.mxu0 %v2621
    %2751 = vmatprep.subr.bf16.mxu0 %v2624
    %2752 = vmatpush1.bf16.msra.mxu0 %v2623
    %2753 = vmatprep.subr.bf16.mxu0 %v2626
    %2754 = vmatpush1.bf16.msra.mxu0 %v2625
    %2755 = vmatprep.subr.bf16.mxu0 %v2628
    %2756 = vmatpush1.bf16.msra.mxu0 %v2627
    %2757 = vmatprep.subr.bf16.mxu0 %v2630
    %2758 = vmatpush1.bf16.msra.mxu0 %v2629
    %2759 = vmatprep.subr.bf16.mxu0 %v2632
    %2760 = vmatpush1.bf16.msra.mxu0 %v2631
    %2761 = vmatprep.subr.bf16.mxu0 %v2634
    %2762 = vmatpush1.bf16.msra.mxu0 %v2633
    %2763 = vmatprep.mubr.bf16.mxu0 %v1847
    %2764 = vmatmul.mubr.bf16.gmra.mrb[0].mxu0 %v1846
    %v2765 = vpop.f32.mrb[0].mxu0
    %v2766 = vadd.f32 0.0, %v2765
    %v2767 = vpop.f32.mrb[0].mxu0
    %v2768 = vadd.f32 0.0, %v2767
    %v2769 = vpop.f32.mrb[0].mxu0
    %v2770 = vadd.f32 0.0, %v2769
    %v2771 = vpop.f32.mrb[0].mxu0
    %v2772 = vadd.f32 0.0, %v2771
    %2773 = vmatprep.mubr.bf16.mxu0 %v1851
    %2774 = vmatmul.mubr.bf16.gmra.mrb[0].mxu0 %v1850
    %v2775 = vpop.f32.mrb[0].mxu0
    %v2776 = vadd.f32 0.0, %v2775
    %v2777 = vpop.f32.mrb[0].mxu0
    %v2778 = vadd.f32 0.0, %v2777
    %v2779 = vpop.f32.mrb[0].mxu0
    %v2780 = vadd.f32 0.0, %v2779
    %v2781 = vpop.f32.mrb[0].mxu0
    %v2782 = vadd.f32 0.0, %v2781
    %2783 = vdwg.mxu0
    %2784 = vmatprep.subr.bf16.mxu0 %v2636
    %2785 = vmatpush1.bf16.msra.mxu0 %v2635
    %2786 = vmatprep.subr.bf16.mxu0 %v2638
    %2787 = vmatpush1.bf16.msra.mxu0 %v2637
    %2788 = vmatprep.subr.bf16.mxu0 %v2640
    %2789 = vmatpush1.bf16.msra.mxu0 %v2639
    %2790 = vmatprep.subr.bf16.mxu0 %v2642
    %2791 = vmatpush1.bf16.msra.mxu0 %v2641
    %2792 = vmatprep.subr.bf16.mxu0 %v2644
    %2793 = vmatpush1.bf16.msra.mxu0 %v2643
    %2794 = vmatprep.subr.bf16.mxu0 %v2646
    %2795 = vmatpush1.bf16.msra.mxu0 %v2645
    %2796 = vmatprep.subr.bf16.mxu0 %v2648
    %2797 = vmatpush1.bf16.msra.mxu0 %v2647
    %2798 = vmatprep.subr.bf16.mxu0 %v2650
    %2799 = vmatpush1.bf16.msra.mxu0 %v2649
    %2800 = vmatprep.subr.bf16.mxu0 %v2652
    %2801 = vmatpush1.bf16.msra.mxu0 %v2651
    %2802 = vmatprep.subr.bf16.mxu0 %v2654
    %2803 = vmatpush1.bf16.msra.mxu0 %v2653
    %2804 = vmatprep.subr.bf16.mxu0 %v2656
    %2805 = vmatpush1.bf16.msra.mxu0 %v2655
    %2806 = vmatprep.subr.bf16.mxu0 %v2658
    %2807 = vmatpush1.bf16.msra.mxu0 %v2657
    %2808 = vmatprep.subr.bf16.mxu0 %v2660
    %2809 = vmatpush1.bf16.msra.mxu0 %v2659
    %2810 = vmatprep.subr.bf16.mxu0 %v2662
    %2811 = vmatpush1.bf16.msra.mxu0 %v2661
    %2812 = vmatprep.subr.bf16.mxu0 %v2664
    %2813 = vmatpush1.bf16.msra.mxu0 %v2663
    %2814 = vmatprep.subr.bf16.mxu0 %v2666
    %2815 = vmatpush1.bf16.msra.mxu0 %v2665
    %2816 = vmatprep.mubr.bf16.mxu0 %v1849
    %2817 = vmatmul.mubr.bf16.gmra.mrb[0].mxu0 %v1848
    %v2818 = vpop.f32.mrb[0].mxu0
    %v2819 = vadd.f32 %v2766, %v2818
    %v2820 = vpop.f32.mrb[0].mxu0
    %v2821 = vadd.f32 %v2768, %v2820
    %v2822 = vpop.f32.mrb[0].mxu0
    %v2823 = vadd.f32 %v2770, %v2822
    %v2824 = vpop.f32.mrb[0].mxu0
    %v2825 = vadd.f32 %v2772, %v2824
    %2826 = vmatprep.mubr.bf16.mxu0 %v1853
    %2827 = vmatmul.mubr.bf16.gmra.mrb[0].mxu0 %v1852
    %v2828 = vpop.f32.mrb[0].mxu0
    %v2829 = vadd.f32 %v2776, %v2828
    %v2830 = vpop.f32.mrb[0].mxu0
    %v2831 = vadd.f32 %v2778, %v2830
    %v2832 = vpop.f32.mrb[0].mxu0
    %v2833 = vadd.f32 %v2780, %v2832
    %v2834 = vpop.f32.mrb[0].mxu0
    %v2835 = vadd.f32 %v2782, %v2834
    %2836 = vdwg.mxu0
    %s2837 = scalar_lea.vmem %s7, 16
    %v2838 = vld [vmem:[%s2837] sm:$0xff]
    %v2839 = vld [vmem:[%s2837 + $0x8] sm:$0xff]
    %v2841 = vsel %vm236, %v2838, 0
    %v2844 = vsel %vm236, %v2839, 0
    %2846 = vmatprep.subr.mxu0 %v2821
    %2847 = vmatpush1.msra.mxu0 %v2819
    %2848 = vmatprep.subr.mxu0 %v2825
    %2849 = vmatpush1.msra.mxu0 %v2823
    %2850 = vmatprep.subr.mxu0 %v2831
    %2851 = vmatpush1.msra.mxu0 %v2829
    %2852 = vmatprep.subr.mxu0 %v2835
    %2853 = vmatpush1.msra.mxu0 %v2833
    %2854 = vmatprep.subr.mxu0 0.0
    %2855 = vmatpush1.msra.mxu0 0.0
    %2856 = vmatprep.subr.mxu0 0.0
    %2857 = vmatpush1.msra.mxu0 0.0
    %2858 = vmatprep.subr.mxu0 0.0
    %2859 = vmatpush1.msra.mxu0 0.0
    %2860 = vmatprep.subr.mxu0 0.0
    %2861 = vmatpush1.msra.mxu0 0.0
    %2862 = vmatprep.subr.mxu0 0.0
    %2863 = vmatpush1.msra.mxu0 0.0
    %2864 = vmatprep.subr.mxu0 0.0
    %2865 = vmatpush1.msra.mxu0 0.0
    %2866 = vmatprep.subr.mxu0 0.0
    %2867 = vmatpush1.msra.mxu0 0.0
    %2868 = vmatprep.subr.mxu0 0.0
    %2869 = vmatpush1.msra.mxu0 0.0
    %2870 = vmatprep.subr.mxu0 0.0
    %2871 = vmatpush1.msra.mxu0 0.0
    %2872 = vmatprep.subr.mxu0 0.0
    %2873 = vmatpush1.msra.mxu0 0.0
    %2874 = vmatprep.subr.mxu0 0.0
    %2875 = vmatpush1.msra.mxu0 0.0
    %2876 = vmatprep.subr.mxu0 0.0
    %2877 = vmatpush1.msra.mxu0 0.0
    %2878 = vmatprep.subr.mxu0 0.0
    %2879 = vmatpush1.msra.mxu0 0.0
    %2880 = vmatprep.subr.mxu0 0.0
    %2881 = vmatpush1.msra.mxu0 0.0
    %2882 = vmatprep.subr.mxu0 0.0
    %2883 = vmatpush1.msra.mxu0 0.0
    %2884 = vmatprep.subr.mxu0 0.0
    %2885 = vmatpush1.msra.mxu0 0.0
    %2886 = vmatprep.subr.mxu0 0.0
    %2887 = vmatpush1.msra.mxu0 0.0
    %2888 = vmatprep.subr.mxu0 0.0
    %2889 = vmatpush1.msra.mxu0 0.0
    %2890 = vmatprep.subr.mxu0 0.0
    %2891 = vmatpush1.msra.mxu0 0.0
    %2892 = vmatprep.subr.mxu0 0.0
    %2893 = vmatpush1.msra.mxu0 0.0
    %2894 = vmatprep.subr.mxu0 0.0
    %2895 = vmatpush1.msra.mxu0 0.0
    %2896 = vmatprep.subr.mxu0 0.0
    %2897 = vmatpush1.msra.mxu0 0.0
    %2898 = vmatprep.subr.mxu0 0.0
    %2899 = vmatpush1.msra.mxu0 0.0
    %2900 = vmatprep.subr.mxu0 0.0
    %2901 = vmatpush1.msra.mxu0 0.0
    %2902 = vmatprep.subr.mxu0 0.0
    %2903 = vmatpush1.msra.mxu0 0.0
    %2904 = vmatprep.subr.mxu0 0.0
    %2905 = vmatpush1.msra.mxu0 0.0
    %2906 = vmatprep.subr.mxu0 0.0
    %2907 = vmatpush1.msra.mxu0 0.0
    %2908 = vmatprep.subr.mxu0 0.0
    %2909 = vmatpush1.msra.mxu0 0.0
    %2910 = vmatprep.mubr.f32.mxu0 0.0
    %2911 = vmatmul.mubr.f32.gmra.mrb[0].mxu0 %v2841
    %v2912 = vpop.f32.mrb[0].mxu0
    %v2913 = vadd.f32 0.0, %v2912
    %v2914 = vpop.f32.mrb[0].mxu0
    %v2915 = vadd.f32 0.0, %v2914
    %2916 = vmatprep.mubr.f32.mxu0 0.0
    %2917 = vmatmul.mubr.f32.gmra.mrb[0].mxu0 %v2844
    %v2918 = vpop.f32.mrb[0].mxu0
    %v2919 = vadd.f32 0.0, %v2918
    %v2920 = vpop.f32.mrb[0].mxu0
    %v2921 = vadd.f32 0.0, %v2920
    %2922 = vdwg.mxu0
    %v2924 = vsel %vm236, %v2344, 0
    %v2927 = vsel %vm236, %v2345, 0
    %2929 = vmatprep.subr.mxu0 %v2328
    %2930 = vmatpush1.msra.mxu0 %v2326
    %2931 = vmatprep.subr.mxu0 %v2332
    %2932 = vmatpush1.msra.mxu0 %v2330
    %2933 = vmatprep.subr.mxu0 %v2338
    %2934 = vmatpush1.msra.mxu0 %v2336
    %2935 = vmatprep.subr.mxu0 %v2342
    %2936 = vmatpush1.msra.mxu0 %v2340
    %2937 = vmatprep.subr.mxu0 0.0
    %2938 = vmatpush1.msra.mxu0 0.0
    %2939 = vmatprep.subr.mxu0 0.0
    %2940 = vmatpush1.msra.mxu0 0.0
    %2941 = vmatprep.subr.mxu0 0.0
    %2942 = vmatpush1.msra.mxu0 0.0
    %2943 = vmatprep.subr.mxu0 0.0
    %2944 = vmatpush1.msra.mxu0 0.0
    %2945 = vmatprep.subr.mxu0 0.0
    %2946 = vmatpush1.msra.mxu0 0.0
    %2947 = vmatprep.subr.mxu0 0.0
    %2948 = vmatpush1.msra.mxu0 0.0
    %2949 = vmatprep.subr.mxu0 0.0
    %2950 = vmatpush1.msra.mxu0 0.0
    %2951 = vmatprep.subr.mxu0 0.0
    %2952 = vmatpush1.msra.mxu0 0.0
    %2953 = vmatprep.subr.mxu0 0.0
    %2954 = vmatpush1.msra.mxu0 0.0
    %2955 = vmatprep.subr.mxu0 0.0
    %2956 = vmatpush1.msra.mxu0 0.0
    %2957 = vmatprep.subr.mxu0 0.0
    %2958 = vmatpush1.msra.mxu0 0.0
    %2959 = vmatprep.subr.mxu0 0.0
    %2960 = vmatpush1.msra.mxu0 0.0
    %2961 = vmatprep.subr.mxu0 0.0
    %2962 = vmatpush1.msra.mxu0 0.0
    %2963 = vmatprep.subr.mxu0 0.0
    %2964 = vmatpush1.msra.mxu0 0.0
    %2965 = vmatprep.subr.mxu0 0.0
    %2966 = vmatpush1.msra.mxu0 0.0
    %2967 = vmatprep.subr.mxu0 0.0
    %2968 = vmatpush1.msra.mxu0 0.0
    %2969 = vmatprep.subr.mxu0 0.0
    %2970 = vmatpush1.msra.mxu0 0.0
    %2971 = vmatprep.subr.mxu0 0.0
    %2972 = vmatpush1.msra.mxu0 0.0
    %2973 = vmatprep.subr.mxu0 0.0
    %2974 = vmatpush1.msra.mxu0 0.0
    %2975 = vmatprep.subr.mxu0 0.0
    %2976 = vmatpush1.msra.mxu0 0.0
    %2977 = vmatprep.subr.mxu0 0.0
    %2978 = vmatpush1.msra.mxu0 0.0
    %2979 = vmatprep.subr.mxu0 0.0
    %2980 = vmatpush1.msra.mxu0 0.0
    %2981 = vmatprep.subr.mxu0 0.0
    %2982 = vmatpush1.msra.mxu0 0.0
    %2983 = vmatprep.subr.mxu0 0.0
    %2984 = vmatpush1.msra.mxu0 0.0
    %2985 = vmatprep.subr.mxu0 0.0
    %2986 = vmatpush1.msra.mxu0 0.0
    %2987 = vmatprep.subr.mxu0 0.0
    %2988 = vmatpush1.msra.mxu0 0.0
    %2989 = vmatprep.subr.mxu0 0.0
    %2990 = vmatpush1.msra.mxu0 0.0
    %2991 = vmatprep.subr.mxu0 0.0
    %2992 = vmatpush1.msra.mxu0 0.0
    %2993 = vmatprep.mubr.f32.mxu0 0.0
    %2994 = vmatmul.mubr.f32.gmra.mrb[0].mxu0 %v2924
    %v2995 = vpop.f32.mrb[0].mxu0
    %v2996 = vadd.f32 %v2913, %v2995
    %v2997 = vpop.f32.mrb[0].mxu0
    %v2998 = vadd.f32 %v2915, %v2997
    %2999 = vmatprep.mubr.f32.mxu0 0.0
    %3000 = vmatmul.mubr.f32.gmra.mrb[0].mxu0 %v2927
    %v3001 = vpop.f32.mrb[0].mxu0
    %v3002 = vadd.f32 %v2919, %v3001
    %v3003 = vpop.f32.mrb[0].mxu0
    %v3004 = vadd.f32 %v2921, %v3003
    %3005 = vdwg.mxu0
    %s3006 = scalar_lea.vmem [#allocation6], 1024
    %v3007 = vld [vmem:[%s3006] sm:$0xff]
    %v3008 = vld [vmem:[%s3006 + $0x8] sm:$0xff]
    %v3009 = vld [vmem:[%s3006 + $0x10] sm:$0xff]
    %v3010 = vld [vmem:[%s3006 + $0x18] sm:$0xff]
    %v3011 = vld [vmem:[%s3006 + $0x20] sm:$0xff]
    %v3012 = vld [vmem:[%s3006 + $0x28] sm:$0xff]
    %v3013 = vld [vmem:[%s3006 + $0x30] sm:$0xff]
    %v3014 = vld [vmem:[%s3006 + $0x38] sm:$0xff]
    %v3015 = vld [vmem:[%s3006 + $0x40] sm:$0xff]
    %v3016 = vld [vmem:[%s3006 + $0x48] sm:$0xff]
    %v3017 = vld [vmem:[%s3006 + $0x50] sm:$0xff]
    %v3018 = vld [vmem:[%s3006 + $0x58] sm:$0xff]
    %v3019 = vld [vmem:[%s3006 + $0x60] sm:$0xff]
    %v3020 = vld [vmem:[%s3006 + $0x68] sm:$0xff]
    %v3021 = vld [vmem:[%s3006 + $0x70] sm:$0xff]
    %v3022 = vld [vmem:[%s3006 + $0x78] sm:$0xff]
    %v3023 = vld [vmem:[%s3006 + $0x80] sm:$0xff]
    %v3024 = vld [vmem:[%s3006 + $0x88] sm:$0xff]
    %v3025 = vld [vmem:[%s3006 + $0x90] sm:$0xff]
    %v3026 = vld [vmem:[%s3006 + $0x98] sm:$0xff]
    %v3027 = vld [vmem:[%s3006 + $0xa0] sm:$0xff]
    %v3028 = vld [vmem:[%s3006 + $0xa8] sm:$0xff]
    %v3029 = vld [vmem:[%s3006 + $0xb0] sm:$0xff]
    %v3030 = vld [vmem:[%s3006 + $0xb8] sm:$0xff]
    %v3031 = vld [vmem:[%s3006 + $0xc0] sm:$0xff]
    %v3032 = vld [vmem:[%s3006 + $0xc8] sm:$0xff]
    %v3033 = vld [vmem:[%s3006 + $0xd0] sm:$0xff]
    %v3034 = vld [vmem:[%s3006 + $0xd8] sm:$0xff]
    %v3035 = vld [vmem:[%s3006 + $0xe0] sm:$0xff]
    %v3036 = vld [vmem:[%s3006 + $0xe8] sm:$0xff]
    %v3037 = vld [vmem:[%s3006 + $0xf0] sm:$0xff]
    %v3038 = vld [vmem:[%s3006 + $0xf8] sm:$0xff]
    %v3039 = vld [vmem:[%s3006 + $0x100] sm:$0xff]
    %v3040 = vld [vmem:[%s3006 + $0x108] sm:$0xff]
    %v3041 = vld [vmem:[%s3006 + $0x110] sm:$0xff]
    %v3042 = vld [vmem:[%s3006 + $0x118] sm:$0xff]
    %v3043 = vld [vmem:[%s3006 + $0x120] sm:$0xff]
    %v3044 = vld [vmem:[%s3006 + $0x128] sm:$0xff]
    %v3045 = vld [vmem:[%s3006 + $0x130] sm:$0xff]
    %v3046 = vld [vmem:[%s3006 + $0x138] sm:$0xff]
    %v3047 = vld [vmem:[%s3006 + $0x140] sm:$0xff]
    %v3048 = vld [vmem:[%s3006 + $0x148] sm:$0xff]
    %v3049 = vld [vmem:[%s3006 + $0x150] sm:$0xff]
    %v3050 = vld [vmem:[%s3006 + $0x158] sm:$0xff]
    %v3051 = vld [vmem:[%s3006 + $0x160] sm:$0xff]
    %v3052 = vld [vmem:[%s3006 + $0x168] sm:$0xff]
    %v3053 = vld [vmem:[%s3006 + $0x170] sm:$0xff]
    %v3054 = vld [vmem:[%s3006 + $0x178] sm:$0xff]
    %v3055 = vld [vmem:[%s3006 + $0x180] sm:$0xff]
    %v3056 = vld [vmem:[%s3006 + $0x188] sm:$0xff]
    %v3057 = vld [vmem:[%s3006 + $0x190] sm:$0xff]
    %v3058 = vld [vmem:[%s3006 + $0x198] sm:$0xff]
    %v3059 = vld [vmem:[%s3006 + $0x1a0] sm:$0xff]
    %v3060 = vld [vmem:[%s3006 + $0x1a8] sm:$0xff]
    %v3061 = vld [vmem:[%s3006 + $0x1b0] sm:$0xff]
    %v3062 = vld [vmem:[%s3006 + $0x1b8] sm:$0xff]
    %v3063 = vld [vmem:[%s3006 + $0x1c0] sm:$0xff]
    %v3064 = vld [vmem:[%s3006 + $0x1c8] sm:$0xff]
    %v3065 = vld [vmem:[%s3006 + $0x1d0] sm:$0xff]
    %v3066 = vld [vmem:[%s3006 + $0x1d8] sm:$0xff]
    %v3067 = vld [vmem:[%s3006 + $0x1e0] sm:$0xff]
    %v3068 = vld [vmem:[%s3006 + $0x1e8] sm:$0xff]
    %v3069 = vld [vmem:[%s3006 + $0x1f0] sm:$0xff]
    %v3070 = vld [vmem:[%s3006 + $0x1f8] sm:$0xff]
    %v3135 = vunpack.c.l.b16 %v3007
    %v3136 = vunpack.c.h.b16 %v3007
    %v3137 = vunpack.c.l.b16 %v3008
    %v3138 = vunpack.c.h.b16 %v3008
    %v3139 = vunpack.c.l.b16 %v3009
    %v3140 = vunpack.c.h.b16 %v3009
    %v3141 = vunpack.c.l.b16 %v3010
    %v3142 = vunpack.c.h.b16 %v3010
    %v3143 = vunpack.c.l.b16 %v3011
    %v3144 = vunpack.c.h.b16 %v3011
    %v3145 = vunpack.c.l.b16 %v3012
    %v3146 = vunpack.c.h.b16 %v3012
    %v3147 = vunpack.c.l.b16 %v3013
    %v3148 = vunpack.c.h.b16 %v3013
    %v3149 = vunpack.c.l.b16 %v3014
    %v3150 = vunpack.c.h.b16 %v3014
    %v3151 = vunpack.c.l.b16 %v3015
    %v3152 = vunpack.c.h.b16 %v3015
    %v3153 = vunpack.c.l.b16 %v3016
    %v3154 = vunpack.c.h.b16 %v3016
    %v3155 = vunpack.c.l.b16 %v3017
    %v3156 = vunpack.c.h.b16 %v3017
    %v3157 = vunpack.c.l.b16 %v3018
    %v3158 = vunpack.c.h.b16 %v3018
    %v3159 = vunpack.c.l.b16 %v3019
    %v3160 = vunpack.c.h.b16 %v3019
    %v3161 = vunpack.c.l.b16 %v3020
    %v3162 = vunpack.c.h.b16 %v3020
    %v3163 = vunpack.c.l.b16 %v3021
    %v3164 = vunpack.c.h.b16 %v3021
    %v3165 = vunpack.c.l.b16 %v3022
    %v3166 = vunpack.c.h.b16 %v3022
    %v3167 = vunpack.c.l.b16 %v3023
    %v3168 = vunpack.c.h.b16 %v3023
    %v3169 = vunpack.c.l.b16 %v3024
    %v3170 = vunpack.c.h.b16 %v3024
    %v3171 = vunpack.c.l.b16 %v3025
    %v3172 = vunpack.c.h.b16 %v3025
    %v3173 = vunpack.c.l.b16 %v3026
    %v3174 = vunpack.c.h.b16 %v3026
    %v3175 = vunpack.c.l.b16 %v3027
    %v3176 = vunpack.c.h.b16 %v3027
    %v3177 = vunpack.c.l.b16 %v3028
    %v3178 = vunpack.c.h.b16 %v3028
    %v3179 = vunpack.c.l.b16 %v3029
    %v3180 = vunpack.c.h.b16 %v3029
    %v3181 = vunpack.c.l.b16 %v3030
    %v3182 = vunpack.c.h.b16 %v3030
    %v3183 = vunpack.c.l.b16 %v3031
    %v3184 = vunpack.c.h.b16 %v3031
    %v3185 = vunpack.c.l.b16 %v3032
    %v3186 = vunpack.c.h.b16 %v3032
    %v3187 = vunpack.c.l.b16 %v3033
    %v3188 = vunpack.c.h.b16 %v3033
    %v3189 = vunpack.c.l.b16 %v3034
    %v3190 = vunpack.c.h.b16 %v3034
    %v3191 = vunpack.c.l.b16 %v3035
    %v3192 = vunpack.c.h.b16 %v3035
    %v3193 = vunpack.c.l.b16 %v3036
    %v3194 = vunpack.c.h.b16 %v3036
    %v3195 = vunpack.c.l.b16 %v3037
    %v3196 = vunpack.c.h.b16 %v3037
    %v3197 = vunpack.c.l.b16 %v3038
    %v3198 = vunpack.c.h.b16 %v3038
    %v3199 = vunpack.c.l.b16 %v3039
    %v3200 = vunpack.c.h.b16 %v3039
    %v3201 = vunpack.c.l.b16 %v3040
    %v3202 = vunpack.c.h.b16 %v3040
    %v3203 = vunpack.c.l.b16 %v3041
    %v3204 = vunpack.c.h.b16 %v3041
    %v3205 = vunpack.c.l.b16 %v3042
    %v3206 = vunpack.c.h.b16 %v3042
    %v3207 = vunpack.c.l.b16 %v3043
    %v3208 = vunpack.c.h.b16 %v3043
    %v3209 = vunpack.c.l.b16 %v3044
    %v3210 = vunpack.c.h.b16 %v3044
    %v3211 = vunpack.c.l.b16 %v3045
    %v3212 = vunpack.c.h.b16 %v3045
    %v3213 = vunpack.c.l.b16 %v3046
    %v3214 = vunpack.c.h.b16 %v3046
    %v3215 = vunpack.c.l.b16 %v3047
    %v3216 = vunpack.c.h.b16 %v3047
    %v3217 = vunpack.c.l.b16 %v3048
    %v3218 = vunpack.c.h.b16 %v3048
    %v3219 = vunpack.c.l.b16 %v3049
    %v3220 = vunpack.c.h.b16 %v3049
    %v3221 = vunpack.c.l.b16 %v3050
    %v3222 = vunpack.c.h.b16 %v3050
    %v3223 = vunpack.c.l.b16 %v3051
    %v3224 = vunpack.c.h.b16 %v3051
    %v3225 = vunpack.c.l.b16 %v3052
    %v3226 = vunpack.c.h.b16 %v3052
    %v3227 = vunpack.c.l.b16 %v3053
    %v3228 = vunpack.c.h.b16 %v3053
    %v3229 = vunpack.c.l.b16 %v3054
    %v3230 = vunpack.c.h.b16 %v3054
    %v3231 = vunpack.c.l.b16 %v3055
    %v3232 = vunpack.c.h.b16 %v3055
    %v3233 = vunpack.c.l.b16 %v3056
    %v3234 = vunpack.c.h.b16 %v3056
    %v3235 = vunpack.c.l.b16 %v3057
    %v3236 = vunpack.c.h.b16 %v3057
    %v3237 = vunpack.c.l.b16 %v3058
    %v3238 = vunpack.c.h.b16 %v3058
    %v3239 = vunpack.c.l.b16 %v3059
    %v3240 = vunpack.c.h.b16 %v3059
    %v3241 = vunpack.c.l.b16 %v3060
    %v3242 = vunpack.c.h.b16 %v3060
    %v3243 = vunpack.c.l.b16 %v3061
    %v3244 = vunpack.c.h.b16 %v3061
    %v3245 = vunpack.c.l.b16 %v3062
    %v3246 = vunpack.c.h.b16 %v3062
    %v3247 = vunpack.c.l.b16 %v3063
    %v3248 = vunpack.c.h.b16 %v3063
    %v3249 = vunpack.c.l.b16 %v3064
    %v3250 = vunpack.c.h.b16 %v3064
    %v3251 = vunpack.c.l.b16 %v3065
    %v3252 = vunpack.c.h.b16 %v3065
    %v3253 = vunpack.c.l.b16 %v3066
    %v3254 = vunpack.c.h.b16 %v3066
    %v3255 = vunpack.c.l.b16 %v3067
    %v3256 = vunpack.c.h.b16 %v3067
    %v3257 = vunpack.c.l.b16 %v3068
    %v3258 = vunpack.c.h.b16 %v3068
    %v3259 = vunpack.c.l.b16 %v3069
    %v3260 = vunpack.c.h.b16 %v3069
    %v3261 = vunpack.c.l.b16 %v3070
    %v3262 = vunpack.c.h.b16 %v3070
    %v3263 = vpack.c.b16 %v3137, %v3135
    %v3264 = vpack.c.b16 %v3138, %v3136
    %v3265 = vpack.c.b16 %v3141, %v3139
    %v3266 = vpack.c.b16 %v3142, %v3140
    %v3267 = vpack.c.b16 %v3145, %v3143
    %v3268 = vpack.c.b16 %v3146, %v3144
    %v3269 = vpack.c.b16 %v3149, %v3147
    %v3270 = vpack.c.b16 %v3150, %v3148
    %v3271 = vpack.c.b16 %v3153, %v3151
    %v3272 = vpack.c.b16 %v3154, %v3152
    %v3273 = vpack.c.b16 %v3157, %v3155
    %v3274 = vpack.c.b16 %v3158, %v3156
    %v3275 = vpack.c.b16 %v3161, %v3159
    %v3276 = vpack.c.b16 %v3162, %v3160
    %v3277 = vpack.c.b16 %v3165, %v3163
    %v3278 = vpack.c.b16 %v3166, %v3164
    %v3279 = vpack.c.b16 %v3169, %v3167
    %v3280 = vpack.c.b16 %v3170, %v3168
    %v3281 = vpack.c.b16 %v3173, %v3171
    %v3282 = vpack.c.b16 %v3174, %v3172
    %v3283 = vpack.c.b16 %v3177, %v3175
    %v3284 = vpack.c.b16 %v3178, %v3176
    %v3285 = vpack.c.b16 %v3181, %v3179
    %v3286 = vpack.c.b16 %v3182, %v3180
    %v3287 = vpack.c.b16 %v3185, %v3183
    %v3288 = vpack.c.b16 %v3186, %v3184
    %v3289 = vpack.c.b16 %v3189, %v3187
    %v3290 = vpack.c.b16 %v3190, %v3188
    %v3291 = vpack.c.b16 %v3193, %v3191
    %v3292 = vpack.c.b16 %v3194, %v3192
    %v3293 = vpack.c.b16 %v3197, %v3195
    %v3294 = vpack.c.b16 %v3198, %v3196
    %v3295 = vpack.c.b16 %v3201, %v3199
    %v3296 = vpack.c.b16 %v3202, %v3200
    %v3297 = vpack.c.b16 %v3205, %v3203
    %v3298 = vpack.c.b16 %v3206, %v3204
    %v3299 = vpack.c.b16 %v3209, %v3207
    %v3300 = vpack.c.b16 %v3210, %v3208
    %v3301 = vpack.c.b16 %v3213, %v3211
    %v3302 = vpack.c.b16 %v3214, %v3212
    %v3303 = vpack.c.b16 %v3217, %v3215
    %v3304 = vpack.c.b16 %v3218, %v3216
    %v3305 = vpack.c.b16 %v3221, %v3219
    %v3306 = vpack.c.b16 %v3222, %v3220
    %v3307 = vpack.c.b16 %v3225, %v3223
    %v3308 = vpack.c.b16 %v3226, %v3224
    %v3309 = vpack.c.b16 %v3229, %v3227
    %v3310 = vpack.c.b16 %v3230, %v3228
    %v3311 = vpack.c.b16 %v3233, %v3231
    %v3312 = vpack.c.b16 %v3234, %v3232
    %v3313 = vpack.c.b16 %v3237, %v3235
    %v3314 = vpack.c.b16 %v3238, %v3236
    %v3315 = vpack.c.b16 %v3241, %v3239
    %v3316 = vpack.c.b16 %v3242, %v3240
    %v3317 = vpack.c.b16 %v3245, %v3243
    %v3318 = vpack.c.b16 %v3246, %v3244
    %v3319 = vpack.c.b16 %v3249, %v3247
    %v3320 = vpack.c.b16 %v3250, %v3248
    %v3321 = vpack.c.b16 %v3253, %v3251
    %v3322 = vpack.c.b16 %v3254, %v3252
    %v3323 = vpack.c.b16 %v3257, %v3255
    %v3324 = vpack.c.b16 %v3258, %v3256
    %v3325 = vpack.c.b16 %v3261, %v3259
    %v3326 = vpack.c.b16 %v3262, %v3260
    %3391 = vmatprep.subr.bf16.mxu0 %v3264
    %3392 = vmatpush1.bf16.msra.mxu0 %v3263
    %3393 = vmatprep.subr.bf16.mxu0 %v3266
    %3394 = vmatpush1.bf16.msra.mxu0 %v3265
    %3395 = vmatprep.subr.bf16.mxu0 %v3268
    %3396 = vmatpush1.bf16.msra.mxu0 %v3267
    %3397 = vmatprep.subr.bf16.mxu0 %v3270
    %3398 = vmatpush1.bf16.msra.mxu0 %v3269
    %3399 = vmatprep.subr.bf16.mxu0 %v3272
    %3400 = vmatpush1.bf16.msra.mxu0 %v3271
    %3401 = vmatprep.subr.bf16.mxu0 %v3274
    %3402 = vmatpush1.bf16.msra.mxu0 %v3273
    %3403 = vmatprep.subr.bf16.mxu0 %v3276
    %3404 = vmatpush1.bf16.msra.mxu0 %v3275
    %3405 = vmatprep.subr.bf16.mxu0 %v3278
    %3406 = vmatpush1.bf16.msra.mxu0 %v3277
    %3407 = vmatprep.subr.bf16.mxu0 %v3280
    %3408 = vmatpush1.bf16.msra.mxu0 %v3279
    %3409 = vmatprep.subr.bf16.mxu0 %v3282
    %3410 = vmatpush1.bf16.msra.mxu0 %v3281
    %3411 = vmatprep.subr.bf16.mxu0 %v3284
    %3412 = vmatpush1.bf16.msra.mxu0 %v3283
    %3413 = vmatprep.subr.bf16.mxu0 %v3286
    %3414 = vmatpush1.bf16.msra.mxu0 %v3285
    %3415 = vmatprep.subr.bf16.mxu0 %v3288
    %3416 = vmatpush1.bf16.msra.mxu0 %v3287
    %3417 = vmatprep.subr.bf16.mxu0 %v3290
    %3418 = vmatpush1.bf16.msra.mxu0 %v3289
    %3419 = vmatprep.subr.bf16.mxu0 %v3292
    %3420 = vmatpush1.bf16.msra.mxu0 %v3291
    %3421 = vmatprep.subr.bf16.mxu0 %v3294
    %3422 = vmatpush1.bf16.msra.mxu0 %v3293
    %3423 = vmatprep.mubr.bf16.mxu0 %v1847
    %3424 = vmatmul.mubr.bf16.gmra.mrb[0].mxu0 %v1846
    %v3425 = vpop.f32.mrb[0].mxu0
    %v3426 = vadd.f32 0.0, %v3425
    %v3427 = vpop.f32.mrb[0].mxu0
    %v3428 = vadd.f32 0.0, %v3427
    %v3429 = vpop.f32.mrb[0].mxu0
    %v3430 = vadd.f32 0.0, %v3429
    %v3431 = vpop.f32.mrb[0].mxu0
    %v3432 = vadd.f32 0.0, %v3431
    %3433 = vmatprep.mubr.bf16.mxu0 %v1851
    %3434 = vmatmul.mubr.bf16.gmra.mrb[0].mxu0 %v1850
    %v3435 = vpop.f32.mrb[0].mxu0
    %v3436 = vadd.f32 0.0, %v3435
    %v3437 = vpop.f32.mrb[0].mxu0
    %v3438 = vadd.f32 0.0, %v3437
    %v3439 = vpop.f32.mrb[0].mxu0
    %v3440 = vadd.f32 0.0, %v3439
    %v3441 = vpop.f32.mrb[0].mxu0
    %v3442 = vadd.f32 0.0, %v3441
    %3443 = vdwg.mxu0
    %3444 = vmatprep.subr.bf16.mxu0 %v3296
    %3445 = vmatpush1.bf16.msra.mxu0 %v3295
    %3446 = vmatprep.subr.bf16.mxu0 %v3298
    %3447 = vmatpush1.bf16.msra.mxu0 %v3297
    %3448 = vmatprep.subr.bf16.mxu0 %v3300
    %3449 = vmatpush1.bf16.msra.mxu0 %v3299
    %3450 = vmatprep.subr.bf16.mxu0 %v3302
    %3451 = vmatpush1.bf16.msra.mxu0 %v3301
    %3452 = vmatprep.subr.bf16.mxu0 %v3304
    %3453 = vmatpush1.bf16.msra.mxu0 %v3303
    %3454 = vmatprep.subr.bf16.mxu0 %v3306
    %3455 = vmatpush1.bf16.msra.mxu0 %v3305
    %3456 = vmatprep.subr.bf16.mxu0 %v3308
    %3457 = vmatpush1.bf16.msra.mxu0 %v3307
    %3458 = vmatprep.subr.bf16.mxu0 %v3310
    %3459 = vmatpush1.bf16.msra.mxu0 %v3309
    %3460 = vmatprep.subr.bf16.mxu0 %v3312
    %3461 = vmatpush1.bf16.msra.mxu0 %v3311
    %3462 = vmatprep.subr.bf16.mxu0 %v3314
    %3463 = vmatpush1.bf16.msra.mxu0 %v3313
    %3464 = vmatprep.subr.bf16.mxu0 %v3316
    %3465 = vmatpush1.bf16.msra.mxu0 %v3315
    %3466 = vmatprep.subr.bf16.mxu0 %v3318
    %3467 = vmatpush1.bf16.msra.mxu0 %v3317
    %3468 = vmatprep.subr.bf16.mxu0 %v3320
    %3469 = vmatpush1.bf16.msra.mxu0 %v3319
    %3470 = vmatprep.subr.bf16.mxu0 %v3322
    %3471 = vmatpush1.bf16.msra.mxu0 %v3321
    %3472 = vmatprep.subr.bf16.mxu0 %v3324
    %3473 = vmatpush1.bf16.msra.mxu0 %v3323
    %3474 = vmatprep.subr.bf16.mxu0 %v3326
    %3475 = vmatpush1.bf16.msra.mxu0 %v3325
    %3476 = vmatprep.mubr.bf16.mxu0 %v1849
    %3477 = vmatmul.mubr.bf16.gmra.mrb[0].mxu0 %v1848
    %v3478 = vpop.f32.mrb[0].mxu0
    %v3479 = vadd.f32 %v3426, %v3478
    %v3480 = vpop.f32.mrb[0].mxu0
    %v3481 = vadd.f32 %v3428, %v3480
    %v3482 = vpop.f32.mrb[0].mxu0
    %v3483 = vadd.f32 %v3430, %v3482
    %v3484 = vpop.f32.mrb[0].mxu0
    %v3485 = vadd.f32 %v3432, %v3484
    %3486 = vmatprep.mubr.bf16.mxu0 %v1853
    %3487 = vmatmul.mubr.bf16.gmra.mrb[0].mxu0 %v1852
    %v3488 = vpop.f32.mrb[0].mxu0
    %v3489 = vadd.f32 %v3436, %v3488
    %v3490 = vpop.f32.mrb[0].mxu0
    %v3491 = vadd.f32 %v3438, %v3490
    %v3492 = vpop.f32.mrb[0].mxu0
    %v3493 = vadd.f32 %v3440, %v3492
    %v3494 = vpop.f32.mrb[0].mxu0
    %v3495 = vadd.f32 %v3442, %v3494
    %3496 = vdwg.mxu0
    %s3497 = scalar_lea.vmem %s7, 32
    %v3498 = vld [vmem:[%s3497] sm:$0xff]
    %v3499 = vld [vmem:[%s3497 + $0x8] sm:$0xff]
    %v3501 = vsel %vm236, %v3498, 0
    %v3504 = vsel %vm236, %v3499, 0
    %3506 = vmatprep.subr.mxu0 %v3481
    %3507 = vmatpush1.msra.mxu0 %v3479
    %3508 = vmatprep.subr.mxu0 %v3485
    %3509 = vmatpush1.msra.mxu0 %v3483
    %3510 = vmatprep.subr.mxu0 %v3491
    %3511 = vmatpush1.msra.mxu0 %v3489
    %3512 = vmatprep.subr.mxu0 %v3495
    %3513 = vmatpush1.msra.mxu0 %v3493
    %3514 = vmatprep.subr.mxu0 0.0
    %3515 = vmatpush1.msra.mxu0 0.0
    %3516 = vmatprep.subr.mxu0 0.0
    %3517 = vmatpush1.msra.mxu0 0.0
    %3518 = vmatprep.subr.mxu0 0.0
    %3519 = vmatpush1.msra.mxu0 0.0
    %3520 = vmatprep.subr.mxu0 0.0
    %3521 = vmatpush1.msra.mxu0 0.0
    %3522 = vmatprep.subr.mxu0 0.0
    %3523 = vmatpush1.msra.mxu0 0.0
    %3524 = vmatprep.subr.mxu0 0.0
    %3525 = vmatpush1.msra.mxu0 0.0
    %3526 = vmatprep.subr.mxu0 0.0
    %3527 = vmatpush1.msra.mxu0 0.0
    %3528 = vmatprep.subr.mxu0 0.0
    %3529 = vmatpush1.msra.mxu0 0.0
    %3530 = vmatprep.subr.mxu0 0.0
    %3531 = vmatpush1.msra.mxu0 0.0
    %3532 = vmatprep.subr.mxu0 0.0
    %3533 = vmatpush1.msra.mxu0 0.0
    %3534 = vmatprep.subr.mxu0 0.0
    %3535 = vmatpush1.msra.mxu0 0.0
    %3536 = vmatprep.subr.mxu0 0.0
    %3537 = vmatpush1.msra.mxu0 0.0
    %3538 = vmatprep.subr.mxu0 0.0
    %3539 = vmatpush1.msra.mxu0 0.0
    %3540 = vmatprep.subr.mxu0 0.0
    %3541 = vmatpush1.msra.mxu0 0.0
    %3542 = vmatprep.subr.mxu0 0.0
    %3543 = vmatpush1.msra.mxu0 0.0
    %3544 = vmatprep.subr.mxu0 0.0
    %3545 = vmatpush1.msra.mxu0 0.0
    %3546 = vmatprep.subr.mxu0 0.0
    %3547 = vmatpush1.msra.mxu0 0.0
    %3548 = vmatprep.subr.mxu0 0.0
    %3549 = vmatpush1.msra.mxu0 0.0
    %3550 = vmatprep.subr.mxu0 0.0
    %3551 = vmatpush1.msra.mxu0 0.0
    %3552 = vmatprep.subr.mxu0 0.0
    %3553 = vmatpush1.msra.mxu0 0.0
    %3554 = vmatprep.subr.mxu0 0.0
    %3555 = vmatpush1.msra.mxu0 0.0
    %3556 = vmatprep.subr.mxu0 0.0
    %3557 = vmatpush1.msra.mxu0 0.0
    %3558 = vmatprep.subr.mxu0 0.0
    %3559 = vmatpush1.msra.mxu0 0.0
    %3560 = vmatprep.subr.mxu0 0.0
    %3561 = vmatpush1.msra.mxu0 0.0
    %3562 = vmatprep.subr.mxu0 0.0
    %3563 = vmatpush1.msra.mxu0 0.0
    %3564 = vmatprep.subr.mxu0 0.0
    %3565 = vmatpush1.msra.mxu0 0.0
    %3566 = vmatprep.subr.mxu0 0.0
    %3567 = vmatpush1.msra.mxu0 0.0
    %3568 = vmatprep.subr.mxu0 0.0
    %3569 = vmatpush1.msra.mxu0 0.0
    %3570 = vmatprep.mubr.f32.mxu0 0.0
    %3571 = vmatmul.mubr.f32.gmra.mrb[0].mxu0 %v3501
    %v3572 = vpop.f32.mrb[0].mxu0
    %v3573 = vadd.f32 0.0, %v3572
    %v3574 = vpop.f32.mrb[0].mxu0
    %v3575 = vadd.f32 0.0, %v3574
    %3576 = vmatprep.mubr.f32.mxu0 0.0
    %3577 = vmatmul.mubr.f32.gmra.mrb[0].mxu0 %v3504
    %v3578 = vpop.f32.mrb[0].mxu0
    %v3579 = vadd.f32 0.0, %v3578
    %v3580 = vpop.f32.mrb[0].mxu0
    %v3581 = vadd.f32 0.0, %v3580
    %3582 = vdwg.mxu0
    %v3583 = vadd.f32 %v2996, %v3573
    %v3584 = vadd.f32 %v2998, %v3575
    %v3585 = vadd.f32 %v3002, %v3579
    %v3586 = vadd.f32 %v3004, %v3581
    %s3587 = scalar_lea.vmem [#allocation6], 1536
    %v3588 = vld [vmem:[%s3587] sm:$0xff]
    %v3589 = vld [vmem:[%s3587 + $0x8] sm:$0xff]
    %v3590 = vld [vmem:[%s3587 + $0x10] sm:$0xff]
    %v3591 = vld [vmem:[%s3587 + $0x18] sm:$0xff]
    %v3592 = vld [vmem:[%s3587 + $0x20] sm:$0xff]
    %v3593 = vld [vmem:[%s3587 + $0x28] sm:$0xff]
    %v3594 = vld [vmem:[%s3587 + $0x30] sm:$0xff]
    %v3595 = vld [vmem:[%s3587 + $0x38] sm:$0xff]
    %v3596 = vld [vmem:[%s3587 + $0x40] sm:$0xff]
    %v3597 = vld [vmem:[%s3587 + $0x48] sm:$0xff]
    %v3598 = vld [vmem:[%s3587 + $0x50] sm:$0xff]
    %v3599 = vld [vmem:[%s3587 + $0x58] sm:$0xff]
    %v3600 = vld [vmem:[%s3587 + $0x60] sm:$0xff]
    %v3601 = vld [vmem:[%s3587 + $0x68] sm:$0xff]
    %v3602 = vld [vmem:[%s3587 + $0x70] sm:$0xff]
    %v3603 = vld [vmem:[%s3587 + $0x78] sm:$0xff]
    %v3604 = vld [vmem:[%s3587 + $0x80] sm:$0xff]
    %v3605 = vld [vmem:[%s3587 + $0x88] sm:$0xff]
    %v3606 = vld [vmem:[%s3587 + $0x90] sm:$0xff]
    %v3607 = vld [vmem:[%s3587 + $0x98] sm:$0xff]
    %v3608 = vld [vmem:[%s3587 + $0xa0] sm:$0xff]
    %v3609 = vld [vmem:[%s3587 + $0xa8] sm:$0xff]
    %v3610 = vld [vmem:[%s3587 + $0xb0] sm:$0xff]
    %v3611 = vld [vmem:[%s3587 + $0xb8] sm:$0xff]
    %v3612 = vld [vmem:[%s3587 + $0xc0] sm:$0xff]
    %v3613 = vld [vmem:[%s3587 + $0xc8] sm:$0xff]
    %v3614 = vld [vmem:[%s3587 + $0xd0] sm:$0xff]
    %v3615 = vld [vmem:[%s3587 + $0xd8] sm:$0xff]
    %v3616 = vld [vmem:[%s3587 + $0xe0] sm:$0xff]
    %v3617 = vld [vmem:[%s3587 + $0xe8] sm:$0xff]
    %v3618 = vld [vmem:[%s3587 + $0xf0] sm:$0xff]
    %v3619 = vld [vmem:[%s3587 + $0xf8] sm:$0xff]
    %v3620 = vld [vmem:[%s3587 + $0x100] sm:$0xff]
    %v3621 = vld [vmem:[%s3587 + $0x108] sm:$0xff]
    %v3622 = vld [vmem:[%s3587 + $0x110] sm:$0xff]
    %v3623 = vld [vmem:[%s3587 + $0x118] sm:$0xff]
    %v3624 = vld [vmem:[%s3587 + $0x120] sm:$0xff]
    %v3625 = vld [vmem:[%s3587 + $0x128] sm:$0xff]
    %v3626 = vld [vmem:[%s3587 + $0x130] sm:$0xff]
    %v3627 = vld [vmem:[%s3587 + $0x138] sm:$0xff]
    %v3628 = vld [vmem:[%s3587 + $0x140] sm:$0xff]
    %v3629 = vld [vmem:[%s3587 + $0x148] sm:$0xff]
    %v3630 = vld [vmem:[%s3587 + $0x150] sm:$0xff]
    %v3631 = vld [vmem:[%s3587 + $0x158] sm:$0xff]
    %v3632 = vld [vmem:[%s3587 + $0x160] sm:$0xff]
    %v3633 = vld [vmem:[%s3587 + $0x168] sm:$0xff]
    %v3634 = vld [vmem:[%s3587 + $0x170] sm:$0xff]
    %v3635 = vld [vmem:[%s3587 + $0x178] sm:$0xff]
    %v3636 = vld [vmem:[%s3587 + $0x180] sm:$0xff]
    %v3637 = vld [vmem:[%s3587 + $0x188] sm:$0xff]
    %v3638 = vld [vmem:[%s3587 + $0x190] sm:$0xff]
    %v3639 = vld [vmem:[%s3587 + $0x198] sm:$0xff]
    %v3640 = vld [vmem:[%s3587 + $0x1a0] sm:$0xff]
    %v3641 = vld [vmem:[%s3587 + $0x1a8] sm:$0xff]
    %v3642 = vld [vmem:[%s3587 + $0x1b0] sm:$0xff]
    %v3643 = vld [vmem:[%s3587 + $0x1b8] sm:$0xff]
    %v3644 = vld [vmem:[%s3587 + $0x1c0] sm:$0xff]
    %v3645 = vld [vmem:[%s3587 + $0x1c8] sm:$0xff]
    %v3646 = vld [vmem:[%s3587 + $0x1d0] sm:$0xff]
    %v3647 = vld [vmem:[%s3587 + $0x1d8] sm:$0xff]
    %v3648 = vld [vmem:[%s3587 + $0x1e0] sm:$0xff]
    %v3649 = vld [vmem:[%s3587 + $0x1e8] sm:$0xff]
    %v3650 = vld [vmem:[%s3587 + $0x1f0] sm:$0xff]
    %v3651 = vld [vmem:[%s3587 + $0x1f8] sm:$0xff]
    %v3716 = vunpack.c.l.b16 %v3588
    %v3717 = vunpack.c.h.b16 %v3588
    %v3718 = vunpack.c.l.b16 %v3589
    %v3719 = vunpack.c.h.b16 %v3589
    %v3720 = vunpack.c.l.b16 %v3590
    %v3721 = vunpack.c.h.b16 %v3590
    %v3722 = vunpack.c.l.b16 %v3591
    %v3723 = vunpack.c.h.b16 %v3591
    %v3724 = vunpack.c.l.b16 %v3592
    %v3725 = vunpack.c.h.b16 %v3592
    %v3726 = vunpack.c.l.b16 %v3593
    %v3727 = vunpack.c.h.b16 %v3593
    %v3728 = vunpack.c.l.b16 %v3594
    %v3729 = vunpack.c.h.b16 %v3594
    %v3730 = vunpack.c.l.b16 %v3595
    %v3731 = vunpack.c.h.b16 %v3595
    %v3732 = vunpack.c.l.b16 %v3596
    %v3733 = vunpack.c.h.b16 %v3596
    %v3734 = vunpack.c.l.b16 %v3597
    %v3735 = vunpack.c.h.b16 %v3597
    %v3736 = vunpack.c.l.b16 %v3598
    %v3737 = vunpack.c.h.b16 %v3598
    %v3738 = vunpack.c.l.b16 %v3599
    %v3739 = vunpack.c.h.b16 %v3599
    %v3740 = vunpack.c.l.b16 %v3600
    %v3741 = vunpack.c.h.b16 %v3600
    %v3742 = vunpack.c.l.b16 %v3601
    %v3743 = vunpack.c.h.b16 %v3601
    %v3744 = vunpack.c.l.b16 %v3602
    %v3745 = vunpack.c.h.b16 %v3602
    %v3746 = vunpack.c.l.b16 %v3603
    %v3747 = vunpack.c.h.b16 %v3603
    %v3748 = vunpack.c.l.b16 %v3604
    %v3749 = vunpack.c.h.b16 %v3604
    %v3750 = vunpack.c.l.b16 %v3605
    %v3751 = vunpack.c.h.b16 %v3605
    %v3752 = vunpack.c.l.b16 %v3606
    %v3753 = vunpack.c.h.b16 %v3606
    %v3754 = vunpack.c.l.b16 %v3607
    %v3755 = vunpack.c.h.b16 %v3607
    %v3756 = vunpack.c.l.b16 %v3608
    %v3757 = vunpack.c.h.b16 %v3608
    %v3758 = vunpack.c.l.b16 %v3609
    %v3759 = vunpack.c.h.b16 %v3609
    %v3760 = vunpack.c.l.b16 %v3610
    %v3761 = vunpack.c.h.b16 %v3610
    %v3762 = vunpack.c.l.b16 %v3611
    %v3763 = vunpack.c.h.b16 %v3611
    %v3764 = vunpack.c.l.b16 %v3612
    %v3765 = vunpack.c.h.b16 %v3612
    %v3766 = vunpack.c.l.b16 %v3613
    %v3767 = vunpack.c.h.b16 %v3613
    %v3768 = vunpack.c.l.b16 %v3614
    %v3769 = vunpack.c.h.b16 %v3614
    %v3770 = vunpack.c.l.b16 %v3615
    %v3771 = vunpack.c.h.b16 %v3615
    %v3772 = vunpack.c.l.b16 %v3616
    %v3773 = vunpack.c.h.b16 %v3616
    %v3774 = vunpack.c.l.b16 %v3617
    %v3775 = vunpack.c.h.b16 %v3617
    %v3776 = vunpack.c.l.b16 %v3618
    %v3777 = vunpack.c.h.b16 %v3618
    %v3778 = vunpack.c.l.b16 %v3619
    %v3779 = vunpack.c.h.b16 %v3619
    %v3780 = vunpack.c.l.b16 %v3620
    %v3781 = vunpack.c.h.b16 %v3620
    %v3782 = vunpack.c.l.b16 %v3621
    %v3783 = vunpack.c.h.b16 %v3621
    %v3784 = vunpack.c.l.b16 %v3622
    %v3785 = vunpack.c.h.b16 %v3622
    %v3786 = vunpack.c.l.b16 %v3623
    %v3787 = vunpack.c.h.b16 %v3623
    %v3788 = vunpack.c.l.b16 %v3624
    %v3789 = vunpack.c.h.b16 %v3624
    %v3790 = vunpack.c.l.b16 %v3625
    %v3791 = vunpack.c.h.b16 %v3625
    %v3792 = vunpack.c.l.b16 %v3626
    %v3793 = vunpack.c.h.b16 %v3626
    %v3794 = vunpack.c.l.b16 %v3627
    %v3795 = vunpack.c.h.b16 %v3627
    %v3796 = vunpack.c.l.b16 %v3628
    %v3797 = vunpack.c.h.b16 %v3628
    %v3798 = vunpack.c.l.b16 %v3629
    %v3799 = vunpack.c.h.b16 %v3629
    %v3800 = vunpack.c.l.b16 %v3630
    %v3801 = vunpack.c.h.b16 %v3630
    %v3802 = vunpack.c.l.b16 %v3631
    %v3803 = vunpack.c.h.b16 %v3631
    %v3804 = vunpack.c.l.b16 %v3632
    %v3805 = vunpack.c.h.b16 %v3632
    %v3806 = vunpack.c.l.b16 %v3633
    %v3807 = vunpack.c.h.b16 %v3633
    %v3808 = vunpack.c.l.b16 %v3634
    %v3809 = vunpack.c.h.b16 %v3634
    %v3810 = vunpack.c.l.b16 %v3635
    %v3811 = vunpack.c.h.b16 %v3635
    %v3812 = vunpack.c.l.b16 %v3636
    %v3813 = vunpack.c.h.b16 %v3636
    %v3814 = vunpack.c.l.b16 %v3637
    %v3815 = vunpack.c.h.b16 %v3637
    %v3816 = vunpack.c.l.b16 %v3638
    %v3817 = vunpack.c.h.b16 %v3638
    %v3818 = vunpack.c.l.b16 %v3639
    %v3819 = vunpack.c.h.b16 %v3639
    %v3820 = vunpack.c.l.b16 %v3640
    %v3821 = vunpack.c.h.b16 %v3640
    %v3822 = vunpack.c.l.b16 %v3641
    %v3823 = vunpack.c.h.b16 %v3641
    %v3824 = vunpack.c.l.b16 %v3642
    %v3825 = vunpack.c.h.b16 %v3642
    %v3826 = vunpack.c.l.b16 %v3643
    %v3827 = vunpack.c.h.b16 %v3643
    %v3828 = vunpack.c.l.b16 %v3644
    %v3829 = vunpack.c.h.b16 %v3644
    %v3830 = vunpack.c.l.b16 %v3645
    %v3831 = vunpack.c.h.b16 %v3645
    %v3832 = vunpack.c.l.b16 %v3646
    %v3833 = vunpack.c.h.b16 %v3646
    %v3834 = vunpack.c.l.b16 %v3647
    %v3835 = vunpack.c.h.b16 %v3647
    %v3836 = vunpack.c.l.b16 %v3648
    %v3837 = vunpack.c.h.b16 %v3648
    %v3838 = vunpack.c.l.b16 %v3649
    %v3839 = vunpack.c.h.b16 %v3649
    %v3840 = vunpack.c.l.b16 %v3650
    %v3841 = vunpack.c.h.b16 %v3650
    %v3842 = vunpack.c.l.b16 %v3651
    %v3843 = vunpack.c.h.b16 %v3651
    %v3844 = vpack.c.b16 %v3718, %v3716
    %v3845 = vpack.c.b16 %v3719, %v3717
    %v3846 = vpack.c.b16 %v3722, %v3720
    %v3847 = vpack.c.b16 %v3723, %v3721
    %v3848 = vpack.c.b16 %v3726, %v3724
    %v3849 = vpack.c.b16 %v3727, %v3725
    %v3850 = vpack.c.b16 %v3730, %v3728
    %v3851 = vpack.c.b16 %v3731, %v3729
    %v3852 = vpack.c.b16 %v3734, %v3732
    %v3853 = vpack.c.b16 %v3735, %v3733
    %v3854 = vpack.c.b16 %v3738, %v3736
    %v3855 = vpack.c.b16 %v3739, %v3737
    %v3856 = vpack.c.b16 %v3742, %v3740
    %v3857 = vpack.c.b16 %v3743, %v3741
    %v3858 = vpack.c.b16 %v3746, %v3744
    %v3859 = vpack.c.b16 %v3747, %v3745
    %v3860 = vpack.c.b16 %v3750, %v3748
    %v3861 = vpack.c.b16 %v3751, %v3749
    %v3862 = vpack.c.b16 %v3754, %v3752
    %v3863 = vpack.c.b16 %v3755, %v3753
    %v3864 = vpack.c.b16 %v3758, %v3756
    %v3865 = vpack.c.b16 %v3759, %v3757
    %v3866 = vpack.c.b16 %v3762, %v3760
    %v3867 = vpack.c.b16 %v3763, %v3761
    %v3868 = vpack.c.b16 %v3766, %v3764
    %v3869 = vpack.c.b16 %v3767, %v3765
    %v3870 = vpack.c.b16 %v3770, %v3768
    %v3871 = vpack.c.b16 %v3771, %v3769
    %v3872 = vpack.c.b16 %v3774, %v3772
    %v3873 = vpack.c.b16 %v3775, %v3773
    %v3874 = vpack.c.b16 %v3778, %v3776
    %v3875 = vpack.c.b16 %v3779, %v3777
    %v3876 = vpack.c.b16 %v3782, %v3780
    %v3877 = vpack.c.b16 %v3783, %v3781
    %v3878 = vpack.c.b16 %v3786, %v3784
    %v3879 = vpack.c.b16 %v3787, %v3785
    %v3880 = vpack.c.b16 %v3790, %v3788
    %v3881 = vpack.c.b16 %v3791, %v3789
    %v3882 = vpack.c.b16 %v3794, %v3792
    %v3883 = vpack.c.b16 %v3795, %v3793
    %v3884 = vpack.c.b16 %v3798, %v3796
    %v3885 = vpack.c.b16 %v3799, %v3797
    %v3886 = vpack.c.b16 %v3802, %v3800
    %v3887 = vpack.c.b16 %v3803, %v3801
    %v3888 = vpack.c.b16 %v3806, %v3804
    %v3889 = vpack.c.b16 %v3807, %v3805
    %v3890 = vpack.c.b16 %v3810, %v3808
    %v3891 = vpack.c.b16 %v3811, %v3809
    %v3892 = vpack.c.b16 %v3814, %v3812
    %v3893 = vpack.c.b16 %v3815, %v3813
    %v3894 = vpack.c.b16 %v3818, %v3816
    %v3895 = vpack.c.b16 %v3819, %v3817
    %v3896 = vpack.c.b16 %v3822, %v3820
    %v3897 = vpack.c.b16 %v3823, %v3821
    %v3898 = vpack.c.b16 %v3826, %v3824
    %v3899 = vpack.c.b16 %v3827, %v3825
    %v3900 = vpack.c.b16 %v3830, %v3828
    %v3901 = vpack.c.b16 %v3831, %v3829
    %v3902 = vpack.c.b16 %v3834, %v3832
    %v3903 = vpack.c.b16 %v3835, %v3833
    %v3904 = vpack.c.b16 %v3838, %v3836
    %v3905 = vpack.c.b16 %v3839, %v3837
    %v3906 = vpack.c.b16 %v3842, %v3840
    %v3907 = vpack.c.b16 %v3843, %v3841
    %3972 = vmatprep.subr.bf16.mxu0 %v3845
    %3973 = vmatpush1.bf16.msra.mxu0 %v3844
    %3974 = vmatprep.subr.bf16.mxu0 %v3847
    %3975 = vmatpush1.bf16.msra.mxu0 %v3846
    %3976 = vmatprep.subr.bf16.mxu0 %v3849
    %3977 = vmatpush1.bf16.msra.mxu0 %v3848
    %3978 = vmatprep.subr.bf16.mxu0 %v3851
    %3979 = vmatpush1.bf16.msra.mxu0 %v3850
    %3980 = vmatprep.subr.bf16.mxu0 %v3853
    %3981 = vmatpush1.bf16.msra.mxu0 %v3852
    %3982 = vmatprep.subr.bf16.mxu0 %v3855
    %3983 = vmatpush1.bf16.msra.mxu0 %v3854
    %3984 = vmatprep.subr.bf16.mxu0 %v3857
    %3985 = vmatpush1.bf16.msra.mxu0 %v3856
    %3986 = vmatprep.subr.bf16.mxu0 %v3859
    %3987 = vmatpush1.bf16.msra.mxu0 %v3858
    %3988 = vmatprep.subr.bf16.mxu0 %v3861
    %3989 = vmatpush1.bf16.msra.mxu0 %v3860
    %3990 = vmatprep.subr.bf16.mxu0 %v3863
    %3991 = vmatpush1.bf16.msra.mxu0 %v3862
    %3992 = vmatprep.subr.bf16.mxu0 %v3865
    %3993 = vmatpush1.bf16.msra.mxu0 %v3864
    %3994 = vmatprep.subr.bf16.mxu0 %v3867
    %3995 = vmatpush1.bf16.msra.mxu0 %v3866
    %3996 = vmatprep.subr.bf16.mxu0 %v3869
    %3997 = vmatpush1.bf16.msra.mxu0 %v3868
    %3998 = vmatprep.subr.bf16.mxu0 %v3871
    %3999 = vmatpush1.bf16.msra.mxu0 %v3870
    %4000 = vmatprep.subr.bf16.mxu0 %v3873
    %4001 = vmatpush1.bf16.msra.mxu0 %v3872
    %4002 = vmatprep.subr.bf16.mxu0 %v3875
    %4003 = vmatpush1.bf16.msra.mxu0 %v3874
    %4004 = vmatprep.mubr.bf16.mxu0 %v1847
    %4005 = vmatmul.mubr.bf16.gmra.mrb[0].mxu0 %v1846
    %v4006 = vpop.f32.mrb[0].mxu0
    %v4007 = vadd.f32 0.0, %v4006
    %v4008 = vpop.f32.mrb[0].mxu0
    %v4009 = vadd.f32 0.0, %v4008
    %v4010 = vpop.f32.mrb[0].mxu0
    %v4011 = vadd.f32 0.0, %v4010
    %v4012 = vpop.f32.mrb[0].mxu0
    %v4013 = vadd.f32 0.0, %v4012
    %4014 = vmatprep.mubr.bf16.mxu0 %v1851
    %4015 = vmatmul.mubr.bf16.gmra.mrb[0].mxu0 %v1850
    %v4016 = vpop.f32.mrb[0].mxu0
    %v4017 = vadd.f32 0.0, %v4016
    %v4018 = vpop.f32.mrb[0].mxu0
    %v4019 = vadd.f32 0.0, %v4018
    %v4020 = vpop.f32.mrb[0].mxu0
    %v4021 = vadd.f32 0.0, %v4020
    %v4022 = vpop.f32.mrb[0].mxu0
    %v4023 = vadd.f32 0.0, %v4022
    %4024 = vdwg.mxu0
    %4025 = vmatprep.subr.bf16.mxu0 %v3877
    %4026 = vmatpush1.bf16.msra.mxu0 %v3876
    %4027 = vmatprep.subr.bf16.mxu0 %v3879
    %4028 = vmatpush1.bf16.msra.mxu0 %v3878
    %4029 = vmatprep.subr.bf16.mxu0 %v3881
    %4030 = vmatpush1.bf16.msra.mxu0 %v3880
    %4031 = vmatprep.subr.bf16.mxu0 %v3883
    %4032 = vmatpush1.bf16.msra.mxu0 %v3882
    %4033 = vmatprep.subr.bf16.mxu0 %v3885
    %4034 = vmatpush1.bf16.msra.mxu0 %v3884
    %4035 = vmatprep.subr.bf16.mxu0 %v3887
    %4036 = vmatpush1.bf16.msra.mxu0 %v3886
    %4037 = vmatprep.subr.bf16.mxu0 %v3889
    %4038 = vmatpush1.bf16.msra.mxu0 %v3888
    %4039 = vmatprep.subr.bf16.mxu0 %v3891
    %4040 = vmatpush1.bf16.msra.mxu0 %v3890
    %4041 = vmatprep.subr.bf16.mxu0 %v3893
    %4042 = vmatpush1.bf16.msra.mxu0 %v3892
    %4043 = vmatprep.subr.bf16.mxu0 %v3895
    %4044 = vmatpush1.bf16.msra.mxu0 %v3894
    %4045 = vmatprep.subr.bf16.mxu0 %v3897
    %4046 = vmatpush1.bf16.msra.mxu0 %v3896
    %4047 = vmatprep.subr.bf16.mxu0 %v3899
    %4048 = vmatpush1.bf16.msra.mxu0 %v3898
    %4049 = vmatprep.subr.bf16.mxu0 %v3901
    %4050 = vmatpush1.bf16.msra.mxu0 %v3900
    %4051 = vmatprep.subr.bf16.mxu0 %v3903
    %4052 = vmatpush1.bf16.msra.mxu0 %v3902
    %4053 = vmatprep.subr.bf16.mxu0 %v3905
    %4054 = vmatpush1.bf16.msra.mxu0 %v3904
    %4055 = vmatprep.subr.bf16.mxu0 %v3907
    %4056 = vmatpush1.bf16.msra.mxu0 %v3906
    %4057 = vmatprep.mubr.bf16.mxu0 %v1849
    %4058 = vmatmul.mubr.bf16.gmra.mrb[0].mxu0 %v1848
    %v4059 = vpop.f32.mrb[0].mxu0
    %v4060 = vadd.f32 %v4007, %v4059
    %v4061 = vpop.f32.mrb[0].mxu0
    %v4062 = vadd.f32 %v4009, %v4061
    %v4063 = vpop.f32.mrb[0].mxu0
    %v4064 = vadd.f32 %v4011, %v4063
    %v4065 = vpop.f32.mrb[0].mxu0
    %v4066 = vadd.f32 %v4013, %v4065
    %4067 = vmatprep.mubr.bf16.mxu0 %v1853
    %4068 = vmatmul.mubr.bf16.gmra.mrb[0].mxu0 %v1852
    %v4069 = vpop.f32.mrb[0].mxu0
    %v4070 = vadd.f32 %v4017, %v4069
    %v4071 = vpop.f32.mrb[0].mxu0
    %v4072 = vadd.f32 %v4019, %v4071
    %v4073 = vpop.f32.mrb[0].mxu0
    %v4074 = vadd.f32 %v4021, %v4073
    %v4075 = vpop.f32.mrb[0].mxu0
    %v4076 = vadd.f32 %v4023, %v4075
    %4077 = vdwg.mxu0
    %s4078 = scalar_lea.vmem %s7, 48
    %v4079 = vld [vmem:[%s4078] sm:$0xff]
    %v4080 = vld [vmem:[%s4078 + $0x8] sm:$0xff]
    %v4082 = vsel %vm236, %v4079, 0
    %v4085 = vsel %vm236, %v4080, 0
    %4087 = vmatprep.subr.mxu0 %v4062
    %4088 = vmatpush1.msra.mxu0 %v4060
    %4089 = vmatprep.subr.mxu0 %v4066
    %4090 = vmatpush1.msra.mxu0 %v4064
    %4091 = vmatprep.subr.mxu0 %v4072
    %4092 = vmatpush1.msra.mxu0 %v4070
    %4093 = vmatprep.subr.mxu0 %v4076
    %4094 = vmatpush1.msra.mxu0 %v4074
    %4095 = vmatprep.subr.mxu0 0.0
    %4096 = vmatpush1.msra.mxu0 0.0
    %4097 = vmatprep.subr.mxu0 0.0
    %4098 = vmatpush1.msra.mxu0 0.0
    %4099 = vmatprep.subr.mxu0 0.0
    %4100 = vmatpush1.msra.mxu0 0.0
    %4101 = vmatprep.subr.mxu0 0.0
    %4102 = vmatpush1.msra.mxu0 0.0
    %4103 = vmatprep.subr.mxu0 0.0
    %4104 = vmatpush1.msra.mxu0 0.0
    %4105 = vmatprep.subr.mxu0 0.0
    %4106 = vmatpush1.msra.mxu0 0.0
    %4107 = vmatprep.subr.mxu0 0.0
    %4108 = vmatpush1.msra.mxu0 0.0
    %4109 = vmatprep.subr.mxu0 0.0
    %4110 = vmatpush1.msra.mxu0 0.0
    %4111 = vmatprep.subr.mxu0 0.0
    %4112 = vmatpush1.msra.mxu0 0.0
    %4113 = vmatprep.subr.mxu0 0.0
    %4114 = vmatpush1.msra.mxu0 0.0
    %4115 = vmatprep.subr.mxu0 0.0
    %4116 = vmatpush1.msra.mxu0 0.0
    %4117 = vmatprep.subr.mxu0 0.0
    %4118 = vmatpush1.msra.mxu0 0.0
    %4119 = vmatprep.subr.mxu0 0.0
    %4120 = vmatpush1.msra.mxu0 0.0
    %4121 = vmatprep.subr.mxu0 0.0
    %4122 = vmatpush1.msra.mxu0 0.0
    %4123 = vmatprep.subr.mxu0 0.0
    %4124 = vmatpush1.msra.mxu0 0.0
    %4125 = vmatprep.subr.mxu0 0.0
    %4126 = vmatpush1.msra.mxu0 0.0
    %4127 = vmatprep.subr.mxu0 0.0
    %4128 = vmatpush1.msra.mxu0 0.0
    %4129 = vmatprep.subr.mxu0 0.0
    %4130 = vmatpush1.msra.mxu0 0.0
    %4131 = vmatprep.subr.mxu0 0.0
    %4132 = vmatpush1.msra.mxu0 0.0
    %4133 = vmatprep.subr.mxu0 0.0
    %4134 = vmatpush1.msra.mxu0 0.0
    %4135 = vmatprep.subr.mxu0 0.0
    %4136 = vmatpush1.msra.mxu0 0.0
    %4137 = vmatprep.subr.mxu0 0.0
    %4138 = vmatpush1.msra.mxu0 0.0
    %4139 = vmatprep.subr.mxu0 0.0
    %4140 = vmatpush1.msra.mxu0 0.0
    %4141 = vmatprep.subr.mxu0 0.0
    %4142 = vmatpush1.msra.mxu0 0.0
    %4143 = vmatprep.subr.mxu0 0.0
    %4144 = vmatpush1.msra.mxu0 0.0
    %4145 = vmatprep.subr.mxu0 0.0
    %4146 = vmatpush1.msra.mxu0 0.0
    %4147 = vmatprep.subr.mxu0 0.0
    %4148 = vmatpush1.msra.mxu0 0.0
    %4149 = vmatprep.subr.mxu0 0.0
    %4150 = vmatpush1.msra.mxu0 0.0
    %4151 = vmatprep.mubr.f32.mxu0 0.0
    %4152 = vmatmul.mubr.f32.gmra.mrb[0].mxu0 %v4082
    %v4153 = vpop.f32.mrb[0].mxu0
    %v4154 = vadd.f32 0.0, %v4153
    %v4155 = vpop.f32.mrb[0].mxu0
    %v4156 = vadd.f32 0.0, %v4155
    %4157 = vmatprep.mubr.f32.mxu0 0.0
    %4158 = vmatmul.mubr.f32.gmra.mrb[0].mxu0 %v4085
    %v4159 = vpop.f32.mrb[0].mxu0
    %v4160 = vadd.f32 0.0, %v4159
    %v4161 = vpop.f32.mrb[0].mxu0
    %v4162 = vadd.f32 0.0, %v4161
    %4163 = vdwg.mxu0
    %v4164 = vadd.f32 %v3583, %v4154
    %v4165 = vadd.f32 %v3584, %v4156
    %v4166 = vadd.f32 %v3585, %v4160
    %v4167 = vadd.f32 %v3586, %v4162
    %v4168 = vld [vmem:[#allocation13] sm:$0x3]
    %v4170 = vlaneseq
    %v4171 = vshrl.u32 %v4170, 7
    %v4172 = vsub.s32 0, %v4171
    %v4173 = vrot.slane %v4168, %v4172
    %v4174 = vlaneseq
    %v4175 = vshrl.u32 %v4174, 7
    %v4176 = vsub.s32 1, %v4175
    %v4177 = vrot.slane %v4168, %v4176
    %v4180 = vadd.f32 %v4164, %v4173
    %v4181 = vadd.f32 %v4165, %v4177
    %v4182 = vadd.f32 %v4166, %v4173
    %v4183 = vadd.f32 %v4167, %v4177
    %v4184 = vmax.f32 %v4180, 0.0
    %v4185 = vmax.f32 %v4181, 0.0
    %v4186 = vmax.f32 %v4182, 0.0
    %v4187 = vmax.f32 %v4183, 0.0
    %v4188 = vpack.c.bf16 %v4186, %v4184
    %v4189 = vpack.c.bf16 %v4187, %v4185
    %v4190 = vld [vmem:[#allocation7] sm:$0xf]
    %v4191 = vld [vmem:[#allocation7 + $0x4] sm:$0xf]
    %v4192 = vld [vmem:[#allocation7 + $0x8] sm:$0xf]
    %v4193 = vld [vmem:[#allocation7 + $0xc] sm:$0xf]
    %v4194 = vld [vmem:[#allocation7 + $0x10] sm:$0xf]
    %v4195 = vld [vmem:[#allocation7 + $0x14] sm:$0xf]
    %v4196 = vld [vmem:[#allocation7 + $0x18] sm:$0xf]
    %v4197 = vld [vmem:[#allocation7 + $0x1c] sm:$0xf]
    %v4198 = vld [vmem:[#allocation7 + $0x20] sm:$0xf]
    %v4199 = vld [vmem:[#allocation7 + $0x24] sm:$0xf]
    %v4200 = vld [vmem:[#allocation7 + $0x28] sm:$0xf]
    %v4201 = vld [vmem:[#allocation7 + $0x2c] sm:$0xf]
    %v4202 = vld [vmem:[#allocation7 + $0x30] sm:$0xf]
    %v4203 = vld [vmem:[#allocation7 + $0x34] sm:$0xf]
    %v4204 = vld [vmem:[#allocation7 + $0x38] sm:$0xf]
    %v4205 = vld [vmem:[#allocation7 + $0x3c] sm:$0xf]
    %v4206 = vld [vmem:[#allocation7 + $0x40] sm:$0xf]
    %v4207 = vld [vmem:[#allocation7 + $0x44] sm:$0xf]
    %v4208 = vld [vmem:[#allocation7 + $0x48] sm:$0xf]
    %v4209 = vld [vmem:[#allocation7 + $0x4c] sm:$0xf]
    %v4210 = vld [vmem:[#allocation7 + $0x50] sm:$0xf]
    %v4211 = vld [vmem:[#allocation7 + $0x54] sm:$0xf]
    %v4212 = vld [vmem:[#allocation7 + $0x58] sm:$0xf]
    %v4213 = vld [vmem:[#allocation7 + $0x5c] sm:$0xf]
    %v4214 = vld [vmem:[#allocation7 + $0x60] sm:$0xf]
    %v4215 = vld [vmem:[#allocation7 + $0x64] sm:$0xf]
    %v4216 = vld [vmem:[#allocation7 + $0x68] sm:$0xf]
    %v4217 = vld [vmem:[#allocation7 + $0x6c] sm:$0xf]
    %v4218 = vld [vmem:[#allocation7 + $0x70] sm:$0xf]
    %v4219 = vld [vmem:[#allocation7 + $0x74] sm:$0xf]
    %v4220 = vld [vmem:[#allocation7 + $0x78] sm:$0xf]
    %v4221 = vld [vmem:[#allocation7 + $0x7c] sm:$0xf]
    %v4254 = vunpack.c.l.b16 %v4190
    %v4255 = vunpack.c.l.b16 %v4191
    %v4256 = vunpack.c.l.b16 %v4192
    %v4257 = vunpack.c.l.b16 %v4193
    %v4258 = vunpack.c.l.b16 %v4194
    %v4259 = vunpack.c.l.b16 %v4195
    %v4260 = vunpack.c.l.b16 %v4196
    %v4261 = vunpack.c.l.b16 %v4197
    %v4262 = vunpack.c.l.b16 %v4198
    %v4263 = vunpack.c.l.b16 %v4199
    %v4264 = vunpack.c.l.b16 %v4200
    %v4265 = vunpack.c.l.b16 %v4201
    %v4266 = vunpack.c.l.b16 %v4202
    %v4267 = vunpack.c.l.b16 %v4203
    %v4268 = vunpack.c.l.b16 %v4204
    %v4269 = vunpack.c.l.b16 %v4205
    %v4270 = vunpack.c.l.b16 %v4206
    %v4271 = vunpack.c.l.b16 %v4207
    %v4272 = vunpack.c.l.b16 %v4208
    %v4273 = vunpack.c.l.b16 %v4209
    %v4274 = vunpack.c.l.b16 %v4210
    %v4275 = vunpack.c.l.b16 %v4211
    %v4276 = vunpack.c.l.b16 %v4212
    %v4277 = vunpack.c.l.b16 %v4213
    %v4278 = vunpack.c.l.b16 %v4214
    %v4279 = vunpack.c.l.b16 %v4215
    %v4280 = vunpack.c.l.b16 %v4216
    %v4281 = vunpack.c.l.b16 %v4217
    %v4282 = vunpack.c.l.b16 %v4218
    %v4283 = vunpack.c.l.b16 %v4219
    %v4284 = vunpack.c.l.b16 %v4220
    %v4285 = vunpack.c.l.b16 %v4221
    %v4286 = vpack.c.b16 %v4255, %v4254
    %v4287 = vpack.c.b16 %v4257, %v4256
    %v4288 = vpack.c.b16 %v4259, %v4258
    %v4289 = vpack.c.b16 %v4261, %v4260
    %v4290 = vpack.c.b16 %v4263, %v4262
    %v4291 = vpack.c.b16 %v4265, %v4264
    %v4292 = vpack.c.b16 %v4267, %v4266
    %v4293 = vpack.c.b16 %v4269, %v4268
    %v4294 = vpack.c.b16 %v4271, %v4270
    %v4295 = vpack.c.b16 %v4273, %v4272
    %v4296 = vpack.c.b16 %v4275, %v4274
    %v4297 = vpack.c.b16 %v4277, %v4276
    %v4298 = vpack.c.b16 %v4279, %v4278
    %v4299 = vpack.c.b16 %v4281, %v4280
    %v4300 = vpack.c.b16 %v4283, %v4282
    %v4301 = vpack.c.b16 %v4285, %v4284
    %4318 = vmatprep.subr.bf16.mxu0 0
    %4319 = vmatpush1.bf16.msra.mxu0 %v4286
    %4320 = vmatprep.subr.bf16.mxu0 0
    %4321 = vmatpush1.bf16.msra.mxu0 %v4287
    %4322 = vmatprep.subr.bf16.mxu0 0
    %4323 = vmatpush1.bf16.msra.mxu0 %v4288
    %4324 = vmatprep.subr.bf16.mxu0 0
    %4325 = vmatpush1.bf16.msra.mxu0 %v4289
    %4326 = vmatprep.subr.bf16.mxu0 0
    %4327 = vmatpush1.bf16.msra.mxu0 %v4290
    %4328 = vmatprep.subr.bf16.mxu0 0
    %4329 = vmatpush1.bf16.msra.mxu0 %v4291
    %4330 = vmatprep.subr.bf16.mxu0 0
    %4331 = vmatpush1.bf16.msra.mxu0 %v4292
    %4332 = vmatprep.subr.bf16.mxu0 0
    %4333 = vmatpush1.bf16.msra.mxu0 %v4293
    %4334 = vmatprep.subr.bf16.mxu0 0
    %4335 = vmatpush1.bf16.msra.mxu0 %v4294
    %4336 = vmatprep.subr.bf16.mxu0 0
    %4337 = vmatpush1.bf16.msra.mxu0 %v4295
    %4338 = vmatprep.subr.bf16.mxu0 0
    %4339 = vmatpush1.bf16.msra.mxu0 %v4296
    %4340 = vmatprep.subr.bf16.mxu0 0
    %4341 = vmatpush1.bf16.msra.mxu0 %v4297
    %4342 = vmatprep.subr.bf16.mxu0 0
    %4343 = vmatpush1.bf16.msra.mxu0 %v4298
    %4344 = vmatprep.subr.bf16.mxu0 0
    %4345 = vmatpush1.bf16.msra.mxu0 %v4299
    %4346 = vmatprep.subr.bf16.mxu0 0
    %4347 = vmatpush1.bf16.msra.mxu0 %v4300
    %4348 = vmatprep.subr.bf16.mxu0 0
    %4349 = vmatpush1.bf16.msra.mxu0 %v4301
    %4350 = vmatprep.mubr.bf16.mxu0 %v4189
    %4351 = vmatmul.mubr.bf16.gmra.mrb[0].mxu0 %v4188
    %v4352 = vpop.f32.mrb[0].mxu0
    %v4353 = vadd.f32 0.0, %v4352
    %v4354 = vpop.f32.mrb[0].mxu0
    %v4355 = vpop.f32.mrb[0].mxu0
    %v4356 = vadd.f32 0.0, %v4355
    %v4357 = vpop.f32.mrb[0].mxu0
    %4358 = vdwg.mxu0
    %v4359 = vld [vmem:[#allocation10] sm:$0xff]
    %s4360 = scalar_lea.vmem [#allocation7], 128
    %v4361 = vld [vmem:[%s4360] sm:$0xf]
    %v4362 = vld [vmem:[%s4360 + $0x4] sm:$0xf]
    %v4363 = vld [vmem:[%s4360 + $0x8] sm:$0xf]
    %v4364 = vld [vmem:[%s4360 + $0xc] sm:$0xf]
    %v4365 = vld [vmem:[%s4360 + $0x10] sm:$0xf]
    %v4366 = vld [vmem:[%s4360 + $0x14] sm:$0xf]
    %v4367 = vld [vmem:[%s4360 + $0x18] sm:$0xf]
    %v4368 = vld [vmem:[%s4360 + $0x1c] sm:$0xf]
    %v4369 = vld [vmem:[%s4360 + $0x20] sm:$0xf]
    %v4370 = vld [vmem:[%s4360 + $0x24] sm:$0xf]
    %v4371 = vld [vmem:[%s4360 + $0x28] sm:$0xf]
    %v4372 = vld [vmem:[%s4360 + $0x2c] sm:$0xf]
    %v4373 = vld [vmem:[%s4360 + $0x30] sm:$0xf]
    %v4374 = vld [vmem:[%s4360 + $0x34] sm:$0xf]
    %v4375 = vld [vmem:[%s4360 + $0x38] sm:$0xf]
    %v4376 = vld [vmem:[%s4360 + $0x3c] sm:$0xf]
    %v4377 = vld [vmem:[%s4360 + $0x40] sm:$0xf]
    %v4378 = vld [vmem:[%s4360 + $0x44] sm:$0xf]
    %v4379 = vld [vmem:[%s4360 + $0x48] sm:$0xf]
    %v4380 = vld [vmem:[%s4360 + $0x4c] sm:$0xf]
    %v4381 = vld [vmem:[%s4360 + $0x50] sm:$0xf]
    %v4382 = vld [vmem:[%s4360 + $0x54] sm:$0xf]
    %v4383 = vld [vmem:[%s4360 + $0x58] sm:$0xf]
    %v4384 = vld [vmem:[%s4360 + $0x5c] sm:$0xf]
    %v4385 = vld [vmem:[%s4360 + $0x60] sm:$0xf]
    %v4386 = vld [vmem:[%s4360 + $0x64] sm:$0xf]
    %v4387 = vld [vmem:[%s4360 + $0x68] sm:$0xf]
    %v4388 = vld [vmem:[%s4360 + $0x6c] sm:$0xf]
    %v4389 = vld [vmem:[%s4360 + $0x70] sm:$0xf]
    %v4390 = vld [vmem:[%s4360 + $0x74] sm:$0xf]
    %v4391 = vld [vmem:[%s4360 + $0x78] sm:$0xf]
    %v4392 = vld [vmem:[%s4360 + $0x7c] sm:$0xf]
    %v4425 = vunpack.c.l.b16 %v4361
    %v4426 = vunpack.c.l.b16 %v4362
    %v4427 = vunpack.c.l.b16 %v4363
    %v4428 = vunpack.c.l.b16 %v4364
    %v4429 = vunpack.c.l.b16 %v4365
    %v4430 = vunpack.c.l.b16 %v4366
    %v4431 = vunpack.c.l.b16 %v4367
    %v4432 = vunpack.c.l.b16 %v4368
    %v4433 = vunpack.c.l.b16 %v4369
    %v4434 = vunpack.c.l.b16 %v4370
    %v4435 = vunpack.c.l.b16 %v4371
    %v4436 = vunpack.c.l.b16 %v4372
    %v4437 = vunpack.c.l.b16 %v4373
    %v4438 = vunpack.c.l.b16 %v4374
    %v4439 = vunpack.c.l.b16 %v4375
    %v4440 = vunpack.c.l.b16 %v4376
    %v4441 = vunpack.c.l.b16 %v4377
    %v4442 = vunpack.c.l.b16 %v4378
    %v4443 = vunpack.c.l.b16 %v4379
    %v4444 = vunpack.c.l.b16 %v4380
    %v4445 = vunpack.c.l.b16 %v4381
    %v4446 = vunpack.c.l.b16 %v4382
    %v4447 = vunpack.c.l.b16 %v4383
    %v4448 = vunpack.c.l.b16 %v4384
    %v4449 = vunpack.c.l.b16 %v4385
    %v4450 = vunpack.c.l.b16 %v4386
    %v4451 = vunpack.c.l.b16 %v4387
    %v4452 = vunpack.c.l.b16 %v4388
    %v4453 = vunpack.c.l.b16 %v4389
    %v4454 = vunpack.c.l.b16 %v4390
    %v4455 = vunpack.c.l.b16 %v4391
    %v4456 = vunpack.c.l.b16 %v4392
    %v4457 = vpack.c.b16 %v4426, %v4425
    %v4458 = vpack.c.b16 %v4428, %v4427
    %v4459 = vpack.c.b16 %v4430, %v4429
    %v4460 = vpack.c.b16 %v4432, %v4431
    %v4461 = vpack.c.b16 %v4434, %v4433
    %v4462 = vpack.c.b16 %v4436, %v4435
    %v4463 = vpack.c.b16 %v4438, %v4437
    %v4464 = vpack.c.b16 %v4440, %v4439
    %v4465 = vpack.c.b16 %v4442, %v4441
    %v4466 = vpack.c.b16 %v4444, %v4443
    %v4467 = vpack.c.b16 %v4446, %v4445
    %v4468 = vpack.c.b16 %v4448, %v4447
    %v4469 = vpack.c.b16 %v4450, %v4449
    %v4470 = vpack.c.b16 %v4452, %v4451
    %v4471 = vpack.c.b16 %v4454, %v4453
    %v4472 = vpack.c.b16 %v4456, %v4455
    %4489 = vmatprep.subr.bf16.mxu0 0
    %4490 = vmatpush1.bf16.msra.mxu0 %v4457
    %4491 = vmatprep.subr.bf16.mxu0 0
    %4492 = vmatpush1.bf16.msra.mxu0 %v4458
    %4493 = vmatprep.subr.bf16.mxu0 0
    %4494 = vmatpush1.bf16.msra.mxu0 %v4459
    %4495 = vmatprep.subr.bf16.mxu0 0
    %4496 = vmatpush1.bf16.msra.mxu0 %v4460
    %4497 = vmatprep.subr.bf16.mxu0 0
    %4498 = vmatpush1.bf16.msra.mxu0 %v4461
    %4499 = vmatprep.subr.bf16.mxu0 0
    %4500 = vmatpush1.bf16.msra.mxu0 %v4462
    %4501 = vmatprep.subr.bf16.mxu0 0
    %4502 = vmatpush1.bf16.msra.mxu0 %v4463
    %4503 = vmatprep.subr.bf16.mxu0 0
    %4504 = vmatpush1.bf16.msra.mxu0 %v4464
    %4505 = vmatprep.subr.bf16.mxu0 0
    %4506 = vmatpush1.bf16.msra.mxu0 %v4465
    %4507 = vmatprep.subr.bf16.mxu0 0
    %4508 = vmatpush1.bf16.msra.mxu0 %v4466
    %4509 = vmatprep.subr.bf16.mxu0 0
    %4510 = vmatpush1.bf16.msra.mxu0 %v4467
    %4511 = vmatprep.subr.bf16.mxu0 0
    %4512 = vmatpush1.bf16.msra.mxu0 %v4468
    %4513 = vmatprep.subr.bf16.mxu0 0
    %4514 = vmatpush1.bf16.msra.mxu0 %v4469
    %4515 = vmatprep.subr.bf16.mxu0 0
    %4516 = vmatpush1.bf16.msra.mxu0 %v4470
    %4517 = vmatprep.subr.bf16.mxu0 0
    %4518 = vmatpush1.bf16.msra.mxu0 %v4471
    %4519 = vmatprep.subr.bf16.mxu0 0
    %4520 = vmatpush1.bf16.msra.mxu0 %v4472
    %4521 = vmatprep.mubr.bf16.mxu0 %v4189
    %4522 = vmatmul.mubr.bf16.gmra.mrb[0].mxu0 %v4188
    %v4523 = vpop.f32.mrb[0].mxu0
    %v4524 = vadd.f32 0.0, %v4523
    %v4525 = vpop.f32.mrb[0].mxu0
    %v4526 = vpop.f32.mrb[0].mxu0
    %v4527 = vadd.f32 0.0, %v4526
    %v4528 = vpop.f32.mrb[0].mxu0
    %4529 = vdwg.mxu0
    %s4530 = scalar_lea.vmem [#allocation10], 8
    %v4531 = vld [vmem:[%s4530] sm:$0xff]
    %vm4532 = vcmask 130048
    %v4534 = vsel %vm4532, %v4531, 0
    %4536 = vmatprep.subr.mxu0 0.0
    %4537 = vmatpush1.msra.mxu0 %v4524
    %4538 = vmatprep.subr.mxu0 0.0
    %4539 = vmatpush1.msra.mxu0 %v4527
    %4540 = vmatprep.subr.mxu0 0.0
    %4541 = vmatpush1.msra.mxu0 0.0
    %4542 = vmatprep.subr.mxu0 0.0
    %4543 = vmatpush1.msra.mxu0 0.0
    %4544 = vmatprep.subr.mxu0 0.0
    %4545 = vmatpush1.msra.mxu0 0.0
    %4546 = vmatprep.subr.mxu0 0.0
    %4547 = vmatpush1.msra.mxu0 0.0
    %4548 = vmatprep.subr.mxu0 0.0
    %4549 = vmatpush1.msra.mxu0 0.0
    %4550 = vmatprep.subr.mxu0 0.0
    %4551 = vmatpush1.msra.mxu0 0.0
    %4552 = vmatprep.subr.mxu0 0.0
    %4553 = vmatpush1.msra.mxu0 0.0
    %4554 = vmatprep.subr.mxu0 0.0
    %4555 = vmatpush1.msra.mxu0 0.0
    %4556 = vmatprep.subr.mxu0 0.0
    %4557 = vmatpush1.msra.mxu0 0.0
    %4558 = vmatprep.subr.mxu0 0.0
    %4559 = vmatpush1.msra.mxu0 0.0
    %4560 = vmatprep.subr.mxu0 0.0
    %4561 = vmatpush1.msra.mxu0 0.0
    %4562 = vmatprep.subr.mxu0 0.0
    %4563 = vmatpush1.msra.mxu0 0.0
    %4564 = vmatprep.subr.mxu0 0.0
    %4565 = vmatpush1.msra.mxu0 0.0
    %4566 = vmatprep.subr.mxu0 0.0
    %4567 = vmatpush1.msra.mxu0 0.0
    %4568 = vmatprep.subr.mxu0 0.0
    %4569 = vmatpush1.msra.mxu0 0.0
    %4570 = vmatprep.subr.mxu0 0.0
    %4571 = vmatpush1.msra.mxu0 0.0
    %4572 = vmatprep.subr.mxu0 0.0
    %4573 = vmatpush1.msra.mxu0 0.0
    %4574 = vmatprep.subr.mxu0 0.0
    %4575 = vmatpush1.msra.mxu0 0.0
    %4576 = vmatprep.subr.mxu0 0.0
    %4577 = vmatpush1.msra.mxu0 0.0
    %4578 = vmatprep.subr.mxu0 0.0
    %4579 = vmatpush1.msra.mxu0 0.0
    %4580 = vmatprep.subr.mxu0 0.0
    %4581 = vmatpush1.msra.mxu0 0.0
    %4582 = vmatprep.subr.mxu0 0.0
    %4583 = vmatpush1.msra.mxu0 0.0
    %4584 = vmatprep.subr.mxu0 0.0
    %4585 = vmatpush1.msra.mxu0 0.0
    %4586 = vmatprep.subr.mxu0 0.0
    %4587 = vmatpush1.msra.mxu0 0.0
    %4588 = vmatprep.subr.mxu0 0.0
    %4589 = vmatpush1.msra.mxu0 0.0
    %4590 = vmatprep.subr.mxu0 0.0
    %4591 = vmatpush1.msra.mxu0 0.0
    %4592 = vmatprep.subr.mxu0 0.0
    %4593 = vmatpush1.msra.mxu0 0.0
    %4594 = vmatprep.subr.mxu0 0.0
    %4595 = vmatpush1.msra.mxu0 0.0
    %4596 = vmatprep.subr.mxu0 0.0
    %4597 = vmatpush1.msra.mxu0 0.0
    %4598 = vmatprep.subr.mxu0 0.0
    %4599 = vmatpush1.msra.mxu0 0.0
    %4600 = vmatprep.mubr.f32.mxu0 0.0
    %4601 = vmatmul.mubr.f32.gmra.mrb[0].mxu0 %v4534
    %v4602 = vpop.f32.mrb[0].mxu0
    %v4603 = vadd.f32 0.0, %v4602
    %v4604 = vpop.f32.mrb[0].mxu0
    %4605 = vdwg.mxu0
    %v4607 = vsel %vm4532, %v4359, 0
    %4609 = vmatprep.subr.mxu0 0.0
    %4610 = vmatpush1.msra.mxu0 %v4353
    %4611 = vmatprep.subr.mxu0 0.0
    %4612 = vmatpush1.msra.mxu0 %v4356
    %4613 = vmatprep.subr.mxu0 0.0
    %4614 = vmatpush1.msra.mxu0 0.0
    %4615 = vmatprep.subr.mxu0 0.0
    %4616 = vmatpush1.msra.mxu0 0.0
    %4617 = vmatprep.subr.mxu0 0.0
    %4618 = vmatpush1.msra.mxu0 0.0
    %4619 = vmatprep.subr.mxu0 0.0
    %4620 = vmatpush1.msra.mxu0 0.0
    %4621 = vmatprep.subr.mxu0 0.0
    %4622 = vmatpush1.msra.mxu0 0.0
    %4623 = vmatprep.subr.mxu0 0.0
    %4624 = vmatpush1.msra.mxu0 0.0
    %4625 = vmatprep.subr.mxu0 0.0
    %4626 = vmatpush1.msra.mxu0 0.0
    %4627 = vmatprep.subr.mxu0 0.0
    %4628 = vmatpush1.msra.mxu0 0.0
    %4629 = vmatprep.subr.mxu0 0.0
    %4630 = vmatpush1.msra.mxu0 0.0
    %4631 = vmatprep.subr.mxu0 0.0
    %4632 = vmatpush1.msra.mxu0 0.0
    %4633 = vmatprep.subr.mxu0 0.0
    %4634 = vmatpush1.msra.mxu0 0.0
    %4635 = vmatprep.subr.mxu0 0.0
    %4636 = vmatpush1.msra.mxu0 0.0
    %4637 = vmatprep.subr.mxu0 0.0
    %4638 = vmatpush1.msra.mxu0 0.0
    %4639 = vmatprep.subr.mxu0 0.0
    %4640 = vmatpush1.msra.mxu0 0.0
    %4641 = vmatprep.subr.mxu0 0.0
    %4642 = vmatpush1.msra.mxu0 0.0
    %4643 = vmatprep.subr.mxu0 0.0
    %4644 = vmatpush1.msra.mxu0 0.0
    %4645 = vmatprep.subr.mxu0 0.0
    %4646 = vmatpush1.msra.mxu0 0.0
    %4647 = vmatprep.subr.mxu0 0.0
    %4648 = vmatpush1.msra.mxu0 0.0
    %4649 = vmatprep.subr.mxu0 0.0
    %4650 = vmatpush1.msra.mxu0 0.0
    %4651 = vmatprep.subr.mxu0 0.0
    %4652 = vmatpush1.msra.mxu0 0.0
    %4653 = vmatprep.subr.mxu0 0.0
    %4654 = vmatpush1.msra.mxu0 0.0
    %4655 = vmatprep.subr.mxu0 0.0
    %4656 = vmatpush1.msra.mxu0 0.0
    %4657 = vmatprep.subr.mxu0 0.0
    %4658 = vmatpush1.msra.mxu0 0.0
    %4659 = vmatprep.subr.mxu0 0.0
    %4660 = vmatpush1.msra.mxu0 0.0
    %4661 = vmatprep.subr.mxu0 0.0
    %4662 = vmatpush1.msra.mxu0 0.0
    %4663 = vmatprep.subr.mxu0 0.0
    %4664 = vmatpush1.msra.mxu0 0.0
    %4665 = vmatprep.subr.mxu0 0.0
    %4666 = vmatpush1.msra.mxu0 0.0
    %4667 = vmatprep.subr.mxu0 0.0
    %4668 = vmatpush1.msra.mxu0 0.0
    %4669 = vmatprep.subr.mxu0 0.0
    %4670 = vmatpush1.msra.mxu0 0.0
    %4671 = vmatprep.subr.mxu0 0.0
    %4672 = vmatpush1.msra.mxu0 0.0
    %4673 = vmatprep.mubr.f32.mxu0 0.0
    %4674 = vmatmul.mubr.f32.gmra.mrb[0].mxu0 %v4607
    %v4675 = vpop.f32.mrb[0].mxu0
    %v4676 = vadd.f32 %v4603, %v4675
    %v4677 = vpop.f32.mrb[0].mxu0
    %4678 = vdwg.mxu0
    %s4679 = scalar_lea.vmem [#allocation7], 256
    %v4680 = vld [vmem:[%s4679] sm:$0xf]
    %v4681 = vld [vmem:[%s4679 + $0x4] sm:$0xf]
    %v4682 = vld [vmem:[%s4679 + $0x8] sm:$0xf]
    %v4683 = vld [vmem:[%s4679 + $0xc] sm:$0xf]
    %v4684 = vld [vmem:[%s4679 + $0x10] sm:$0xf]
    %v4685 = vld [vmem:[%s4679 + $0x14] sm:$0xf]
    %v4686 = vld [vmem:[%s4679 + $0x18] sm:$0xf]
    %v4687 = vld [vmem:[%s4679 + $0x1c] sm:$0xf]
    %v4688 = vld [vmem:[%s4679 + $0x20] sm:$0xf]
    %v4689 = vld [vmem:[%s4679 + $0x24] sm:$0xf]
    %v4690 = vld [vmem:[%s4679 + $0x28] sm:$0xf]
    %v4691 = vld [vmem:[%s4679 + $0x2c] sm:$0xf]
    %v4692 = vld [vmem:[%s4679 + $0x30] sm:$0xf]
    %v4693 = vld [vmem:[%s4679 + $0x34] sm:$0xf]
    %v4694 = vld [vmem:[%s4679 + $0x38] sm:$0xf]
    %v4695 = vld [vmem:[%s4679 + $0x3c] sm:$0xf]
    %v4696 = vld [vmem:[%s4679 + $0x40] sm:$0xf]
    %v4697 = vld [vmem:[%s4679 + $0x44] sm:$0xf]
    %v4698 = vld [vmem:[%s4679 + $0x48] sm:$0xf]
    %v4699 = vld [vmem:[%s4679 + $0x4c] sm:$0xf]
    %v4700 = vld [vmem:[%s4679 + $0x50] sm:$0xf]
    %v4701 = vld [vmem:[%s4679 + $0x54] sm:$0xf]
    %v4702 = vld [vmem:[%s4679 + $0x58] sm:$0xf]
    %v4703 = vld [vmem:[%s4679 + $0x5c] sm:$0xf]
    %v4704 = vld [vmem:[%s4679 + $0x60] sm:$0xf]
    %v4705 = vld [vmem:[%s4679 + $0x64] sm:$0xf]
    %v4706 = vld [vmem:[%s4679 + $0x68] sm:$0xf]
    %v4707 = vld [vmem:[%s4679 + $0x6c] sm:$0xf]
    %v4708 = vld [vmem:[%s4679 + $0x70] sm:$0xf]
    %v4709 = vld [vmem:[%s4679 + $0x74] sm:$0xf]
    %v4710 = vld [vmem:[%s4679 + $0x78] sm:$0xf]
    %v4711 = vld [vmem:[%s4679 + $0x7c] sm:$0xf]
    %v4744 = vunpack.c.l.b16 %v4680
    %v4745 = vunpack.c.l.b16 %v4681
    %v4746 = vunpack.c.l.b16 %v4682
    %v4747 = vunpack.c.l.b16 %v4683
    %v4748 = vunpack.c.l.b16 %v4684
    %v4749 = vunpack.c.l.b16 %v4685
    %v4750 = vunpack.c.l.b16 %v4686
    %v4751 = vunpack.c.l.b16 %v4687
    %v4752 = vunpack.c.l.b16 %v4688
    %v4753 = vunpack.c.l.b16 %v4689
    %v4754 = vunpack.c.l.b16 %v4690
    %v4755 = vunpack.c.l.b16 %v4691
    %v4756 = vunpack.c.l.b16 %v4692
    %v4757 = vunpack.c.l.b16 %v4693
    %v4758 = vunpack.c.l.b16 %v4694
    %v4759 = vunpack.c.l.b16 %v4695
    %v4760 = vunpack.c.l.b16 %v4696
    %v4761 = vunpack.c.l.b16 %v4697
    %v4762 = vunpack.c.l.b16 %v4698
    %v4763 = vunpack.c.l.b16 %v4699
    %v4764 = vunpack.c.l.b16 %v4700
    %v4765 = vunpack.c.l.b16 %v4701
    %v4766 = vunpack.c.l.b16 %v4702
    %v4767 = vunpack.c.l.b16 %v4703
    %v4768 = vunpack.c.l.b16 %v4704
    %v4769 = vunpack.c.l.b16 %v4705
    %v4770 = vunpack.c.l.b16 %v4706
    %v4771 = vunpack.c.l.b16 %v4707
    %v4772 = vunpack.c.l.b16 %v4708
    %v4773 = vunpack.c.l.b16 %v4709
    %v4774 = vunpack.c.l.b16 %v4710
    %v4775 = vunpack.c.l.b16 %v4711
    %v4776 = vpack.c.b16 %v4745, %v4744
    %v4777 = vpack.c.b16 %v4747, %v4746
    %v4778 = vpack.c.b16 %v4749, %v4748
    %v4779 = vpack.c.b16 %v4751, %v4750
    %v4780 = vpack.c.b16 %v4753, %v4752
    %v4781 = vpack.c.b16 %v4755, %v4754
    %v4782 = vpack.c.b16 %v4757, %v4756
    %v4783 = vpack.c.b16 %v4759, %v4758
    %v4784 = vpack.c.b16 %v4761, %v4760
    %v4785 = vpack.c.b16 %v4763, %v4762
    %v4786 = vpack.c.b16 %v4765, %v4764
    %v4787 = vpack.c.b16 %v4767, %v4766
    %v4788 = vpack.c.b16 %v4769, %v4768
    %v4789 = vpack.c.b16 %v4771, %v4770
    %v4790 = vpack.c.b16 %v4773, %v4772
    %v4791 = vpack.c.b16 %v4775, %v4774
    %4808 = vmatprep.subr.bf16.mxu0 0
    %4809 = vmatpush1.bf16.msra.mxu0 %v4776
    %4810 = vmatprep.subr.bf16.mxu0 0
    %4811 = vmatpush1.bf16.msra.mxu0 %v4777
    %4812 = vmatprep.subr.bf16.mxu0 0
    %4813 = vmatpush1.bf16.msra.mxu0 %v4778
    %4814 = vmatprep.subr.bf16.mxu0 0
    %4815 = vmatpush1.bf16.msra.mxu0 %v4779
    %4816 = vmatprep.subr.bf16.mxu0 0
    %4817 = vmatpush1.bf16.msra.mxu0 %v4780
    %4818 = vmatprep.subr.bf16.mxu0 0
    %4819 = vmatpush1.bf16.msra.mxu0 %v4781
    %4820 = vmatprep.subr.bf16.mxu0 0
    %4821 = vmatpush1.bf16.msra.mxu0 %v4782
    %4822 = vmatprep.subr.bf16.mxu0 0
    %4823 = vmatpush1.bf16.msra.mxu0 %v4783
    %4824 = vmatprep.subr.bf16.mxu0 0
    %4825 = vmatpush1.bf16.msra.mxu0 %v4784
    %4826 = vmatprep.subr.bf16.mxu0 0
    %4827 = vmatpush1.bf16.msra.mxu0 %v4785
    %4828 = vmatprep.subr.bf16.mxu0 0
    %4829 = vmatpush1.bf16.msra.mxu0 %v4786
    %4830 = vmatprep.subr.bf16.mxu0 0
    %4831 = vmatpush1.bf16.msra.mxu0 %v4787
    %4832 = vmatprep.subr.bf16.mxu0 0
    %4833 = vmatpush1.bf16.msra.mxu0 %v4788
    %4834 = vmatprep.subr.bf16.mxu0 0
    %4835 = vmatpush1.bf16.msra.mxu0 %v4789
    %4836 = vmatprep.subr.bf16.mxu0 0
    %4837 = vmatpush1.bf16.msra.mxu0 %v4790
    %4838 = vmatprep.subr.bf16.mxu0 0
    %4839 = vmatpush1.bf16.msra.mxu0 %v4791
    %4840 = vmatprep.mubr.bf16.mxu0 %v4189
    %4841 = vmatmul.mubr.bf16.gmra.mrb[0].mxu0 %v4188
    %v4842 = vpop.f32.mrb[0].mxu0
    %v4843 = vadd.f32 0.0, %v4842
    %v4844 = vpop.f32.mrb[0].mxu0
    %v4845 = vpop.f32.mrb[0].mxu0
    %v4846 = vadd.f32 0.0, %v4845
    %v4847 = vpop.f32.mrb[0].mxu0
    %4848 = vdwg.mxu0
    %s4849 = scalar_lea.vmem [#allocation10], 16
    %v4850 = vld [vmem:[%s4849] sm:$0xff]
    %v4852 = vsel %vm4532, %v4850, 0
    %4854 = vmatprep.subr.mxu0 0.0
    %4855 = vmatpush1.msra.mxu0 %v4843
    %4856 = vmatprep.subr.mxu0 0.0
    %4857 = vmatpush1.msra.mxu0 %v4846
    %4858 = vmatprep.subr.mxu0 0.0
    %4859 = vmatpush1.msra.mxu0 0.0
    %4860 = vmatprep.subr.mxu0 0.0
    %4861 = vmatpush1.msra.mxu0 0.0
    %4862 = vmatprep.subr.mxu0 0.0
    %4863 = vmatpush1.msra.mxu0 0.0
    %4864 = vmatprep.subr.mxu0 0.0
    %4865 = vmatpush1.msra.mxu0 0.0
    %4866 = vmatprep.subr.mxu0 0.0
    %4867 = vmatpush1.msra.mxu0 0.0
    %4868 = vmatprep.subr.mxu0 0.0
    %4869 = vmatpush1.msra.mxu0 0.0
    %4870 = vmatprep.subr.mxu0 0.0
    %4871 = vmatpush1.msra.mxu0 0.0
    %4872 = vmatprep.subr.mxu0 0.0
    %4873 = vmatpush1.msra.mxu0 0.0
    %4874 = vmatprep.subr.mxu0 0.0
    %4875 = vmatpush1.msra.mxu0 0.0
    %4876 = vmatprep.subr.mxu0 0.0
    %4877 = vmatpush1.msra.mxu0 0.0
    %4878 = vmatprep.subr.mxu0 0.0
    %4879 = vmatpush1.msra.mxu0 0.0
    %4880 = vmatprep.subr.mxu0 0.0
    %4881 = vmatpush1.msra.mxu0 0.0
    %4882 = vmatprep.subr.mxu0 0.0
    %4883 = vmatpush1.msra.mxu0 0.0
    %4884 = vmatprep.subr.mxu0 0.0
    %4885 = vmatpush1.msra.mxu0 0.0
    %4886 = vmatprep.subr.mxu0 0.0
    %4887 = vmatpush1.msra.mxu0 0.0
    %4888 = vmatprep.subr.mxu0 0.0
    %4889 = vmatpush1.msra.mxu0 0.0
    %4890 = vmatprep.subr.mxu0 0.0
    %4891 = vmatpush1.msra.mxu0 0.0
    %4892 = vmatprep.subr.mxu0 0.0
    %4893 = vmatpush1.msra.mxu0 0.0
    %4894 = vmatprep.subr.mxu0 0.0
    %4895 = vmatpush1.msra.mxu0 0.0
    %4896 = vmatprep.subr.mxu0 0.0
    %4897 = vmatpush1.msra.mxu0 0.0
    %4898 = vmatprep.subr.mxu0 0.0
    %4899 = vmatpush1.msra.mxu0 0.0
    %4900 = vmatprep.subr.mxu0 0.0
    %4901 = vmatpush1.msra.mxu0 0.0
    %4902 = vmatprep.subr.mxu0 0.0
    %4903 = vmatpush1.msra.mxu0 0.0
    %4904 = vmatprep.subr.mxu0 0.0
    %4905 = vmatpush1.msra.mxu0 0.0
    %4906 = vmatprep.subr.mxu0 0.0
    %4907 = vmatpush1.msra.mxu0 0.0
    %4908 = vmatprep.subr.mxu0 0.0
    %4909 = vmatpush1.msra.mxu0 0.0
    %4910 = vmatprep.subr.mxu0 0.0
    %4911 = vmatpush1.msra.mxu0 0.0
    %4912 = vmatprep.subr.mxu0 0.0
    %4913 = vmatpush1.msra.mxu0 0.0
    %4914 = vmatprep.subr.mxu0 0.0
    %4915 = vmatpush1.msra.mxu0 0.0
    %4916 = vmatprep.subr.mxu0 0.0
    %4917 = vmatpush1.msra.mxu0 0.0
    %4918 = vmatprep.mubr.f32.mxu0 0.0
    %4919 = vmatmul.mubr.f32.gmra.mrb[0].mxu0 %v4852
    %v4920 = vpop.f32.mrb[0].mxu0
    %v4921 = vadd.f32 0.0, %v4920
    %v4922 = vpop.f32.mrb[0].mxu0
    %4923 = vdwg.mxu0
    %v4924 = vadd.f32 %v4676, %v4921
    %s4925 = scalar_lea.vmem [#allocation7], 384
    %v4926 = vld [vmem:[%s4925] sm:$0xf]
    %v4927 = vld [vmem:[%s4925 + $0x4] sm:$0xf]
    %v4928 = vld [vmem:[%s4925 + $0x8] sm:$0xf]
    %v4929 = vld [vmem:[%s4925 + $0xc] sm:$0xf]
    %v4930 = vld [vmem:[%s4925 + $0x10] sm:$0xf]
    %v4931 = vld [vmem:[%s4925 + $0x14] sm:$0xf]
    %v4932 = vld [vmem:[%s4925 + $0x18] sm:$0xf]
    %v4933 = vld [vmem:[%s4925 + $0x1c] sm:$0xf]
    %v4934 = vld [vmem:[%s4925 + $0x20] sm:$0xf]
    %v4935 = vld [vmem:[%s4925 + $0x24] sm:$0xf]
    %v4936 = vld [vmem:[%s4925 + $0x28] sm:$0xf]
    %v4937 = vld [vmem:[%s4925 + $0x2c] sm:$0xf]
    %v4938 = vld [vmem:[%s4925 + $0x30] sm:$0xf]
    %v4939 = vld [vmem:[%s4925 + $0x34] sm:$0xf]
    %v4940 = vld [vmem:[%s4925 + $0x38] sm:$0xf]
    %v4941 = vld [vmem:[%s4925 + $0x3c] sm:$0xf]
    %v4942 = vld [vmem:[%s4925 + $0x40] sm:$0xf]
    %v4943 = vld [vmem:[%s4925 + $0x44] sm:$0xf]
    %v4944 = vld [vmem:[%s4925 + $0x48] sm:$0xf]
    %v4945 = vld [vmem:[%s4925 + $0x4c] sm:$0xf]
    %v4946 = vld [vmem:[%s4925 + $0x50] sm:$0xf]
    %v4947 = vld [vmem:[%s4925 + $0x54] sm:$0xf]
    %v4948 = vld [vmem:[%s4925 + $0x58] sm:$0xf]
    %v4949 = vld [vmem:[%s4925 + $0x5c] sm:$0xf]
    %v4950 = vld [vmem:[%s4925 + $0x60] sm:$0xf]
    %v4951 = vld [vmem:[%s4925 + $0x64] sm:$0xf]
    %v4952 = vld [vmem:[%s4925 + $0x68] sm:$0xf]
    %v4953 = vld [vmem:[%s4925 + $0x6c] sm:$0xf]
    %v4954 = vld [vmem:[%s4925 + $0x70] sm:$0xf]
    %v4955 = vld [vmem:[%s4925 + $0x74] sm:$0xf]
    %v4956 = vld [vmem:[%s4925 + $0x78] sm:$0xf]
    %v4957 = vld [vmem:[%s4925 + $0x7c] sm:$0xf]
    %v4990 = vunpack.c.l.b16 %v4926
    %v4991 = vunpack.c.l.b16 %v4927
    %v4992 = vunpack.c.l.b16 %v4928
    %v4993 = vunpack.c.l.b16 %v4929
    %v4994 = vunpack.c.l.b16 %v4930
    %v4995 = vunpack.c.l.b16 %v4931
    %v4996 = vunpack.c.l.b16 %v4932
    %v4997 = vunpack.c.l.b16 %v4933
    %v4998 = vunpack.c.l.b16 %v4934
    %v4999 = vunpack.c.l.b16 %v4935
    %v5000 = vunpack.c.l.b16 %v4936
    %v5001 = vunpack.c.l.b16 %v4937
    %v5002 = vunpack.c.l.b16 %v4938
    %v5003 = vunpack.c.l.b16 %v4939
    %v5004 = vunpack.c.l.b16 %v4940
    %v5005 = vunpack.c.l.b16 %v4941
    %v5006 = vunpack.c.l.b16 %v4942
    %v5007 = vunpack.c.l.b16 %v4943
    %v5008 = vunpack.c.l.b16 %v4944
    %v5009 = vunpack.c.l.b16 %v4945
    %v5010 = vunpack.c.l.b16 %v4946
    %v5011 = vunpack.c.l.b16 %v4947
    %v5012 = vunpack.c.l.b16 %v4948
    %v5013 = vunpack.c.l.b16 %v4949
    %v5014 = vunpack.c.l.b16 %v4950
    %v5015 = vunpack.c.l.b16 %v4951
    %v5016 = vunpack.c.l.b16 %v4952
    %v5017 = vunpack.c.l.b16 %v4953
    %v5018 = vunpack.c.l.b16 %v4954
    %v5019 = vunpack.c.l.b16 %v4955
    %v5020 = vunpack.c.l.b16 %v4956
    %v5021 = vunpack.c.l.b16 %v4957
    %v5022 = vpack.c.b16 %v4991, %v4990
    %v5023 = vpack.c.b16 %v4993, %v4992
    %v5024 = vpack.c.b16 %v4995, %v4994
    %v5025 = vpack.c.b16 %v4997, %v4996
    %v5026 = vpack.c.b16 %v4999, %v4998
    %v5027 = vpack.c.b16 %v5001, %v5000
    %v5028 = vpack.c.b16 %v5003, %v5002
    %v5029 = vpack.c.b16 %v5005, %v5004
    %v5030 = vpack.c.b16 %v5007, %v5006
    %v5031 = vpack.c.b16 %v5009, %v5008
    %v5032 = vpack.c.b16 %v5011, %v5010
    %v5033 = vpack.c.b16 %v5013, %v5012
    %v5034 = vpack.c.b16 %v5015, %v5014
    %v5035 = vpack.c.b16 %v5017, %v5016
    %v5036 = vpack.c.b16 %v5019, %v5018
    %v5037 = vpack.c.b16 %v5021, %v5020
    %5054 = vmatprep.subr.bf16.mxu0 0
    %5055 = vmatpush1.bf16.msra.mxu0 %v5022
    %5056 = vmatprep.subr.bf16.mxu0 0
    %5057 = vmatpush1.bf16.msra.mxu0 %v5023
    %5058 = vmatprep.subr.bf16.mxu0 0
    %5059 = vmatpush1.bf16.msra.mxu0 %v5024
    %5060 = vmatprep.subr.bf16.mxu0 0
    %5061 = vmatpush1.bf16.msra.mxu0 %v5025
    %5062 = vmatprep.subr.bf16.mxu0 0
    %5063 = vmatpush1.bf16.msra.mxu0 %v5026
    %5064 = vmatprep.subr.bf16.mxu0 0
    %5065 = vmatpush1.bf16.msra.mxu0 %v5027
    %5066 = vmatprep.subr.bf16.mxu0 0
    %5067 = vmatpush1.bf16.msra.mxu0 %v5028
    %5068 = vmatprep.subr.bf16.mxu0 0
    %5069 = vmatpush1.bf16.msra.mxu0 %v5029
    %5070 = vmatprep.subr.bf16.mxu0 0
    %5071 = vmatpush1.bf16.msra.mxu0 %v5030
    %5072 = vmatprep.subr.bf16.mxu0 0
    %5073 = vmatpush1.bf16.msra.mxu0 %v5031
    %5074 = vmatprep.subr.bf16.mxu0 0
    %5075 = vmatpush1.bf16.msra.mxu0 %v5032
    %5076 = vmatprep.subr.bf16.mxu0 0
    %5077 = vmatpush1.bf16.msra.mxu0 %v5033
    %5078 = vmatprep.subr.bf16.mxu0 0
    %5079 = vmatpush1.bf16.msra.mxu0 %v5034
    %5080 = vmatprep.subr.bf16.mxu0 0
    %5081 = vmatpush1.bf16.msra.mxu0 %v5035
    %5082 = vmatprep.subr.bf16.mxu0 0
    %5083 = vmatpush1.bf16.msra.mxu0 %v5036
    %5084 = vmatprep.subr.bf16.mxu0 0
    %5085 = vmatpush1.bf16.msra.mxu0 %v5037
    %5086 = vmatprep.mubr.bf16.mxu0 %v4189
    %5087 = vmatmul.mubr.bf16.gmra.mrb[0].mxu0 %v4188
    %v5088 = vpop.f32.mrb[0].mxu0
    %v5089 = vadd.f32 0.0, %v5088
    %v5090 = vpop.f32.mrb[0].mxu0
    %v5091 = vpop.f32.mrb[0].mxu0
    %v5092 = vadd.f32 0.0, %v5091
    %v5093 = vpop.f32.mrb[0].mxu0
    %5094 = vdwg.mxu0
    %s5095 = scalar_lea.vmem [#allocation10], 24
    %v5096 = vld [vmem:[%s5095] sm:$0xff]
    %v5098 = vsel %vm4532, %v5096, 0
    %5100 = vmatprep.subr.mxu0 0.0
    %5101 = vmatpush1.msra.mxu0 %v5089
    %5102 = vmatprep.subr.mxu0 0.0
    %5103 = vmatpush1.msra.mxu0 %v5092
    %5104 = vmatprep.subr.mxu0 0.0
    %5105 = vmatpush1.msra.mxu0 0.0
    %5106 = vmatprep.subr.mxu0 0.0
    %5107 = vmatpush1.msra.mxu0 0.0
    %5108 = vmatprep.subr.mxu0 0.0
    %5109 = vmatpush1.msra.mxu0 0.0
    %5110 = vmatprep.subr.mxu0 0.0
    %5111 = vmatpush1.msra.mxu0 0.0
    %5112 = vmatprep.subr.mxu0 0.0
    %5113 = vmatpush1.msra.mxu0 0.0
    %5114 = vmatprep.subr.mxu0 0.0
    %5115 = vmatpush1.msra.mxu0 0.0
    %5116 = vmatprep.subr.mxu0 0.0
    %5117 = vmatpush1.msra.mxu0 0.0
    %5118 = vmatprep.subr.mxu0 0.0
    %5119 = vmatpush1.msra.mxu0 0.0
    %5120 = vmatprep.subr.mxu0 0.0
    %5121 = vmatpush1.msra.mxu0 0.0
    %5122 = vmatprep.subr.mxu0 0.0
    %5123 = vmatpush1.msra.mxu0 0.0
    %5124 = vmatprep.subr.mxu0 0.0
    %5125 = vmatpush1.msra.mxu0 0.0
    %5126 = vmatprep.subr.mxu0 0.0
    %5127 = vmatpush1.msra.mxu0 0.0
    %5128 = vmatprep.subr.mxu0 0.0
    %5129 = vmatpush1.msra.mxu0 0.0
    %5130 = vmatprep.subr.mxu0 0.0
    %5131 = vmatpush1.msra.mxu0 0.0
    %5132 = vmatprep.subr.mxu0 0.0
    %5133 = vmatpush1.msra.mxu0 0.0
    %5134 = vmatprep.subr.mxu0 0.0
    %5135 = vmatpush1.msra.mxu0 0.0
    %5136 = vmatprep.subr.mxu0 0.0
    %5137 = vmatpush1.msra.mxu0 0.0
    %5138 = vmatprep.subr.mxu0 0.0
    %5139 = vmatpush1.msra.mxu0 0.0
    %5140 = vmatprep.subr.mxu0 0.0
    %5141 = vmatpush1.msra.mxu0 0.0
    %5142 = vmatprep.subr.mxu0 0.0
    %5143 = vmatpush1.msra.mxu0 0.0
    %5144 = vmatprep.subr.mxu0 0.0
    %5145 = vmatpush1.msra.mxu0 0.0
    %5146 = vmatprep.subr.mxu0 0.0
    %5147 = vmatpush1.msra.mxu0 0.0
    %5148 = vmatprep.subr.mxu0 0.0
    %5149 = vmatpush1.msra.mxu0 0.0
    %5150 = vmatprep.subr.mxu0 0.0
    %5151 = vmatpush1.msra.mxu0 0.0
    %5152 = vmatprep.subr.mxu0 0.0
    %5153 = vmatpush1.msra.mxu0 0.0
    %5154 = vmatprep.subr.mxu0 0.0
    %5155 = vmatpush1.msra.mxu0 0.0
    %5156 = vmatprep.subr.mxu0 0.0
    %5157 = vmatpush1.msra.mxu0 0.0
    %5158 = vmatprep.subr.mxu0 0.0
    %5159 = vmatpush1.msra.mxu0 0.0
    %5160 = vmatprep.subr.mxu0 0.0
    %5161 = vmatpush1.msra.mxu0 0.0
    %5162 = vmatprep.subr.mxu0 0.0
    %5163 = vmatpush1.msra.mxu0 0.0
    %5164 = vmatprep.mubr.f32.mxu0 0.0
    %5165 = vmatmul.mubr.f32.gmra.mrb[0].mxu0 %v5098
    %v5166 = vpop.f32.mrb[0].mxu0
    %v5167 = vadd.f32 0.0, %v5166
    %v5168 = vpop.f32.mrb[0].mxu0
    %5169 = vdwg.mxu0
    %v5170 = vadd.f32 %v4924, %v5167
    %v5171 = vld [vmem:[%s11] sm:$0x1]
    %v5173 = vlaneseq
    %v5174 = vshrl.u32 %v5173, 7
    %v5175 = vsub.s32 0, %v5174
    %v5176 = vrot.slane %v5171, %v5175
    %v5178 = vadd.f32 %v5170, %v5176
    %v5179 = vmax.f32 %v5178, 0.0
    %v5180 = vpack.c.bf16 %v5179, %v5179
    %v5181 = vld [vmem:[#allocation9] sm:$0xff]
    %v5182 = vld [vmem:[#allocation9 + $0x8] sm:$0xff]
    %v5183 = vld [vmem:[#allocation9 + $0x10] sm:$0xff]
    %v5184 = vld [vmem:[#allocation9 + $0x18] sm:$0xff]
    %v5185 = vld [vmem:[#allocation9 + $0x20] sm:$0xff]
    %v5186 = vld [vmem:[#allocation9 + $0x28] sm:$0xff]
    %v5187 = vld [vmem:[#allocation9 + $0x30] sm:$0xff]
    %v5188 = vld [vmem:[#allocation9 + $0x38] sm:$0xff]
    %v5189 = vld [vmem:[#allocation9 + $0x40] sm:$0xff]
    %v5190 = vld [vmem:[#allocation9 + $0x48] sm:$0xff]
    %v5191 = vld [vmem:[#allocation9 + $0x50] sm:$0xff]
    %v5192 = vld [vmem:[#allocation9 + $0x58] sm:$0xff]
    %v5193 = vld [vmem:[#allocation9 + $0x60] sm:$0xff]
    %v5194 = vld [vmem:[#allocation9 + $0x68] sm:$0xff]
    %v5195 = vld [vmem:[#allocation9 + $0x70] sm:$0xff]
    %v5196 = vld [vmem:[#allocation9 + $0x78] sm:$0xff]
    %s5197 = scalar_lea.vmem [#allocation9], 128
    %v5198 = vld [vmem:[%s5197] sm:$0xff]
    %v5199 = vld [vmem:[%s5197 + $0x8] sm:$0xff]
    %v5200 = vld [vmem:[%s5197 + $0x10] sm:$0xff]
    %v5201 = vld [vmem:[%s5197 + $0x18] sm:$0xff]
    %v5202 = vld [vmem:[%s5197 + $0x20] sm:$0xff]
    %v5203 = vld [vmem:[%s5197 + $0x28] sm:$0xff]
    %v5204 = vld [vmem:[%s5197 + $0x30] sm:$0xff]
    %v5205 = vld [vmem:[%s5197 + $0x38] sm:$0xff]
    %v5206 = vld [vmem:[%s5197 + $0x40] sm:$0xff]
    %v5207 = vld [vmem:[%s5197 + $0x48] sm:$0xff]
    %v5208 = vld [vmem:[%s5197 + $0x50] sm:$0xff]
    %v5209 = vld [vmem:[%s5197 + $0x58] sm:$0xff]
    %v5210 = vld [vmem:[%s5197 + $0x60] sm:$0xff]
    %v5211 = vld [vmem:[%s5197 + $0x68] sm:$0xff]
    %v5212 = vld [vmem:[%s5197 + $0x70] sm:$0xff]
    %v5213 = vld [vmem:[%s5197 + $0x78] sm:$0xff]
    %v5215 = vrot.slane %v5180, 1
    %v5233 = vunpack.c.l.b16 %v5198
    %v5234 = vunpack.c.h.b16 %v5198
    %v5235 = vunpack.c.l.b16 %v5199
    %v5236 = vunpack.c.h.b16 %v5199
    %v5237 = vunpack.c.l.b16 %v5200
    %v5238 = vunpack.c.h.b16 %v5200
    %v5239 = vunpack.c.l.b16 %v5201
    %v5240 = vunpack.c.h.b16 %v5201
    %v5241 = vunpack.c.l.b16 %v5202
    %v5242 = vunpack.c.h.b16 %v5202
    %v5243 = vunpack.c.l.b16 %v5203
    %v5244 = vunpack.c.h.b16 %v5203
    %v5245 = vunpack.c.l.b16 %v5204
    %v5246 = vunpack.c.h.b16 %v5204
    %v5247 = vunpack.c.l.b16 %v5205
    %v5248 = vunpack.c.h.b16 %v5205
    %v5249 = vunpack.c.l.b16 %v5206
    %v5250 = vunpack.c.h.b16 %v5206
    %v5251 = vunpack.c.l.b16 %v5207
    %v5252 = vunpack.c.h.b16 %v5207
    %v5253 = vunpack.c.l.b16 %v5208
    %v5254 = vunpack.c.h.b16 %v5208
    %v5255 = vunpack.c.l.b16 %v5209
    %v5256 = vunpack.c.h.b16 %v5209
    %v5257 = vunpack.c.l.b16 %v5210
    %v5258 = vunpack.c.h.b16 %v5210
    %v5259 = vunpack.c.l.b16 %v5211
    %v5260 = vunpack.c.h.b16 %v5211
    %v5261 = vunpack.c.l.b16 %v5212
    %v5262 = vunpack.c.h.b16 %v5212
    %v5263 = vunpack.c.l.b16 %v5213
    %v5264 = vunpack.c.h.b16 %v5213
    %v5265 = vpack.c.b16 %v5235, %v5233
    %v5266 = vpack.c.b16 %v5236, %v5234
    %v5267 = vpack.c.b16 %v5239, %v5237
    %v5268 = vpack.c.b16 %v5240, %v5238
    %v5269 = vpack.c.b16 %v5243, %v5241
    %v5270 = vpack.c.b16 %v5244, %v5242
    %v5271 = vpack.c.b16 %v5247, %v5245
    %v5272 = vpack.c.b16 %v5248, %v5246
    %v5273 = vpack.c.b16 %v5251, %v5249
    %v5274 = vpack.c.b16 %v5252, %v5250
    %v5275 = vpack.c.b16 %v5255, %v5253
    %v5276 = vpack.c.b16 %v5256, %v5254
    %v5277 = vpack.c.b16 %v5259, %v5257
    %v5278 = vpack.c.b16 %v5260, %v5258
    %v5279 = vpack.c.b16 %v5263, %v5261
    %v5280 = vpack.c.b16 %v5264, %v5262
    %5297 = vmatprep.subr.bf16.mxu0 %v5266
    %5298 = vmatpush1.bf16.msra.mxu0 %v5265
    %5299 = vmatprep.subr.bf16.mxu0 %v5268
    %5300 = vmatpush1.bf16.msra.mxu0 %v5267
    %5301 = vmatprep.subr.bf16.mxu0 %v5270
    %5302 = vmatpush1.bf16.msra.mxu0 %v5269
    %5303 = vmatprep.subr.bf16.mxu0 %v5272
    %5304 = vmatpush1.bf16.msra.mxu0 %v5271
    %5305 = vmatprep.subr.bf16.mxu0 %v5274
    %5306 = vmatpush1.bf16.msra.mxu0 %v5273
    %5307 = vmatprep.subr.bf16.mxu0 %v5276
    %5308 = vmatpush1.bf16.msra.mxu0 %v5275
    %5309 = vmatprep.subr.bf16.mxu0 %v5278
    %5310 = vmatpush1.bf16.msra.mxu0 %v5277
    %5311 = vmatprep.subr.bf16.mxu0 %v5280
    %5312 = vmatpush1.bf16.msra.mxu0 %v5279
    %5313 = vmatprep.subr.bf16.mxu0 0
    %5314 = vmatpush1.bf16.msra.mxu0 0
    %5315 = vmatprep.subr.bf16.mxu0 0
    %5316 = vmatpush1.bf16.msra.mxu0 0
    %5317 = vmatprep.subr.bf16.mxu0 0
    %5318 = vmatpush1.bf16.msra.mxu0 0
    %5319 = vmatprep.subr.bf16.mxu0 0
    %5320 = vmatpush1.bf16.msra.mxu0 0
    %5321 = vmatprep.subr.bf16.mxu0 0
    %5322 = vmatpush1.bf16.msra.mxu0 0
    %5323 = vmatprep.subr.bf16.mxu0 0
    %5324 = vmatpush1.bf16.msra.mxu0 0
    %5325 = vmatprep.subr.bf16.mxu0 0
    %5326 = vmatpush1.bf16.msra.mxu0 0
    %5327 = vmatprep.subr.bf16.mxu0 0
    %5328 = vmatpush1.bf16.msra.mxu0 0
    %5329 = vmatprep.mubr.bf16.mxu0 0
    %5330 = vmatmul.mubr.bf16.gmra.mrb[0].mxu0 %v5215
    %v5331 = vpop.f32.mrb[0].mxu0
    %v5332 = vadd.f32 0.0, %v5331
    %v5333 = vpop.f32.mrb[0].mxu0
    %v5334 = vadd.f32 0.0, %v5333
    %v5335 = vpop.f32.mrb[0].mxu0
    %v5336 = vpop.f32.mrb[0].mxu0
    %5337 = vdwg.mxu0
    %v5354 = vunpack.c.l.b16 %v5181
    %v5355 = vunpack.c.h.b16 %v5181
    %v5356 = vunpack.c.l.b16 %v5182
    %v5357 = vunpack.c.h.b16 %v5182
    %v5358 = vunpack.c.l.b16 %v5183
    %v5359 = vunpack.c.h.b16 %v5183
    %v5360 = vunpack.c.l.b16 %v5184
    %v5361 = vunpack.c.h.b16 %v5184
    %v5362 = vunpack.c.l.b16 %v5185
    %v5363 = vunpack.c.h.b16 %v5185
    %v5364 = vunpack.c.l.b16 %v5186
    %v5365 = vunpack.c.h.b16 %v5186
    %v5366 = vunpack.c.l.b16 %v5187
    %v5367 = vunpack.c.h.b16 %v5187
    %v5368 = vunpack.c.l.b16 %v5188
    %v5369 = vunpack.c.h.b16 %v5188
    %v5370 = vunpack.c.l.b16 %v5189
    %v5371 = vunpack.c.h.b16 %v5189
    %v5372 = vunpack.c.l.b16 %v5190
    %v5373 = vunpack.c.h.b16 %v5190
    %v5374 = vunpack.c.l.b16 %v5191
    %v5375 = vunpack.c.h.b16 %v5191
    %v5376 = vunpack.c.l.b16 %v5192
    %v5377 = vunpack.c.h.b16 %v5192
    %v5378 = vunpack.c.l.b16 %v5193
    %v5379 = vunpack.c.h.b16 %v5193
    %v5380 = vunpack.c.l.b16 %v5194
    %v5381 = vunpack.c.h.b16 %v5194
    %v5382 = vunpack.c.l.b16 %v5195
    %v5383 = vunpack.c.h.b16 %v5195
    %v5384 = vunpack.c.l.b16 %v5196
    %v5385 = vunpack.c.h.b16 %v5196
    %v5386 = vpack.c.b16 %v5356, %v5354
    %v5387 = vpack.c.b16 %v5357, %v5355
    %v5388 = vpack.c.b16 %v5360, %v5358
    %v5389 = vpack.c.b16 %v5361, %v5359
    %v5390 = vpack.c.b16 %v5364, %v5362
    %v5391 = vpack.c.b16 %v5365, %v5363
    %v5392 = vpack.c.b16 %v5368, %v5366
    %v5393 = vpack.c.b16 %v5369, %v5367
    %v5394 = vpack.c.b16 %v5372, %v5370
    %v5395 = vpack.c.b16 %v5373, %v5371
    %v5396 = vpack.c.b16 %v5376, %v5374
    %v5397 = vpack.c.b16 %v5377, %v5375
    %v5398 = vpack.c.b16 %v5380, %v5378
    %v5399 = vpack.c.b16 %v5381, %v5379
    %v5400 = vpack.c.b16 %v5384, %v5382
    %v5401 = vpack.c.b16 %v5385, %v5383
    %5418 = vmatprep.subr.bf16.mxu0 %v5387
    %5419 = vmatpush1.bf16.msra.mxu0 %v5386
    %5420 = vmatprep.subr.bf16.mxu0 %v5389
    %5421 = vmatpush1.bf16.msra.mxu0 %v5388
    %5422 = vmatprep.subr.bf16.mxu0 %v5391
    %5423 = vmatpush1.bf16.msra.mxu0 %v5390
    %5424 = vmatprep.subr.bf16.mxu0 %v5393
    %5425 = vmatpush1.bf16.msra.mxu0 %v5392
    %5426 = vmatprep.subr.bf16.mxu0 %v5395
    %5427 = vmatpush1.bf16.msra.mxu0 %v5394
    %5428 = vmatprep.subr.bf16.mxu0 %v5397
    %5429 = vmatpush1.bf16.msra.mxu0 %v5396
    %5430 = vmatprep.subr.bf16.mxu0 %v5399
    %5431 = vmatpush1.bf16.msra.mxu0 %v5398
    %5432 = vmatprep.subr.bf16.mxu0 %v5401
    %5433 = vmatpush1.bf16.msra.mxu0 %v5400
    %5434 = vmatprep.subr.bf16.mxu0 0
    %5435 = vmatpush1.bf16.msra.mxu0 0
    %5436 = vmatprep.subr.bf16.mxu0 0
    %5437 = vmatpush1.bf16.msra.mxu0 0
    %5438 = vmatprep.subr.bf16.mxu0 0
    %5439 = vmatpush1.bf16.msra.mxu0 0
    %5440 = vmatprep.subr.bf16.mxu0 0
    %5441 = vmatpush1.bf16.msra.mxu0 0
    %5442 = vmatprep.subr.bf16.mxu0 0
    %5443 = vmatpush1.bf16.msra.mxu0 0
    %5444 = vmatprep.subr.bf16.mxu0 0
    %5445 = vmatpush1.bf16.msra.mxu0 0
    %5446 = vmatprep.subr.bf16.mxu0 0
    %5447 = vmatpush1.bf16.msra.mxu0 0
    %5448 = vmatprep.subr.bf16.mxu0 0
    %5449 = vmatpush1.bf16.msra.mxu0 0
    %5450 = vmatprep.mubr.bf16.mxu0 0
    %5451 = vmatmul.mubr.bf16.gmra.mrb[0].mxu0 %v5180
    %v5452 = vpop.f32.mrb[0].mxu0
    %v5453 = vadd.f32 %v5332, %v5452
    %v5454 = vpop.f32.mrb[0].mxu0
    %v5455 = vadd.f32 %v5334, %v5454
    %v5456 = vpop.f32.mrb[0].mxu0
    %v5457 = vpop.f32.mrb[0].mxu0
    %5458 = vdwg.mxu0
    %s5459 = scalar_lea.vmem [#allocation9], 256
    %v5460 = vld [vmem:[%s5459] sm:$0xff]
    %v5461 = vld [vmem:[%s5459 + $0x8] sm:$0xff]
    %v5462 = vld [vmem:[%s5459 + $0x10] sm:$0xff]
    %v5463 = vld [vmem:[%s5459 + $0x18] sm:$0xff]
    %v5464 = vld [vmem:[%s5459 + $0x20] sm:$0xff]
    %v5465 = vld [vmem:[%s5459 + $0x28] sm:$0xff]
    %v5466 = vld [vmem:[%s5459 + $0x30] sm:$0xff]
    %v5467 = vld [vmem:[%s5459 + $0x38] sm:$0xff]
    %v5468 = vld [vmem:[%s5459 + $0x40] sm:$0xff]
    %v5469 = vld [vmem:[%s5459 + $0x48] sm:$0xff]
    %v5470 = vld [vmem:[%s5459 + $0x50] sm:$0xff]
    %v5471 = vld [vmem:[%s5459 + $0x58] sm:$0xff]
    %v5472 = vld [vmem:[%s5459 + $0x60] sm:$0xff]
    %v5473 = vld [vmem:[%s5459 + $0x68] sm:$0xff]
    %v5474 = vld [vmem:[%s5459 + $0x70] sm:$0xff]
    %v5475 = vld [vmem:[%s5459 + $0x78] sm:$0xff]
    %v5476 = vrot.slane %v5180, 2
    %v5494 = vunpack.c.l.b16 %v5460
    %v5495 = vunpack.c.h.b16 %v5460
    %v5496 = vunpack.c.l.b16 %v5461
    %v5497 = vunpack.c.h.b16 %v5461
    %v5498 = vunpack.c.l.b16 %v5462
    %v5499 = vunpack.c.h.b16 %v5462
    %v5500 = vunpack.c.l.b16 %v5463
    %v5501 = vunpack.c.h.b16 %v5463
    %v5502 = vunpack.c.l.b16 %v5464
    %v5503 = vunpack.c.h.b16 %v5464
    %v5504 = vunpack.c.l.b16 %v5465
    %v5505 = vunpack.c.h.b16 %v5465
    %v5506 = vunpack.c.l.b16 %v5466
    %v5507 = vunpack.c.h.b16 %v5466
    %v5508 = vunpack.c.l.b16 %v5467
    %v5509 = vunpack.c.h.b16 %v5467
    %v5510 = vunpack.c.l.b16 %v5468
    %v5511 = vunpack.c.h.b16 %v5468
    %v5512 = vunpack.c.l.b16 %v5469
    %v5513 = vunpack.c.h.b16 %v5469
    %v5514 = vunpack.c.l.b16 %v5470
    %v5515 = vunpack.c.h.b16 %v5470
    %v5516 = vunpack.c.l.b16 %v5471
    %v5517 = vunpack.c.h.b16 %v5471
    %v5518 = vunpack.c.l.b16 %v5472
    %v5519 = vunpack.c.h.b16 %v5472
    %v5520 = vunpack.c.l.b16 %v5473
    %v5521 = vunpack.c.h.b16 %v5473
    %v5522 = vunpack.c.l.b16 %v5474
    %v5523 = vunpack.c.h.b16 %v5474
    %v5524 = vunpack.c.l.b16 %v5475
    %v5525 = vunpack.c.h.b16 %v5475
    %v5526 = vpack.c.b16 %v5496, %v5494
    %v5527 = vpack.c.b16 %v5497, %v5495
    %v5528 = vpack.c.b16 %v5500, %v5498
    %v5529 = vpack.c.b16 %v5501, %v5499
    %v5530 = vpack.c.b16 %v5504, %v5502
    %v5531 = vpack.c.b16 %v5505, %v5503
    %v5532 = vpack.c.b16 %v5508, %v5506
    %v5533 = vpack.c.b16 %v5509, %v5507
    %v5534 = vpack.c.b16 %v5512, %v5510
    %v5535 = vpack.c.b16 %v5513, %v5511
    %v5536 = vpack.c.b16 %v5516, %v5514
    %v5537 = vpack.c.b16 %v5517, %v5515
    %v5538 = vpack.c.b16 %v5520, %v5518
    %v5539 = vpack.c.b16 %v5521, %v5519
    %v5540 = vpack.c.b16 %v5524, %v5522
    %v5541 = vpack.c.b16 %v5525, %v5523
    %5558 = vmatprep.subr.bf16.mxu0 %v5527
    %5559 = vmatpush1.bf16.msra.mxu0 %v5526
    %5560 = vmatprep.subr.bf16.mxu0 %v5529
    %5561 = vmatpush1.bf16.msra.mxu0 %v5528
    %5562 = vmatprep.subr.bf16.mxu0 %v5531
    %5563 = vmatpush1.bf16.msra.mxu0 %v5530
    %5564 = vmatprep.subr.bf16.mxu0 %v5533
    %5565 = vmatpush1.bf16.msra.mxu0 %v5532
    %5566 = vmatprep.subr.bf16.mxu0 %v5535
    %5567 = vmatpush1.bf16.msra.mxu0 %v5534
    %5568 = vmatprep.subr.bf16.mxu0 %v5537
    %5569 = vmatpush1.bf16.msra.mxu0 %v5536
    %5570 = vmatprep.subr.bf16.mxu0 %v5539
    %5571 = vmatpush1.bf16.msra.mxu0 %v5538
    %5572 = vmatprep.subr.bf16.mxu0 %v5541
    %5573 = vmatpush1.bf16.msra.mxu0 %v5540
    %5574 = vmatprep.subr.bf16.mxu0 0
    %5575 = vmatpush1.bf16.msra.mxu0 0
    %5576 = vmatprep.subr.bf16.mxu0 0
    %5577 = vmatpush1.bf16.msra.mxu0 0
    %5578 = vmatprep.subr.bf16.mxu0 0
    %5579 = vmatpush1.bf16.msra.mxu0 0
    %5580 = vmatprep.subr.bf16.mxu0 0
    %5581 = vmatpush1.bf16.msra.mxu0 0
    %5582 = vmatprep.subr.bf16.mxu0 0
    %5583 = vmatpush1.bf16.msra.mxu0 0
    %5584 = vmatprep.subr.bf16.mxu0 0
    %5585 = vmatpush1.bf16.msra.mxu0 0
    %5586 = vmatprep.subr.bf16.mxu0 0
    %5587 = vmatpush1.bf16.msra.mxu0 0
    %5588 = vmatprep.subr.bf16.mxu0 0
    %5589 = vmatpush1.bf16.msra.mxu0 0
    %5590 = vmatprep.mubr.bf16.mxu0 0
    %5591 = vmatmul.mubr.bf16.gmra.mrb[0].mxu0 %v5476
    %v5592 = vpop.f32.mrb[0].mxu0
    %v5593 = vadd.f32 0.0, %v5592
    %v5594 = vpop.f32.mrb[0].mxu0
    %v5595 = vadd.f32 0.0, %v5594
    %v5596 = vpop.f32.mrb[0].mxu0
    %v5597 = vpop.f32.mrb[0].mxu0
    %5598 = vdwg.mxu0
    %v5599 = vadd.f32 %v5453, %v5593
    %v5600 = vadd.f32 %v5455, %v5595
    %s5601 = scalar_lea.vmem [#allocation9], 384
    %v5602 = vld [vmem:[%s5601] sm:$0xff]
    %v5603 = vld [vmem:[%s5601 + $0x8] sm:$0xff]
    %v5604 = vld [vmem:[%s5601 + $0x10] sm:$0xff]
    %v5605 = vld [vmem:[%s5601 + $0x18] sm:$0xff]
    %v5606 = vld [vmem:[%s5601 + $0x20] sm:$0xff]
    %v5607 = vld [vmem:[%s5601 + $0x28] sm:$0xff]
    %v5608 = vld [vmem:[%s5601 + $0x30] sm:$0xff]
    %v5609 = vld [vmem:[%s5601 + $0x38] sm:$0xff]
    %v5610 = vld [vmem:[%s5601 + $0x40] sm:$0xff]
    %v5611 = vld [vmem:[%s5601 + $0x48] sm:$0xff]
    %v5612 = vld [vmem:[%s5601 + $0x50] sm:$0xff]
    %v5613 = vld [vmem:[%s5601 + $0x58] sm:$0xff]
    %v5614 = vld [vmem:[%s5601 + $0x60] sm:$0xff]
    %v5615 = vld [vmem:[%s5601 + $0x68] sm:$0xff]
    %v5616 = vld [vmem:[%s5601 + $0x70] sm:$0xff]
    %v5617 = vld [vmem:[%s5601 + $0x78] sm:$0xff]
    %v5618 = vrot.slane %v5180, 3
    %v5636 = vunpack.c.l.b16 %v5602
    %v5637 = vunpack.c.h.b16 %v5602
    %v5638 = vunpack.c.l.b16 %v5603
    %v5639 = vunpack.c.h.b16 %v5603
    %v5640 = vunpack.c.l.b16 %v5604
    %v5641 = vunpack.c.h.b16 %v5604
    %v5642 = vunpack.c.l.b16 %v5605
    %v5643 = vunpack.c.h.b16 %v5605
    %v5644 = vunpack.c.l.b16 %v5606
    %v5645 = vunpack.c.h.b16 %v5606
    %v5646 = vunpack.c.l.b16 %v5607
    %v5647 = vunpack.c.h.b16 %v5607
    %v5648 = vunpack.c.l.b16 %v5608
    %v5649 = vunpack.c.h.b16 %v5608
    %v5650 = vunpack.c.l.b16 %v5609
    %v5651 = vunpack.c.h.b16 %v5609
    %v5652 = vunpack.c.l.b16 %v5610
    %v5653 = vunpack.c.h.b16 %v5610
    %v5654 = vunpack.c.l.b16 %v5611
    %v5655 = vunpack.c.h.b16 %v5611
    %v5656 = vunpack.c.l.b16 %v5612
    %v5657 = vunpack.c.h.b16 %v5612
    %v5658 = vunpack.c.l.b16 %v5613
    %v5659 = vunpack.c.h.b16 %v5613
    %v5660 = vunpack.c.l.b16 %v5614
    %v5661 = vunpack.c.h.b16 %v5614
    %v5662 = vunpack.c.l.b16 %v5615
    %v5663 = vunpack.c.h.b16 %v5615
    %v5664 = vunpack.c.l.b16 %v5616
    %v5665 = vunpack.c.h.b16 %v5616
    %v5666 = vunpack.c.l.b16 %v5617
    %v5667 = vunpack.c.h.b16 %v5617
    %v5668 = vpack.c.b16 %v5638, %v5636
    %v5669 = vpack.c.b16 %v5639, %v5637
    %v5670 = vpack.c.b16 %v5642, %v5640
    %v5671 = vpack.c.b16 %v5643, %v5641
    %v5672 = vpack.c.b16 %v5646, %v5644
    %v5673 = vpack.c.b16 %v5647, %v5645
    %v5674 = vpack.c.b16 %v5650, %v5648
    %v5675 = vpack.c.b16 %v5651, %v5649
    %v5676 = vpack.c.b16 %v5654, %v5652
    %v5677 = vpack.c.b16 %v5655, %v5653
    %v5678 = vpack.c.b16 %v5658, %v5656
    %v5679 = vpack.c.b16 %v5659, %v5657
    %v5680 = vpack.c.b16 %v5662, %v5660
    %v5681 = vpack.c.b16 %v5663, %v5661
    %v5682 = vpack.c.b16 %v5666, %v5664
    %v5683 = vpack.c.b16 %v5667, %v5665
    %5700 = vmatprep.subr.bf16.mxu0 %v5669
    %5701 = vmatpush1.bf16.msra.mxu0 %v5668
    %5702 = vmatprep.subr.bf16.mxu0 %v5671
    %5703 = vmatpush1.bf16.msra.mxu0 %v5670
    %5704 = vmatprep.subr.bf16.mxu0 %v5673
    %5705 = vmatpush1.bf16.msra.mxu0 %v5672
    %5706 = vmatprep.subr.bf16.mxu0 %v5675
    %5707 = vmatpush1.bf16.msra.mxu0 %v5674
    %5708 = vmatprep.subr.bf16.mxu0 %v5677
    %5709 = vmatpush1.bf16.msra.mxu0 %v5676
    %5710 = vmatprep.subr.bf16.mxu0 %v5679
    %5711 = vmatpush1.bf16.msra.mxu0 %v5678
    %5712 = vmatprep.subr.bf16.mxu0 %v5681
    %5713 = vmatpush1.bf16.msra.mxu0 %v5680
    %5714 = vmatprep.subr.bf16.mxu0 %v5683
    %5715 = vmatpush1.bf16.msra.mxu0 %v5682
    %5716 = vmatprep.subr.bf16.mxu0 0
    %5717 = vmatpush1.bf16.msra.mxu0 0
    %5718 = vmatprep.subr.bf16.mxu0 0
    %5719 = vmatpush1.bf16.msra.mxu0 0
    %5720 = vmatprep.subr.bf16.mxu0 0
    %5721 = vmatpush1.bf16.msra.mxu0 0
    %5722 = vmatprep.subr.bf16.mxu0 0
    %5723 = vmatpush1.bf16.msra.mxu0 0
    %5724 = vmatprep.subr.bf16.mxu0 0
    %5725 = vmatpush1.bf16.msra.mxu0 0
    %5726 = vmatprep.subr.bf16.mxu0 0
    %5727 = vmatpush1.bf16.msra.mxu0 0
    %5728 = vmatprep.subr.bf16.mxu0 0
    %5729 = vmatpush1.bf16.msra.mxu0 0
    %5730 = vmatprep.subr.bf16.mxu0 0
    %5731 = vmatpush1.bf16.msra.mxu0 0
    %5732 = vmatprep.mubr.bf16.mxu0 0
    %5733 = vmatmul.mubr.bf16.gmra.mrb[0].mxu0 %v5618
    %v5734 = vpop.f32.mrb[0].mxu0
    %v5735 = vadd.f32 0.0, %v5734
    %v5736 = vpop.f32.mrb[0].mxu0
    %v5737 = vadd.f32 0.0, %v5736
    %v5738 = vpop.f32.mrb[0].mxu0
    %v5739 = vpop.f32.mrb[0].mxu0
    %5740 = vdwg.mxu0
    %v5741 = vadd.f32 %v5599, %v5735
    %v5742 = vadd.f32 %v5600, %v5737
    %v5743 = vld [vmem:[#allocation15] sm:$0x3]
    %v5745 = vlaneseq
    %v5746 = vshrl.u32 %v5745, 7
    %v5747 = vsub.s32 0, %v5746
    %v5748 = vrot.slane %v5743, %v5747
    %v5749 = vlaneseq
    %v5750 = vshrl.u32 %v5749, 7
    %v5751 = vsub.s32 1, %v5750
    %v5752 = vrot.slane %v5743, %v5751
    %v5755 = vadd.f32 %v5741, %v5748
    %v5756 = vadd.f32 %v5742, %v5752
    %v5757 = vmax.f32 %v5755, 0.0
    %v5758 = vmax.f32 %v5756, 0.0
    %v5759 = vpack.c.bf16 %v5757, %v5757
    %v5760 = vpack.c.bf16 %v5758, %v5758
    %v5761 = vld [vmem:[%s5] sm:$0xf]
    %v5762 = vld [vmem:[%s5 + $0x4] sm:$0xf]
    %v5763 = vld [vmem:[%s5 + $0x8] sm:$0xf]
    %v5764 = vld [vmem:[%s5 + $0xc] sm:$0xf]
    %v5765 = vld [vmem:[%s5 + $0x10] sm:$0xf]
    %v5766 = vld [vmem:[%s5 + $0x14] sm:$0xf]
    %v5767 = vld [vmem:[%s5 + $0x18] sm:$0xf]
    %v5768 = vld [vmem:[%s5 + $0x1c] sm:$0xf]
    %v5769 = vld [vmem:[%s5 + $0x20] sm:$0xf]
    %v5770 = vld [vmem:[%s5 + $0x24] sm:$0xf]
    %v5771 = vld [vmem:[%s5 + $0x28] sm:$0xf]
    %v5772 = vld [vmem:[%s5 + $0x2c] sm:$0xf]
    %v5773 = vld [vmem:[%s5 + $0x30] sm:$0xf]
    %v5774 = vld [vmem:[%s5 + $0x34] sm:$0xf]
    %v5775 = vld [vmem:[%s5 + $0x38] sm:$0xf]
    %v5776 = vld [vmem:[%s5 + $0x3c] sm:$0xf]
    %v5777 = vld [vmem:[%s5 + $0x40] sm:$0xf]
    %v5778 = vld [vmem:[%s5 + $0x44] sm:$0xf]
    %v5779 = vld [vmem:[%s5 + $0x48] sm:$0xf]
    %v5780 = vld [vmem:[%s5 + $0x4c] sm:$0xf]
    %v5781 = vld [vmem:[%s5 + $0x50] sm:$0xf]
    %v5782 = vld [vmem:[%s5 + $0x54] sm:$0xf]
    %v5783 = vld [vmem:[%s5 + $0x58] sm:$0xf]
    %v5784 = vld [vmem:[%s5 + $0x5c] sm:$0xf]
    %v5785 = vld [vmem:[%s5 + $0x60] sm:$0xf]
    %v5786 = vld [vmem:[%s5 + $0x64] sm:$0xf]
    %v5787 = vld [vmem:[%s5 + $0x68] sm:$0xf]
    %v5788 = vld [vmem:[%s5 + $0x6c] sm:$0xf]
    %v5789 = vld [vmem:[%s5 + $0x70] sm:$0xf]
    %v5790 = vld [vmem:[%s5 + $0x74] sm:$0xf]
    %v5791 = vld [vmem:[%s5 + $0x78] sm:$0xf]
    %v5792 = vld [vmem:[%s5 + $0x7c] sm:$0xf]
    %v5793 = vld [vmem:[#allocation16] sm:$0x1]
    %v5795 = vlaneseq
    %v5796 = vshrl.u32 %v5795, 7
    %v5797 = vsub.s32 0, %v5796
    %v5798 = vrot.slane %v5793, %v5797
    %v5832 = vunpack.c.l.b16 %v5761
    %v5833 = vunpack.c.l.b16 %v5762
    %v5834 = vunpack.c.l.b16 %v5763
    %v5835 = vunpack.c.l.b16 %v5764
    %v5836 = vunpack.c.l.b16 %v5765
    %v5837 = vunpack.c.l.b16 %v5766
    %v5838 = vunpack.c.l.b16 %v5767
    %v5839 = vunpack.c.l.b16 %v5768
    %v5840 = vunpack.c.l.b16 %v5769
    %v5841 = vunpack.c.l.b16 %v5770
    %v5842 = vunpack.c.l.b16 %v5771
    %v5843 = vunpack.c.l.b16 %v5772
    %v5844 = vunpack.c.l.b16 %v5773
    %v5845 = vunpack.c.l.b16 %v5774
    %v5846 = vunpack.c.l.b16 %v5775
    %v5847 = vunpack.c.l.b16 %v5776
    %v5848 = vunpack.c.l.b16 %v5777
    %v5849 = vunpack.c.l.b16 %v5778
    %v5850 = vunpack.c.l.b16 %v5779
    %v5851 = vunpack.c.l.b16 %v5780
    %v5852 = vunpack.c.l.b16 %v5781
    %v5853 = vunpack.c.l.b16 %v5782
    %v5854 = vunpack.c.l.b16 %v5783
    %v5855 = vunpack.c.l.b16 %v5784
    %v5856 = vunpack.c.l.b16 %v5785
    %v5857 = vunpack.c.l.b16 %v5786
    %v5858 = vunpack.c.l.b16 %v5787
    %v5859 = vunpack.c.l.b16 %v5788
    %v5860 = vunpack.c.l.b16 %v5789
    %v5861 = vunpack.c.l.b16 %v5790
    %v5862 = vunpack.c.l.b16 %v5791
    %v5863 = vunpack.c.l.b16 %v5792
    %v5864 = vpack.c.b16 %v5833, %v5832
    %v5865 = vpack.c.b16 %v5835, %v5834
    %v5866 = vpack.c.b16 %v5837, %v5836
    %v5867 = vpack.c.b16 %v5839, %v5838
    %v5868 = vpack.c.b16 %v5841, %v5840
    %v5869 = vpack.c.b16 %v5843, %v5842
    %v5870 = vpack.c.b16 %v5845, %v5844
    %v5871 = vpack.c.b16 %v5847, %v5846
    %v5872 = vpack.c.b16 %v5849, %v5848
    %v5873 = vpack.c.b16 %v5851, %v5850
    %v5874 = vpack.c.b16 %v5853, %v5852
    %v5875 = vpack.c.b16 %v5855, %v5854
    %v5876 = vpack.c.b16 %v5857, %v5856
    %v5877 = vpack.c.b16 %v5859, %v5858
    %v5878 = vpack.c.b16 %v5861, %v5860
    %v5879 = vpack.c.b16 %v5863, %v5862
    %5896 = vmatprep.subr.bf16.mxu0 0
    %5897 = vmatpush1.bf16.msra.mxu0 %v5864
    %5898 = vmatprep.subr.bf16.mxu0 0
    %5899 = vmatpush1.bf16.msra.mxu0 %v5865
    %5900 = vmatprep.subr.bf16.mxu0 0
    %5901 = vmatpush1.bf16.msra.mxu0 %v5866
    %5902 = vmatprep.subr.bf16.mxu0 0
    %5903 = vmatpush1.bf16.msra.mxu0 %v5867
    %5904 = vmatprep.subr.bf16.mxu0 0
    %5905 = vmatpush1.bf16.msra.mxu0 %v5868
    %5906 = vmatprep.subr.bf16.mxu0 0
    %5907 = vmatpush1.bf16.msra.mxu0 %v5869
    %5908 = vmatprep.subr.bf16.mxu0 0
    %5909 = vmatpush1.bf16.msra.mxu0 %v5870
    %5910 = vmatprep.subr.bf16.mxu0 0
    %5911 = vmatpush1.bf16.msra.mxu0 %v5871
    %5912 = vmatprep.subr.bf16.mxu0 0
    %5913 = vmatpush1.bf16.msra.mxu0 %v5872
    %5914 = vmatprep.subr.bf16.mxu0 0
    %5915 = vmatpush1.bf16.msra.mxu0 %v5873
    %5916 = vmatprep.subr.bf16.mxu0 0
    %5917 = vmatpush1.bf16.msra.mxu0 %v5874
    %5918 = vmatprep.subr.bf16.mxu0 0
    %5919 = vmatpush1.bf16.msra.mxu0 %v5875
    %5920 = vmatprep.subr.bf16.mxu0 0
    %5921 = vmatpush1.bf16.msra.mxu0 %v5876
    %5922 = vmatprep.subr.bf16.mxu0 0
    %5923 = vmatpush1.bf16.msra.mxu0 %v5877
    %5924 = vmatprep.subr.bf16.mxu0 0
    %5925 = vmatpush1.bf16.msra.mxu0 %v5878
    %5926 = vmatprep.subr.bf16.mxu0 0
    %5927 = vmatpush1.bf16.msra.mxu0 %v5879
    %5928 = vmatprep.mubr.bf16.mxu0 %v5760
    %5929 = vmatmul.mubr.bf16.gmra.mrb[0].mxu0 %v5759
    %v5930 = vpop.f32.mrb[0].mxu0
    %v5931 = vadd.f32 %v5798, %v5930
    %v5932 = vpop.f32.mrb[0].mxu0
    %v5933 = vpop.f32.mrb[0].mxu0
    %v5934 = vpop.f32.mrb[0].mxu0
    %5935 = vdwg.mxu0
    %vm5936 = vcmask 123904
    %5937 = vst.msk [vmem:[%s14] sm:$0x3] %vm5936, %v5931
    // Predicated region
    $region98: #{encoder_a_forward.1} parent=1 // pred_check
      _
    $region99: #{encoder_a_forward.1} parent=1 // pred_check_branch
      %5939 = sbr.rel (0) target = $region101
    $region100: #{encoder_a_forward.1} parent=1 // pred_region
      _
    $region101: #{encoder_a_forward.1} parent=1 // pred_fallthru
      _
    // Predicated region
    $region102: #{encoder_a_forward.1} parent=1 // pred_check
      _
    $region103: #{encoder_a_forward.1} parent=1 // pred_check_branch
      %5941 = sbr.rel (0) target = $region105
    $region104: #{encoder_a_forward.1} parent=1 // pred_region
      _
    $region105: #{encoder_a_forward.1} parent=1 // pred_fallthru
      _
    %5942 = vsyncpa [#allocation3], 1
    %5943 = vsyncpa [#allocation5], 1
    %5944 = vsyncpa [#allocation8], 1
    %5945 = vsyncpa [#allocation11], 1
    %5946 = vsyncpa [#allocation14], 1
    %5947 = vsyncpa [#allocation17], 1

</llo_original>
